<compile_context>
chip_gen: v7x
topology: tpu7x:2x2x1
jax: 0.10.0
libtpu: 0.0.40
codegen_flags: <defaults>
</compile_context>

<pallas_src>
import jax
import jax.numpy as jnp
from jax.experimental import pallas as pl
from jax.experimental.pallas import tpu as pltpu

_LANE = 128


def _round_up(v, m=_LANE):
    if v <= 0:
        return 0
    return ((v + m - 1) // m) * m


def _pick_batch_block(n, h, w, c1p, cmp_):
    """Fold enough images into one grid step to fill the MXU M dimension."""
    wp2 = _round_up(w + 2, 8)
    per_img = (h + 2) * wp2 * (c1p + cmp_) * 4          # f32 halo scratches
    budget = 16 * 1024 * 1024
    target = max(1, -(-256 // (h * w)))                  # rows for M >= 256
    nb = min(n, target)
    while nb > 1 and (n % nb != 0 or per_img * nb > budget):
        nb -= 1
    return max(nb, 1)


# --------------------------------------------------------------------------
# Fused DecoderBlock kernel (concat + pad + conv1 + conv2 + convT, one call)
# --------------------------------------------------------------------------
def fused_decoder_block(x, skip, block, out_dtype=jnp.bfloat16):
    prep = block["prep"]
    up = block["upsample"]
    in_ch, skip_ch = block["in_ch"], block["skip_ch"]
    C1p, Cmp, C2p, Cop = prep["C1p"], prep["Cmp"], prep["C2p"], prep["Cop"]

    N, H, W, Cx_arr = x.shape
    assert in_ch <= Cx_arr
    has_skip = skip is not None
    assert has_skip == (skip_ch > 0)
    if has_skip:
        assert skip.shape == (N, H, W, skip_ch)

    Nb = _pick_batch_block(N, H, W, C1p, Cmp)
    M = Nb * H * W
    Wp2 = _round_up(W + 2, 8)                            # sublane-padded width
    bf16 = jnp.bfloat16

    def kernel(*refs):
        i = 0
        x_ref = refs[i]; i += 1
        skip_ref = None
        if has_skip:
            skip_ref = refs[i]; i += 1
        w1_ref, sc1_ref, sh1_ref, w2_ref, sc2_ref, sh2_ref = refs[i:i + 6]
        i += 6
        if up:
            wup_ref, bup_ref = refs[i:i + 2]; i += 2
        o_ref = refs[i]; i += 1
        xp1_ref, xp2_ref = refs[i:i + 2]

        def fill_halo(ref, interior):
            # Zero only the 1-pixel border and the sublane-pad columns; the
            # interior (all lanes) is fully overwritten below, so no
            # full-scratch clear is needed (exact, and safe per-core).
            c = ref.shape[-1]
            ref[:, 0:1, :, :] = jnp.zeros((Nb, 1, Wp2, c), jnp.float32)
            ref[:, H + 1:H + 2, :, :] = jnp.zeros((Nb, 1, Wp2, c), jnp.float32)
            ref[:, 1:H + 1, 0:1, :] = jnp.zeros((Nb, H, 1, c), jnp.float32)
            ref[:, 1:H + 1, W + 1:Wp2, :] = jnp.zeros(
                (Nb, H, Wp2 - W - 1, c), jnp.float32)
            ref[:, 1:H + 1, 1:W + 1, :] = interior

        def conv3x3(ref, w_ref):
            # 9-tap accumulation: bf16 MXU operands, f32 accumulation, no
            # materialized (M, 9*C) im2col buffer.
            c = ref.shape[-1]
            xpb = ref[...].astype(bf16)
            acc = None
            for ky in range(3):
                for kx in range(3):
                    win = xpb[:, ky:ky + H, kx:kx + W, :].reshape(M, c)
                    p = jnp.dot(win, w_ref[ky * 3 + kx],
                                preferred_element_type=jnp.float32)
                    acc = p if acc is None else acc + p
            return acc

        # ---- conv1: tight-packed channel-concat + zero halo in VMEM scratch ----
        pieces = [x_ref[...][:, :, :, :in_ch].astype(jnp.float32)]
        if has_skip:
            pieces.append(skip_ref[...].astype(jnp.float32))
        pad = C1p - (in_ch + skip_ch)
        if pad > 0:
            pieces.append(jnp.zeros((Nb, H, W, pad), jnp.float32))
        xin = pieces[0] if len(pieces) == 1 else jnp.concatenate(pieces, axis=-1)
        fill_halo(xp1_ref, xin)
        h1 = jnp.maximum(conv3x3(xp1_ref, w1_ref) * sc1_ref[...] + sh1_ref[...],
                         0.0)                                    # (M, Cmp) f32

        # ---- conv2 (h1 never leaves VMEM) ----
        fill_halo(xp2_ref, h1.reshape(Nb, H, W, Cmp))
        h2 = jnp.maximum(conv3x3(xp2_ref, w2_ref) * sc2_ref[...] + sh2_ref[...],
                         0.0)                                    # (M, C2p) f32

        if up:
            # ConvTranspose2d(k=2, s=2): ONE matmul with N = 4*Cop, tap order
            # t = di*2 + dj; interleave-free store (Nb, H, di, W, dj*Cop + c).
            y = jnp.dot(h2.astype(bf16), wup_ref[...],
                        preferred_element_type=jnp.float32) + bup_ref[...]
            o_ref[:, :, 0:1, :, :] = (
                y[:, :2 * Cop].reshape(Nb, H, 1, W, 2 * Cop).astype(o_ref.dtype))
            o_ref[:, :, 1:2, :, :] = (
                y[:, 2 * Cop:].reshape(Nb, H, 1, W, 2 * Cop).astype(o_ref.dtype))
        else:
            o_ref[...] = h2.reshape(Nb, H, W, C2p).astype(o_ref.dtype)

    # ---- specs ----
    in_specs = [pl.BlockSpec((Nb, H, W, Cx_arr), lambda n: (n, 0, 0, 0))]
    inputs = [x]
    if has_skip:
        in_specs.append(pl.BlockSpec((Nb, H, W, skip_ch), lambda n: (n, 0, 0, 0)))
        inputs.append(skip)
    in_specs += [
        pl.BlockSpec((9, C1p, Cmp), lambda n: (0, 0, 0)),
        pl.BlockSpec((1, Cmp), lambda n: (0, 0)),
        pl.BlockSpec((1, Cmp), lambda n: (0, 0)),
        pl.BlockSpec((9, Cmp, C2p), lambda n: (0, 0, 0)),
        pl.BlockSpec((1, C2p), lambda n: (0, 0)),
        pl.BlockSpec((1, C2p), lambda n: (0, 0)),
    ]
    inputs += [prep["w1"], prep["scale1"], prep["shift1"],
               prep["w2"], prep["scale2"], prep["shift2"]]
    if up:
        in_specs += [pl.BlockSpec((C2p, 4 * Cop), lambda n: (0, 0)),
                     pl.BlockSpec((1, 4 * Cop), lambda n: (0, 0))]
        inputs += [prep["wup"], prep["bup"]]
        out_shape = jax.ShapeDtypeStruct((N, H, 2, W, 2 * Cop), out_dtype)
        out_spec = pl.BlockSpec((Nb, H, 2, W, 2 * Cop),
                                lambda n: (n, 0, 0, 0, 0))
    else:
        out_shape = jax.ShapeDtypeStruct((N, H, W, C2p), out_dtype)
        out_spec = pl.BlockSpec((Nb, H, W, C2p), lambda n: (n, 0, 0, 0))

    out = pl.pallas_call(
        kernel,
        out_shape=out_shape,
        grid=(N // Nb,),
        in_specs=in_specs,
        out_specs=out_spec,
        scratch_shapes=[pltpu.VMEM((Nb, H + 2, Wp2, C1p), jnp.float32),
                        pltpu.VMEM((Nb, H + 2, Wp2, Cmp), jnp.float32)],
        compiler_params=pltpu.CompilerParams(
            dimension_semantics=("parallel",),
            vmem_limit_bytes=40 * 1024 * 1024),
    )(*inputs)

    if up:
        # pure view: (N, H, 2, W, 2*Cop) -> (N, 2H, 2W, Cop)
        out = out.reshape(N, 2 * H, 2 * W, Cop)
    return out


def unet_decoder_forward(features, blocks):
    """Mirrors UnetDecoder.forward: deepest feature first, skips thereafter."""
    feats = features[::-1]
    x = feats[0]
    skips = (None,) + tuple(feats[1:])
    for i, b in enumerate(blocks):
        skip = skips[i] if i < len(skips) else None
        last = (i == len(blocks) - 1)
        x = fused_decoder_block(
            x, skip, b, out_dtype=jnp.float32 if last else jnp.bfloat16)
    # strip the lane padding once, at the very end
    return x[..., :blocks[-1]["out_ch"]]


# --------------------------------------------------------------------------
# Deterministic parameter construction (synthetic; no checkpoint load)
# BN is applied in eval mode (running stats folded into scale/shift).
# --------------------------------------------------------------------------
def make_block_raw(key, in_ch, skip_ch, out_ch, upsample, eps=1e-5):
    ks = jax.random.split(key, 12)
    c1_in = in_ch + skip_ch
    c2_out = in_ch if upsample else out_ch

    def bn_fold(kg, kb, km, kv, c):
        gamma = 1.0 + 0.1 * jax.random.normal(kg, (c,), jnp.float32)
        beta = 0.1 * jax.random.normal(kb, (c,), jnp.float32)
        mean = 0.1 * jax.random.normal(km, (c,), jnp.float32)
        var = 0.5 + jax.random.uniform(kv, (c,), jnp.float32)
        scale = gamma / jnp.sqrt(var + eps)
        shift = beta - mean * scale
        return scale, shift

    raw = {"w1": 0.1 * jax.random.normal(ks[0], (9, c1_in, in_ch), jnp.float32)}
    raw["scale1"], raw["shift1"] = bn_fold(ks[1], ks[2], ks[3], ks[4], in_ch)
    raw["w2"] = 0.1 * jax.random.normal(ks[5], (9, in_ch, c2_out), jnp.float32)
    raw["scale2"], raw["shift2"] = bn_fold(ks[6], ks[7], ks[8], ks[9], c2_out)
    if upsample:
        # PyTorch ConvTranspose2d weight layout (Cin, Cout, kH, kW)
        raw["wup_pt"] = 0.1 * jax.random.normal(
            ks[10], (in_ch, out_ch, 2, 2), jnp.float32)
        raw["bup"] = 0.1 * jax.random.normal(ks[11], (out_ch,), jnp.float32)
    return raw


def prep_block_params(raw, in_ch, skip_ch, out_ch, upsample):
    """Tight-pack channels, zero-pad to lane width, pre-cast matmul weights to bf16."""
    f32, bf16 = jnp.float32, jnp.bfloat16
    c1 = in_ch + skip_ch
    c2_out = in_ch if upsample else out_ch
    C1p = _round_up(c1)                 # tight packing of the concat channels
    Cmp = _round_up(in_ch)
    C2p = _round_up(c2_out)
    Cop = _round_up(out_ch)

    # w1 rows: [x channels | skip channels | zero pad]  (matches torch.cat order)
    w1p = jnp.zeros((9, C1p, Cmp), f32).at[:, :c1, :in_ch].set(raw["w1"])
    sc1 = jnp.zeros((1, Cmp), f32).at[0, :in_ch].set(raw["scale1"])
    sh1 = jnp.zeros((1, Cmp), f32).at[0, :in_ch].set(raw["shift1"])

    w2p = jnp.zeros((9, Cmp, C2p), f32).at[:, :in_ch, :c2_out].set(raw["w2"])
    sc2 = jnp.zeros((1, C2p), f32).at[0, :c2_out].set(raw["scale2"])
    sh2 = jnp.zeros((1, C2p), f32).at[0, :c2_out].set(raw["shift2"])

    prep = {
        "w1": w1p.astype(bf16), "scale1": sc1, "shift1": sh1,
        "w2": w2p.astype(bf16), "scale2": sc2, "shift2": sh2,
        "C1p": C1p, "Cmp": Cmp, "C2p": C2p, "Cop": Cop,
    }
    if upsample:
        wup = jnp.zeros((C2p, 4 * Cop), f32)
        bup = jnp.zeros((1, 4 * Cop), f32)
        for di in range(2):
            for dj in range(2):
                t = di * 2 + dj
                wup = wup.at[:in_ch, t * Cop:t * Cop + out_ch].set(
                    raw["wup_pt"][:, :, di, dj])
                bup = bup.at[0, t * Cop:t * Cop + out_ch].set(raw["bup"])
        prep["wup"] = wup.astype(bf16)
        prep["bup"] = bup
    return prep


def make_unet_decoder_params(key, encoder_channels, decoder_channels, upsample=True):
    enc = list(encoder_channels[1:])[::-1]
    head = enc[0]
    in_chs = [head] + list(decoder_channels[:-1])
    skip_chs = [0] + enc[1:]
    skip_chs += [0] * max(0, len(in_chs) - len(skip_chs))
    out_chs = list(decoder_channels)
    if isinstance(upsample, bool):
        upsample = [upsample] * len(in_chs)
    blocks = []
    keys = jax.random.split(key, len(in_chs))
    for k, ic, sc, oc, up in zip(keys, in_chs, skip_chs, out_chs, upsample):
        raw = make_block_raw(k, ic, sc, oc, up)
        blocks.append({"raw": raw, "prep": prep_block_params(raw, ic, sc, oc, up),
                       "in_ch": ic, "skip_ch": sc, "out_ch": oc, "upsample": up})
    return blocks


# --------------------------------------------------------------------------
# Pure-JAX reference (independent code path: lax.conv / einsum), using the
# same bf16-operand / f32-accumulation precision as the kernel so the check
# isolates structural correctness (concat, halo, tap order, BN fold, convT).
# --------------------------------------------------------------------------
def _conv3_ref(x, w9, scale, shift):
    cin, cout = w9.shape[1], w9.shape[2]
    y = jax.lax.conv_general_dilated(
        x.astype(jnp.bfloat16),
        w9.reshape(3, 3, cin, cout).astype(jnp.bfloat16),
        window_strides=(1, 1), padding="SAME",
        dimension_numbers=("NHWC", "HWIO", "NHWC"),
        preferred_element_type=jnp.float32)
    y = y * scale.reshape(1, 1, 1, cout) + shift.reshape(1, 1, 1, cout)
    return jnp.maximum(y, 0.0)


def _convT_ref(h, wup_pt, bias):
    n, hh, ww, _ = h.shape
    cout = wup_pt.shape[1]
    hb = h.astype(jnp.bfloat16)
    out = jnp.zeros((n, 2 * hh, 2 * ww, cout), jnp.float32)
    for di in range(2):
        for dj in range(2):
            y = jnp.einsum("nhwc,cd->nhwd", hb,
                           wup_pt[:, :, di, dj].astype(jnp.bfloat16),
                           preferred_element_type=jnp.float32) + bias
            out = out.at[:, di::2, dj::2, :].set(y)
    return out


def reference_block(x, skip, block):
    raw = block["raw"]
    if skip is not None:
        xc = jnp.concatenate([x.astype(jnp.float32), skip], axis=-1)
    else:
        xc = x
    h1 = _conv3_ref(xc, raw["w1"], raw["scale1"], raw["shift1"])
    h2 = _conv3_ref(h1, raw["w2"], raw["scale2"], raw["shift2"])
    if block["upsample"]:
        return _convT_ref(h2, raw["wup_pt"], raw["bup"])
    return h2


def reference_unet_decoder(features, blocks):
    feats = features[::-1]
    x = feats[0]
    skips = (None,) + tuple(feats[1:])
    for i, b in enumerate(blocks):
        skip = skips[i] if i < len(skips) else None
        x = reference_block(x, skip, b)
        if i != len(blocks) - 1:
            x = x.astype(jnp.bfloat16)   # kernel stores intermediate outputs in bf16
    return x


# --------------------------------------------------------------------------
if __name__ == "__main__":
    N = 2
    encoder_channels = (3, 16, 32, 64)   # stem + 3 encoder stages
    decoder_channels = (32, 16, 8)       # 3 decoder blocks

    key = jax.random.PRNGKey(0)
    kf, kp = jax.random.split(key)
    fkeys = jax.random.split(kf, 4)
    feat_shapes = [(N, 32, 32, 3), (N, 16, 16, 16), (N, 8, 8, 32), (N, 4, 4, 64)]
    features = tuple(jax.random.normal(k, s, jnp.float32)
                     for k, s in zip(fkeys, feat_shapes))        # NHWC

    blocks = make_unet_decoder_params(kp, encoder_channels, decoder_channels,
                                      upsample=True)

    out = jax.block_until_ready(unet_decoder_forward(features, blocks))
    ref = jax.block_until_ready(reference_unet_decoder(features, blocks))

    assert out.shape == (N, 32, 32, decoder_channels[-1]), out.shape
    assert out.dtype == jnp.float32, out.dtype
    assert ref.shape == out.shape, (ref.shape, out.shape)
    max_err = float(jnp.max(jnp.abs(out - ref.astype(jnp.float32))))
    # Both paths use bf16 operands with f32 accumulation; residual differences
    # come only from accumulation order, so 1e-2 is comfortable.
    assert jnp.allclose(out, ref.astype(jnp.float32), atol=1e-2, rtol=1e-2), max_err

    print("KERNEL_OK")
</pallas_src>

<mosaic_0001>
module attributes {stable_mosaic.version = 11 : i64} {
  func.func @kernel(%arg0: i32, %arg1: memref<2x4x4x64xf32, #tpu.memory_space<vmem>>, %arg2: memref<9x128x128xbf16, #tpu.memory_space<vmem>>, %arg3: memref<1x128xf32, #tpu.memory_space<vmem>>, %arg4: memref<1x128xf32, #tpu.memory_space<vmem>>, %arg5: memref<9x128x128xbf16, #tpu.memory_space<vmem>>, %arg6: memref<1x128xf32, #tpu.memory_space<vmem>>, %arg7: memref<1x128xf32, #tpu.memory_space<vmem>>, %arg8: memref<128x512xbf16, #tpu.memory_space<vmem>>, %arg9: memref<1x512xf32, #tpu.memory_space<vmem>>, %arg10: memref<2x4x2x4x256xbf16, #tpu.memory_space<vmem>>, %arg11: memref<2x6x8x128xf32, #tpu.memory_space<vmem>>, %arg12: memref<2x6x8x128xf32, #tpu.memory_space<vmem>>) attributes {dimension_semantics = [#tpu.dimension_semantics<parallel>], iteration_bounds = array<i64: 1>, scalar_prefetch = 0 : i64, scratch_operands = 2 : i64, tpu.core_type = #tpu.core_type<tc>, window_params = [{transform_indices = @transform_0, window_bounds = array<i64: 2, 4, 4, 64>}, {pipeline_mode = #tpu.pipeline_mode<synchronous>, transform_indices = @transform_1, window_bounds = array<i64: 9, 128, 128>}, {pipeline_mode = #tpu.pipeline_mode<synchronous>, transform_indices = @transform_2, window_bounds = array<i64: 1, 128>}, {pipeline_mode = #tpu.pipeline_mode<synchronous>, transform_indices = @transform_3, window_bounds = array<i64: 1, 128>}, {pipeline_mode = #tpu.pipeline_mode<synchronous>, transform_indices = @transform_4, window_bounds = array<i64: 9, 128, 128>}, {pipeline_mode = #tpu.pipeline_mode<synchronous>, transform_indices = @transform_5, window_bounds = array<i64: 1, 128>}, {pipeline_mode = #tpu.pipeline_mode<synchronous>, transform_indices = @transform_6, window_bounds = array<i64: 1, 128>}, {pipeline_mode = #tpu.pipeline_mode<synchronous>, transform_indices = @transform_7, window_bounds = array<i64: 128, 512>}, {pipeline_mode = #tpu.pipeline_mode<synchronous>, transform_indices = @transform_8, window_bounds = array<i64: 1, 512>}, {transform_indices = @transform_9, window_bounds = array<i64: 2, 4, 2, 4, 256>}]} {
    %c0 = arith.constant 0 : index
    %c0_0 = arith.constant 0 : index
    %c0_1 = arith.constant 0 : index
    %c0_2 = arith.constant 0 : index
    %0 = vector.load %arg1[%c0, %c0_0, %c0_1, %c0_2] : memref<2x4x4x64xf32, #tpu.memory_space<vmem>>, vector<2x4x4x64xf32>
    %cst = arith.constant 0.000000e+00 : f32
    %1 = vector.broadcast %cst : f32 to vector<2x4x4x64xf32>
    %2 = tpu.concatenate %0, %1 in 3 : vector<2x4x4x64xf32>, vector<2x4x4x64xf32> -> vector<2x4x4x128xf32>
    %cst_3 = arith.constant 0.000000e+00 : f32
    %3 = vector.broadcast %cst_3 : f32 to vector<2x1x8x128xf32>
    %c0_4 = arith.constant 0 : index
    %c0_5 = arith.constant 0 : index
    %c0_6 = arith.constant 0 : index
    %c0_7 = arith.constant 0 : index
    %4 = vector.load %arg11[%c0_4, %c0_5, %c0_6, %c0_7] : memref<2x6x8x128xf32, #tpu.memory_space<vmem>>, vector<2x1x8x128xf32>
    tpu.vector_store %arg11[%c0_4, %c0_5, %c0_6, %c0_7], %3 {strides = array<i32>} : memref<2x6x8x128xf32, #tpu.memory_space<vmem>>, vector<2x1x8x128xf32>,
    %cst_8 = arith.constant 0.000000e+00 : f32
    %5 = vector.broadcast %cst_8 : f32 to vector<2x1x8x128xf32>
    %c0_9 = arith.constant 0 : index
    %c5 = arith.constant 5 : index
    %c0_10 = arith.constant 0 : index
    %c0_11 = arith.constant 0 : index
    %6 = vector.load %arg11[%c0_9, %c5, %c0_10, %c0_11] : memref<2x6x8x128xf32, #tpu.memory_space<vmem>>, vector<2x1x8x128xf32>
    tpu.vector_store %arg11[%c0_9, %c5, %c0_10, %c0_11], %5 {strides = array<i32>} : memref<2x6x8x128xf32, #tpu.memory_space<vmem>>, vector<2x1x8x128xf32>,
    %cst_12 = arith.constant 0.000000e+00 : f32
    %7 = vector.broadcast %cst_12 : f32 to vector<2x4x1x128xf32>
    %c0_13 = arith.constant 0 : index
    %c1 = arith.constant 1 : index
    %c0_14 = arith.constant 0 : index
    %c0_15 = arith.constant 0 : index
    %8 = vector.load %arg11[%c0_13, %c1, %c0_14, %c0_15] : memref<2x6x8x128xf32, #tpu.memory_space<vmem>>, vector<2x4x1x128xf32>
    tpu.vector_store %arg11[%c0_13, %c1, %c0_14, %c0_15], %7 {strides = array<i32>} : memref<2x6x8x128xf32, #tpu.memory_space<vmem>>, vector<2x4x1x128xf32>,
    %cst_16 = arith.constant 0.000000e+00 : f32
    %9 = vector.broadcast %cst_16 : f32 to vector<2x4x3x128xf32>
    %c0_17 = arith.constant 0 : index
    %c1_18 = arith.constant 1 : index
    %c5_19 = arith.constant 5 : index
    %c0_20 = arith.constant 0 : index
    %10 = vector.load %arg11[%c0_17, %c1_18, %c5_19, %c0_20] : memref<2x6x8x128xf32, #tpu.memory_space<vmem>>, vector<2x4x3x128xf32>
    tpu.vector_store %arg11[%c0_17, %c1_18, %c5_19, %c0_20], %9 {strides = array<i32>} : memref<2x6x8x128xf32, #tpu.memory_space<vmem>>, vector<2x4x3x128xf32>,
    %c0_21 = arith.constant 0 : index
    %c1_22 = arith.constant 1 : index
    %c1_23 = arith.constant 1 : index
    %c0_24 = arith.constant 0 : index
    %11 = vector.load %arg11[%c0_21, %c1_22, %c1_23, %c0_24] : memref<2x6x8x128xf32, #tpu.memory_space<vmem>>, vector<2x4x4x128xf32>
    tpu.vector_store %arg11[%c0_21, %c1_22, %c1_23, %c0_24], %2 {strides = array<i32>} : memref<2x6x8x128xf32, #tpu.memory_space<vmem>>, vector<2x4x4x128xf32>,
    %c0_25 = arith.constant 0 : index
    %c0_26 = arith.constant 0 : index
    %c0_27 = arith.constant 0 : index
    %c0_28 = arith.constant 0 : index
    %12 = vector.load %arg11[%c0_25, %c0_26, %c0_27, %c0_28] : memref<2x6x8x128xf32, #tpu.memory_space<vmem>>, vector<2x6x8x128xf32>
    %13 = arith.truncf %12 : vector<2x6x8x128xf32> to vector<2x6x8x128xbf16>
    %14 = vector.extract_strided_slice %13 {offsets = [0, 0, 0, 0], sizes = [2, 4, 4, 128], strides = [1, 1, 1, 1]} : vector<2x6x8x128xbf16> to vector<2x4x4x128xbf16>
    %15 = vector.shape_cast %14 : vector<2x4x4x128xbf16> to vector<32x128xbf16>
    %c0_29 = arith.constant 0 : index
    %c0_30 = arith.constant 0 : index
    %c0_31 = arith.constant 0 : index
    %16 = vector.load %arg2[%c0_29, %c0_30, %c0_31] : memref<9x128x128xbf16, #tpu.memory_space<vmem>>, vector<1x128x128xbf16>
    %17 = vector.shape_cast %16 : vector<1x128x128xbf16> to vector<128x128xbf16>
    %cst_32 = arith.constant dense<0.000000e+00> : vector<32x128xf32>
    %18 = tpu.matmul %15, %17, %cst_32 {dimension_numbers = #tpu.dot_dimension_numbers<[1], [0], [0], [1], [0, 0, 1, 1], [], []>} : vector<32x128xbf16>, vector<128x128xbf16>, vector<32x128xf32> -> vector<32x128xf32>
    %19 = vector.extract_strided_slice %13 {offsets = [0, 0, 1, 0], sizes = [2, 4, 4, 128], strides = [1, 1, 1, 1]} : vector<2x6x8x128xbf16> to vector<2x4x4x128xbf16>
    %20 = vector.shape_cast %19 : vector<2x4x4x128xbf16> to vector<32x128xbf16>
    %c1_33 = arith.constant 1 : index
    %c0_34 = arith.constant 0 : index
    %c0_35 = arith.constant 0 : index
    %21 = vector.load %arg2[%c1_33, %c0_34, %c0_35] : memref<9x128x128xbf16, #tpu.memory_space<vmem>>, vector<1x128x128xbf16>
    %22 = vector.shape_cast %21 : vector<1x128x128xbf16> to vector<128x128xbf16>
    %cst_36 = arith.constant dense<0.000000e+00> : vector<32x128xf32>
    %23 = tpu.matmul %20, %22, %cst_36 {dimension_numbers = #tpu.dot_dimension_numbers<[1], [0], [0], [1], [0, 0, 1, 1], [], []>} : vector<32x128xbf16>, vector<128x128xbf16>, vector<32x128xf32> -> vector<32x128xf32>
    %24 = arith.addf %18, %23 : vector<32x128xf32>
    %25 = vector.extract_strided_slice %13 {offsets = [0, 0, 2, 0], sizes = [2, 4, 4, 128], strides = [1, 1, 1, 1]} : vector<2x6x8x128xbf16> to vector<2x4x4x128xbf16>
    %26 = vector.shape_cast %25 : vector<2x4x4x128xbf16> to vector<32x128xbf16>
    %c2 = arith.constant 2 : index
    %c0_37 = arith.constant 0 : index
    %c0_38 = arith.constant 0 : index
    %27 = vector.load %arg2[%c2, %c0_37, %c0_38] : memref<9x128x128xbf16, #tpu.memory_space<vmem>>, vector<1x128x128xbf16>
    %28 = vector.shape_cast %27 : vector<1x128x128xbf16> to vector<128x128xbf16>
    %cst_39 = arith.constant dense<0.000000e+00> : vector<32x128xf32>
    %29 = tpu.matmul %26, %28, %cst_39 {dimension_numbers = #tpu.dot_dimension_numbers<[1], [0], [0], [1], [0, 0, 1, 1], [], []>} : vector<32x128xbf16>, vector<128x128xbf16>, vector<32x128xf32> -> vector<32x128xf32>
    %30 = arith.addf %24, %29 : vector<32x128xf32>
    %31 = vector.extract_strided_slice %13 {offsets = [0, 1, 0, 0], sizes = [2, 4, 4, 128], strides = [1, 1, 1, 1]} : vector<2x6x8x128xbf16> to vector<2x4x4x128xbf16>
    %32 = vector.shape_cast %31 : vector<2x4x4x128xbf16> to vector<32x128xbf16>
    %c3 = arith.constant 3 : index
    %c0_40 = arith.constant 0 : index
    %c0_41 = arith.constant 0 : index
    %33 = vector.load %arg2[%c3, %c0_40, %c0_41] : memref<9x128x128xbf16, #tpu.memory_space<vmem>>, vector<1x128x128xbf16>
    %34 = vector.shape_cast %33 : vector<1x128x128xbf16> to vector<128x128xbf16>
    %cst_42 = arith.constant dense<0.000000e+00> : vector<32x128xf32>
    %35 = tpu.matmul %32, %34, %cst_42 {dimension_numbers = #tpu.dot_dimension_numbers<[1], [0], [0], [1], [0, 0, 1, 1], [], []>} : vector<32x128xbf16>, vector<128x128xbf16>, vector<32x128xf32> -> vector<32x128xf32>
    %36 = arith.addf %30, %35 : vector<32x128xf32>
    %37 = vector.extract_strided_slice %13 {offsets = [0, 1, 1, 0], sizes = [2, 4, 4, 128], strides = [1, 1, 1, 1]} : vector<2x6x8x128xbf16> to vector<2x4x4x128xbf16>
    %38 = vector.shape_cast %37 : vector<2x4x4x128xbf16> to vector<32x128xbf16>
    %c4 = arith.constant 4 : index
    %c0_43 = arith.constant 0 : index
    %c0_44 = arith.constant 0 : index
    %39 = vector.load %arg2[%c4, %c0_43, %c0_44] : memref<9x128x128xbf16, #tpu.memory_space<vmem>>, vector<1x128x128xbf16>
    %40 = vector.shape_cast %39 : vector<1x128x128xbf16> to vector<128x128xbf16>
    %cst_45 = arith.constant dense<0.000000e+00> : vector<32x128xf32>
    %41 = tpu.matmul %38, %40, %cst_45 {dimension_numbers = #tpu.dot_dimension_numbers<[1], [0], [0], [1], [0, 0, 1, 1], [], []>} : vector<32x128xbf16>, vector<128x128xbf16>, vector<32x128xf32> -> vector<32x128xf32>
    %42 = arith.addf %36, %41 : vector<32x128xf32>
    %43 = vector.extract_strided_slice %13 {offsets = [0, 1, 2, 0], sizes = [2, 4, 4, 128], strides = [1, 1, 1, 1]} : vector<2x6x8x128xbf16> to vector<2x4x4x128xbf16>
    %44 = vector.shape_cast %43 : vector<2x4x4x128xbf16> to vector<32x128xbf16>
    %c5_46 = arith.constant 5 : index
    %c0_47 = arith.constant 0 : index
    %c0_48 = arith.constant 0 : index
    %45 = vector.load %arg2[%c5_46, %c0_47, %c0_48] : memref<9x128x128xbf16, #tpu.memory_space<vmem>>, vector<1x128x128xbf16>
    %46 = vector.shape_cast %45 : vector<1x128x128xbf16> to vector<128x128xbf16>
    %cst_49 = arith.constant dense<0.000000e+00> : vector<32x128xf32>
    %47 = tpu.matmul %44, %46, %cst_49 {dimension_numbers = #tpu.dot_dimension_numbers<[1], [0], [0], [1], [0, 0, 1, 1], [], []>} : vector<32x128xbf16>, vector<128x128xbf16>, vector<32x128xf32> -> vector<32x128xf32>
    %48 = arith.addf %42, %47 : vector<32x128xf32>
    %49 = vector.extract_strided_slice %13 {offsets = [0, 2, 0, 0], sizes = [2, 4, 4, 128], strides = [1, 1, 1, 1]} : vector<2x6x8x128xbf16> to vector<2x4x4x128xbf16>
    %50 = vector.shape_cast %49 : vector<2x4x4x128xbf16> to vector<32x128xbf16>
    %c6 = arith.constant 6 : index
    %c0_50 = arith.constant 0 : index
    %c0_51 = arith.constant 0 : index
    %51 = vector.load %arg2[%c6, %c0_50, %c0_51] : memref<9x128x128xbf16, #tpu.memory_space<vmem>>, vector<1x128x128xbf16>
    %52 = vector.shape_cast %51 : vector<1x128x128xbf16> to vector<128x128xbf16>
    %cst_52 = arith.constant dense<0.000000e+00> : vector<32x128xf32>
    %53 = tpu.matmul %50, %52, %cst_52 {dimension_numbers = #tpu.dot_dimension_numbers<[1], [0], [0], [1], [0, 0, 1, 1], [], []>} : vector<32x128xbf16>, vector<128x128xbf16>, vector<32x128xf32> -> vector<32x128xf32>
    %54 = arith.addf %48, %53 : vector<32x128xf32>
    %55 = vector.extract_strided_slice %13 {offsets = [0, 2, 1, 0], sizes = [2, 4, 4, 128], strides = [1, 1, 1, 1]} : vector<2x6x8x128xbf16> to vector<2x4x4x128xbf16>
    %56 = vector.shape_cast %55 : vector<2x4x4x128xbf16> to vector<32x128xbf16>
    %c7 = arith.constant 7 : index
    %c0_53 = arith.constant 0 : index
    %c0_54 = arith.constant 0 : index
    %57 = vector.load %arg2[%c7, %c0_53, %c0_54] : memref<9x128x128xbf16, #tpu.memory_space<vmem>>, vector<1x128x128xbf16>
    %58 = vector.shape_cast %57 : vector<1x128x128xbf16> to vector<128x128xbf16>
    %cst_55 = arith.constant dense<0.000000e+00> : vector<32x128xf32>
    %59 = tpu.matmul %56, %58, %cst_55 {dimension_numbers = #tpu.dot_dimension_numbers<[1], [0], [0], [1], [0, 0, 1, 1], [], []>} : vector<32x128xbf16>, vector<128x128xbf16>, vector<32x128xf32> -> vector<32x128xf32>
    %60 = arith.addf %54, %59 : vector<32x128xf32>
    %61 = vector.extract_strided_slice %13 {offsets = [0, 2, 2, 0], sizes = [2, 4, 4, 128], strides = [1, 1, 1, 1]} : vector<2x6x8x128xbf16> to vector<2x4x4x128xbf16>
    %62 = vector.shape_cast %61 : vector<2x4x4x128xbf16> to vector<32x128xbf16>
    %c8 = arith.constant 8 : index
    %c0_56 = arith.constant 0 : index
    %c0_57 = arith.constant 0 : index
    %63 = vector.load %arg2[%c8, %c0_56, %c0_57] : memref<9x128x128xbf16, #tpu.memory_space<vmem>>, vector<1x128x128xbf16>
    %64 = vector.shape_cast %63 : vector<1x128x128xbf16> to vector<128x128xbf16>
    %cst_58 = arith.constant dense<0.000000e+00> : vector<32x128xf32>
    %65 = tpu.matmul %62, %64, %cst_58 {dimension_numbers = #tpu.dot_dimension_numbers<[1], [0], [0], [1], [0, 0, 1, 1], [], []>} : vector<32x128xbf16>, vector<128x128xbf16>, vector<32x128xf32> -> vector<32x128xf32>
    %66 = arith.addf %60, %65 : vector<32x128xf32>
    %c0_59 = arith.constant 0 : index
    %c0_60 = arith.constant 0 : index
    %67 = vector.load %arg3[%c0_59, %c0_60] : memref<1x128xf32, #tpu.memory_space<vmem>>, vector<1x128xf32>
    %68 = vector.broadcast %67 : vector<1x128xf32> to vector<32x128xf32>
    %69 = arith.mulf %66, %68 : vector<32x128xf32>
    %c0_61 = arith.constant 0 : index
    %c0_62 = arith.constant 0 : index
    %70 = vector.load %arg4[%c0_61, %c0_62] : memref<1x128xf32, #tpu.memory_space<vmem>>, vector<1x128xf32>
    %71 = vector.broadcast %70 : vector<1x128xf32> to vector<32x128xf32>
    %72 = arith.addf %69, %71 : vector<32x128xf32>
    %cst_63 = arith.constant 0.000000e+00 : f32
    %73 = vector.broadcast %cst_63 : f32 to vector<32x128xf32>
    %74 = arith.maximumf %72, %73 : vector<32x128xf32>
    %75 = vector.shape_cast %74 : vector<32x128xf32> to vector<2x4x4x128xf32>
    %cst_64 = arith.constant 0.000000e+00 : f32
    %76 = vector.broadcast %cst_64 : f32 to vector<2x1x8x128xf32>
    %c0_65 = arith.constant 0 : index
    %c0_66 = arith.constant 0 : index
    %c0_67 = arith.constant 0 : index
    %c0_68 = arith.constant 0 : index
    %77 = vector.load %arg12[%c0_65, %c0_66, %c0_67, %c0_68] : memref<2x6x8x128xf32, #tpu.memory_space<vmem>>, vector<2x1x8x128xf32>
    tpu.vector_store %arg12[%c0_65, %c0_66, %c0_67, %c0_68], %76 {strides = array<i32>} : memref<2x6x8x128xf32, #tpu.memory_space<vmem>>, vector<2x1x8x128xf32>,
    %cst_69 = arith.constant 0.000000e+00 : f32
    %78 = vector.broadcast %cst_69 : f32 to vector<2x1x8x128xf32>
    %c0_70 = arith.constant 0 : index
    %c5_71 = arith.constant 5 : index
    %c0_72 = arith.constant 0 : index
    %c0_73 = arith.constant 0 : index
    %79 = vector.load %arg12[%c0_70, %c5_71, %c0_72, %c0_73] : memref<2x6x8x128xf32, #tpu.memory_space<vmem>>, vector<2x1x8x128xf32>
    tpu.vector_store %arg12[%c0_70, %c5_71, %c0_72, %c0_73], %78 {strides = array<i32>} : memref<2x6x8x128xf32, #tpu.memory_space<vmem>>, vector<2x1x8x128xf32>,
    %cst_74 = arith.constant 0.000000e+00 : f32
    %80 = vector.broadcast %cst_74 : f32 to vector<2x4x1x128xf32>
    %c0_75 = arith.constant 0 : index
    %c1_76 = arith.constant 1 : index
    %c0_77 = arith.constant 0 : index
    %c0_78 = arith.constant 0 : index
    %81 = vector.load %arg12[%c0_75, %c1_76, %c0_77, %c0_78] : memref<2x6x8x128xf32, #tpu.memory_space<vmem>>, vector<2x4x1x128xf32>
    tpu.vector_store %arg12[%c0_75, %c1_76, %c0_77, %c0_78], %80 {strides = array<i32>} : memref<2x6x8x128xf32, #tpu.memory_space<vmem>>, vector<2x4x1x128xf32>,
    %cst_79 = arith.constant 0.000000e+00 : f32
    %82 = vector.broadcast %cst_79 : f32 to vector<2x4x3x128xf32>
    %c0_80 = arith.constant 0 : index
    %c1_81 = arith.constant 1 : index
    %c5_82 = arith.constant 5 : index
    %c0_83 = arith.constant 0 : index
    %83 = vector.load %arg12[%c0_80, %c1_81, %c5_82, %c0_83] : memref<2x6x8x128xf32, #tpu.memory_space<vmem>>, vector<2x4x3x128xf32>
    tpu.vector_store %arg12[%c0_80, %c1_81, %c5_82, %c0_83], %82 {strides = array<i32>} : memref<2x6x8x128xf32, #tpu.memory_space<vmem>>, vector<2x4x3x128xf32>,
    %c0_84 = arith.constant 0 : index
    %c1_85 = arith.constant 1 : index
    %c1_86 = arith.constant 1 : index
    %c0_87 = arith.constant 0 : index
    %84 = vector.load %arg12[%c0_84, %c1_85, %c1_86, %c0_87] : memref<2x6x8x128xf32, #tpu.memory_space<vmem>>, vector<2x4x4x128xf32>
    tpu.vector_store %arg12[%c0_84, %c1_85, %c1_86, %c0_87], %75 {strides = array<i32>} : memref<2x6x8x128xf32, #tpu.memory_space<vmem>>, vector<2x4x4x128xf32>,
    %c0_88 = arith.constant 0 : index
    %c0_89 = arith.constant 0 : index
    %c0_90 = arith.constant 0 : index
    %c0_91 = arith.constant 0 : index
    %85 = vector.load %arg12[%c0_88, %c0_89, %c0_90, %c0_91] : memref<2x6x8x128xf32, #tpu.memory_space<vmem>>, vector<2x6x8x128xf32>
    %86 = arith.truncf %85 : vector<2x6x8x128xf32> to vector<2x6x8x128xbf16>
    %87 = vector.extract_strided_slice %86 {offsets = [0, 0, 0, 0], sizes = [2, 4, 4, 128], strides = [1, 1, 1, 1]} : vector<2x6x8x128xbf16> to vector<2x4x4x128xbf16>
    %88 = vector.shape_cast %87 : vector<2x4x4x128xbf16> to vector<32x128xbf16>
    %c0_92 = arith.constant 0 : index
    %c0_93 = arith.constant 0 : index
    %c0_94 = arith.constant 0 : index
    %89 = vector.load %arg5[%c0_92, %c0_93, %c0_94] : memref<9x128x128xbf16, #tpu.memory_space<vmem>>, vector<1x128x128xbf16>
    %90 = vector.shape_cast %89 : vector<1x128x128xbf16> to vector<128x128xbf16>
    %cst_95 = arith.constant dense<0.000000e+00> : vector<32x128xf32>
    %91 = tpu.matmul %88, %90, %cst_95 {dimension_numbers = #tpu.dot_dimension_numbers<[1], [0], [0], [1], [0, 0, 1, 1], [], []>} : vector<32x128xbf16>, vector<128x128xbf16>, vector<32x128xf32> -> vector<32x128xf32>
    %92 = vector.extract_strided_slice %86 {offsets = [0, 0, 1, 0], sizes = [2, 4, 4, 128], strides = [1, 1, 1, 1]} : vector<2x6x8x128xbf16> to vector<2x4x4x128xbf16>
    %93 = vector.shape_cast %92 : vector<2x4x4x128xbf16> to vector<32x128xbf16>
    %c1_96 = arith.constant 1 : index
    %c0_97 = arith.constant 0 : index
    %c0_98 = arith.constant 0 : index
    %94 = vector.load %arg5[%c1_96, %c0_97, %c0_98] : memref<9x128x128xbf16, #tpu.memory_space<vmem>>, vector<1x128x128xbf16>
    %95 = vector.shape_cast %94 : vector<1x128x128xbf16> to vector<128x128xbf16>
    %cst_99 = arith.constant dense<0.000000e+00> : vector<32x128xf32>
    %96 = tpu.matmul %93, %95, %cst_99 {dimension_numbers = #tpu.dot_dimension_numbers<[1], [0], [0], [1], [0, 0, 1, 1], [], []>} : vector<32x128xbf16>, vector<128x128xbf16>, vector<32x128xf32> -> vector<32x128xf32>
    %97 = arith.addf %91, %96 : vector<32x128xf32>
    %98 = vector.extract_strided_slice %86 {offsets = [0, 0, 2, 0], sizes = [2, 4, 4, 128], strides = [1, 1, 1, 1]} : vector<2x6x8x128xbf16> to vector<2x4x4x128xbf16>
    %99 = vector.shape_cast %98 : vector<2x4x4x128xbf16> to vector<32x128xbf16>
    %c2_100 = arith.constant 2 : index
    %c0_101 = arith.constant 0 : index
    %c0_102 = arith.constant 0 : index
    %100 = vector.load %arg5[%c2_100, %c0_101, %c0_102] : memref<9x128x128xbf16, #tpu.memory_space<vmem>>, vector<1x128x128xbf16>
    %101 = vector.shape_cast %100 : vector<1x128x128xbf16> to vector<128x128xbf16>
    %cst_103 = arith.constant dense<0.000000e+00> : vector<32x128xf32>
    %102 = tpu.matmul %99, %101, %cst_103 {dimension_numbers = #tpu.dot_dimension_numbers<[1], [0], [0], [1], [0, 0, 1, 1], [], []>} : vector<32x128xbf16>, vector<128x128xbf16>, vector<32x128xf32> -> vector<32x128xf32>
    %103 = arith.addf %97, %102 : vector<32x128xf32>
    %104 = vector.extract_strided_slice %86 {offsets = [0, 1, 0, 0], sizes = [2, 4, 4, 128], strides = [1, 1, 1, 1]} : vector<2x6x8x128xbf16> to vector<2x4x4x128xbf16>
    %105 = vector.shape_cast %104 : vector<2x4x4x128xbf16> to vector<32x128xbf16>
    %c3_104 = arith.constant 3 : index
    %c0_105 = arith.constant 0 : index
    %c0_106 = arith.constant 0 : index
    %106 = vector.load %arg5[%c3_104, %c0_105, %c0_106] : memref<9x128x128xbf16, #tpu.memory_space<vmem>>, vector<1x128x128xbf16>
    %107 = vector.shape_cast %106 : vector<1x128x128xbf16> to vector<128x128xbf16>
    %cst_107 = arith.constant dense<0.000000e+00> : vector<32x128xf32>
    %108 = tpu.matmul %105, %107, %cst_107 {dimension_numbers = #tpu.dot_dimension_numbers<[1], [0], [0], [1], [0, 0, 1, 1], [], []>} : vector<32x128xbf16>, vector<128x128xbf16>, vector<32x128xf32> -> vector<32x128xf32>
    %109 = arith.addf %103, %108 : vector<32x128xf32>
    %110 = vector.extract_strided_slice %86 {offsets = [0, 1, 1, 0], sizes = [2, 4, 4, 128], strides = [1, 1, 1, 1]} : vector<2x6x8x128xbf16> to vector<2x4x4x128xbf16>
    %111 = vector.shape_cast %110 : vector<2x4x4x128xbf16> to vector<32x128xbf16>
    %c4_108 = arith.constant 4 : index
    %c0_109 = arith.constant 0 : index
    %c0_110 = arith.constant 0 : index
    %112 = vector.load %arg5[%c4_108, %c0_109, %c0_110] : memref<9x128x128xbf16, #tpu.memory_space<vmem>>, vector<1x128x128xbf16>
    %113 = vector.shape_cast %112 : vector<1x128x128xbf16> to vector<128x128xbf16>
    %cst_111 = arith.constant dense<0.000000e+00> : vector<32x128xf32>
    %114 = tpu.matmul %111, %113, %cst_111 {dimension_numbers = #tpu.dot_dimension_numbers<[1], [0], [0], [1], [0, 0, 1, 1], [], []>} : vector<32x128xbf16>, vector<128x128xbf16>, vector<32x128xf32> -> vector<32x128xf32>
    %115 = arith.addf %109, %114 : vector<32x128xf32>
    %116 = vector.extract_strided_slice %86 {offsets = [0, 1, 2, 0], sizes = [2, 4, 4, 128], strides = [1, 1, 1, 1]} : vector<2x6x8x128xbf16> to vector<2x4x4x128xbf16>
    %117 = vector.shape_cast %116 : vector<2x4x4x128xbf16> to vector<32x128xbf16>
    %c5_112 = arith.constant 5 : index
    %c0_113 = arith.constant 0 : index
    %c0_114 = arith.constant 0 : index
    %118 = vector.load %arg5[%c5_112, %c0_113, %c0_114] : memref<9x128x128xbf16, #tpu.memory_space<vmem>>, vector<1x128x128xbf16>
    %119 = vector.shape_cast %118 : vector<1x128x128xbf16> to vector<128x128xbf16>
    %cst_115 = arith.constant dense<0.000000e+00> : vector<32x128xf32>
    %120 = tpu.matmul %117, %119, %cst_115 {dimension_numbers = #tpu.dot_dimension_numbers<[1], [0], [0], [1], [0, 0, 1, 1], [], []>} : vector<32x128xbf16>, vector<128x128xbf16>, vector<32x128xf32> -> vector<32x128xf32>
    %121 = arith.addf %115, %120 : vector<32x128xf32>
    %122 = vector.extract_strided_slice %86 {offsets = [0, 2, 0, 0], sizes = [2, 4, 4, 128], strides = [1, 1, 1, 1]} : vector<2x6x8x128xbf16> to vector<2x4x4x128xbf16>
    %123 = vector.shape_cast %122 : vector<2x4x4x128xbf16> to vector<32x128xbf16>
    %c6_116 = arith.constant 6 : index
    %c0_117 = arith.constant 0 : index
    %c0_118 = arith.constant 0 : index
    %124 = vector.load %arg5[%c6_116, %c0_117, %c0_118] : memref<9x128x128xbf16, #tpu.memory_space<vmem>>, vector<1x128x128xbf16>
    %125 = vector.shape_cast %124 : vector<1x128x128xbf16> to vector<128x128xbf16>
    %cst_119 = arith.constant dense<0.000000e+00> : vector<32x128xf32>
    %126 = tpu.matmul %123, %125, %cst_119 {dimension_numbers = #tpu.dot_dimension_numbers<[1], [0], [0], [1], [0, 0, 1, 1], [], []>} : vector<32x128xbf16>, vector<128x128xbf16>, vector<32x128xf32> -> vector<32x128xf32>
    %127 = arith.addf %121, %126 : vector<32x128xf32>
    %128 = vector.extract_strided_slice %86 {offsets = [0, 2, 1, 0], sizes = [2, 4, 4, 128], strides = [1, 1, 1, 1]} : vector<2x6x8x128xbf16> to vector<2x4x4x128xbf16>
    %129 = vector.shape_cast %128 : vector<2x4x4x128xbf16> to vector<32x128xbf16>
    %c7_120 = arith.constant 7 : index
    %c0_121 = arith.constant 0 : index
    %c0_122 = arith.constant 0 : index
    %130 = vector.load %arg5[%c7_120, %c0_121, %c0_122] : memref<9x128x128xbf16, #tpu.memory_space<vmem>>, vector<1x128x128xbf16>
    %131 = vector.shape_cast %130 : vector<1x128x128xbf16> to vector<128x128xbf16>
    %cst_123 = arith.constant dense<0.000000e+00> : vector<32x128xf32>
    %132 = tpu.matmul %129, %131, %cst_123 {dimension_numbers = #tpu.dot_dimension_numbers<[1], [0], [0], [1], [0, 0, 1, 1], [], []>} : vector<32x128xbf16>, vector<128x128xbf16>, vector<32x128xf32> -> vector<32x128xf32>
    %133 = arith.addf %127, %132 : vector<32x128xf32>
    %134 = vector.extract_strided_slice %86 {offsets = [0, 2, 2, 0], sizes = [2, 4, 4, 128], strides = [1, 1, 1, 1]} : vector<2x6x8x128xbf16> to vector<2x4x4x128xbf16>
    %135 = vector.shape_cast %134 : vector<2x4x4x128xbf16> to vector<32x128xbf16>
    %c8_124 = arith.constant 8 : index
    %c0_125 = arith.constant 0 : index
    %c0_126 = arith.constant 0 : index
    %136 = vector.load %arg5[%c8_124, %c0_125, %c0_126] : memref<9x128x128xbf16, #tpu.memory_space<vmem>>, vector<1x128x128xbf16>
    %137 = vector.shape_cast %136 : vector<1x128x128xbf16> to vector<128x128xbf16>
    %cst_127 = arith.constant dense<0.000000e+00> : vector<32x128xf32>
    %138 = tpu.matmul %135, %137, %cst_127 {dimension_numbers = #tpu.dot_dimension_numbers<[1], [0], [0], [1], [0, 0, 1, 1], [], []>} : vector<32x128xbf16>, vector<128x128xbf16>, vector<32x128xf32> -> vector<32x128xf32>
    %139 = arith.addf %133, %138 : vector<32x128xf32>
    %c0_128 = arith.constant 0 : index
    %c0_129 = arith.constant 0 : index
    %140 = vector.load %arg6[%c0_128, %c0_129] : memref<1x128xf32, #tpu.memory_space<vmem>>, vector<1x128xf32>
    %141 = vector.broadcast %140 : vector<1x128xf32> to vector<32x128xf32>
    %142 = arith.mulf %139, %141 : vector<32x128xf32>
    %c0_130 = arith.constant 0 : index
    %c0_131 = arith.constant 0 : index
    %143 = vector.load %arg7[%c0_130, %c0_131] : memref<1x128xf32, #tpu.memory_space<vmem>>, vector<1x128xf32>
    %144 = vector.broadcast %143 : vector<1x128xf32> to vector<32x128xf32>
    %145 = arith.addf %142, %144 : vector<32x128xf32>
    %cst_132 = arith.constant 0.000000e+00 : f32
    %146 = vector.broadcast %cst_132 : f32 to vector<32x128xf32>
    %147 = arith.maximumf %145, %146 : vector<32x128xf32>
    %148 = arith.truncf %147 : vector<32x128xf32> to vector<32x128xbf16>
    %c0_133 = arith.constant 0 : index
    %c0_134 = arith.constant 0 : index
    %149 = vector.load %arg8[%c0_133, %c0_134] : memref<128x512xbf16, #tpu.memory_space<vmem>>, vector<128x512xbf16>
    %cst_135 = arith.constant dense<0.000000e+00> : vector<32x512xf32>
    %150 = tpu.matmul %148, %149, %cst_135 {dimension_numbers = #tpu.dot_dimension_numbers<[1], [0], [0], [1], [0, 0, 1, 1], [], []>} : vector<32x128xbf16>, vector<128x512xbf16>, vector<32x512xf32> -> vector<32x512xf32>
    %c0_136 = arith.constant 0 : index
    %c0_137 = arith.constant 0 : index
    %151 = vector.load %arg9[%c0_136, %c0_137] : memref<1x512xf32, #tpu.memory_space<vmem>>, vector<1x512xf32>
    %152 = vector.broadcast %151 : vector<1x512xf32> to vector<32x512xf32>
    %153 = arith.addf %150, %152 : vector<32x512xf32>
    %154 = vector.extract_strided_slice %153 {offsets = [0, 0], sizes = [32, 256], strides = [1, 1]} : vector<32x512xf32> to vector<32x256xf32>
    %155 = vector.shape_cast %154 : vector<32x256xf32> to vector<2x4x1x4x256xf32>
    %156 = arith.truncf %155 : vector<2x4x1x4x256xf32> to vector<2x4x1x4x256xbf16>
    %c0_138 = arith.constant 0 : index
    %c0_139 = arith.constant 0 : index
    %c0_140 = arith.constant 0 : index
    %c0_141 = arith.constant 0 : index
    %c0_142 = arith.constant 0 : index
    %157 = vector.load %arg10[%c0_138, %c0_139, %c0_140, %c0_141, %c0_142] : memref<2x4x2x4x256xbf16, #tpu.memory_space<vmem>>, vector<2x4x1x4x256xbf16>
    tpu.vector_store %arg10[%c0_138, %c0_139, %c0_140, %c0_141, %c0_142], %156 {strides = array<i32>} : memref<2x4x2x4x256xbf16, #tpu.memory_space<vmem>>, vector<2x4x1x4x256xbf16>,
    %158 = vector.extract_strided_slice %153 {offsets = [0, 256], sizes = [32, 256], strides = [1, 1]} : vector<32x512xf32> to vector<32x256xf32>
    %159 = vector.shape_cast %158 : vector<32x256xf32> to vector<2x4x1x4x256xf32>
    %160 = arith.truncf %159 : vector<2x4x1x4x256xf32> to vector<2x4x1x4x256xbf16>
    %c0_143 = arith.constant 0 : index
    %c0_144 = arith.constant 0 : index
    %c1_145 = arith.constant 1 : index
    %c0_146 = arith.constant 0 : index
    %c0_147 = arith.constant 0 : index
    %161 = vector.load %arg10[%c0_143, %c0_144, %c1_145, %c0_146, %c0_147] : memref<2x4x2x4x256xbf16, #tpu.memory_space<vmem>>, vector<2x4x1x4x256xbf16>
    tpu.vector_store %arg10[%c0_143, %c0_144, %c1_145, %c0_146, %c0_147], %160 {strides = array<i32>} : memref<2x4x2x4x256xbf16, #tpu.memory_space<vmem>>, vector<2x4x1x4x256xbf16>,
    return
  }
  func.func @transform_0(%arg0: i32) -> (i32, i32, i32, i32) {
    %c0_i32 = arith.constant 0 : i32
    %c0_i32_0 = arith.constant 0 : i32
    %c0_i32_1 = arith.constant 0 : i32
    %c0_i32_2 = arith.constant 0 : i32
    return %arg0, %c0_i32, %c0_i32_0, %c0_i32_1 : i32, i32, i32, i32
  }
  func.func @transform_1(%arg0: i32) -> (i32, i32, i32) {
    %c0_i32 = arith.constant 0 : i32
    %c0_i32_0 = arith.constant 0 : i32
    %c0_i32_1 = arith.constant 0 : i32
    %c0_i32_2 = arith.constant 0 : i32
    return %c0_i32, %c0_i32_0, %c0_i32_1 : i32, i32, i32
  }
  func.func @transform_2(%arg0: i32) -> (i32, i32) {
    %c0_i32 = arith.constant 0 : i32
    %c0_i32_0 = arith.constant 0 : i32
    %c0_i32_1 = arith.constant 0 : i32
    return %c0_i32, %c0_i32_0 : i32, i32
  }
  func.func @transform_3(%arg0: i32) -> (i32, i32) {
    %c0_i32 = arith.constant 0 : i32
    %c0_i32_0 = arith.constant 0 : i32
    %c0_i32_1 = arith.constant 0 : i32
    return %c0_i32, %c0_i32_0 : i32, i32
  }
  func.func @transform_4(%arg0: i32) -> (i32, i32, i32) {
    %c0_i32 = arith.constant 0 : i32
    %c0_i32_0 = arith.constant 0 : i32
    %c0_i32_1 = arith.constant 0 : i32
    %c0_i32_2 = arith.constant 0 : i32
    return %c0_i32, %c0_i32_0, %c0_i32_1 : i32, i32, i32
  }
  func.func @transform_5(%arg0: i32) -> (i32, i32) {
    %c0_i32 = arith.constant 0 : i32
    %c0_i32_0 = arith.constant 0 : i32
    %c0_i32_1 = arith.constant 0 : i32
    return %c0_i32, %c0_i32_0 : i32, i32
  }
  func.func @transform_6(%arg0: i32) -> (i32, i32) {
    %c0_i32 = arith.constant 0 : i32
    %c0_i32_0 = arith.constant 0 : i32
    %c0_i32_1 = arith.constant 0 : i32
    return %c0_i32, %c0_i32_0 : i32, i32
  }
  func.func @transform_7(%arg0: i32) -> (i32, i32) {
    %c0_i32 = arith.constant 0 : i32
    %c0_i32_0 = arith.constant 0 : i32
    %c0_i32_1 = arith.constant 0 : i32
    return %c0_i32, %c0_i32_0 : i32, i32
  }
  func.func @transform_8(%arg0: i32) -> (i32, i32) {
    %c0_i32 = arith.constant 0 : i32
    %c0_i32_0 = arith.constant 0 : i32
    %c0_i32_1 = arith.constant 0 : i32
    return %c0_i32, %c0_i32_0 : i32, i32
  }
  func.func @transform_9(%arg0: i32) -> (i32, i32, i32, i32, i32) {
    %c0_i32 = arith.constant 0 : i32
    %c0_i32_0 = arith.constant 0 : i32
    %c0_i32_1 = arith.constant 0 : i32
    %c0_i32_2 = arith.constant 0 : i32
    %c0_i32_3 = arith.constant 0 : i32
    return %arg0, %c0_i32, %c0_i32_0, %c0_i32_1, %c0_i32_2 : i32, i32, i32, i32, i32
  }
}

</mosaic_0001>

<llo_original>
// kernel: tpu_custom_call.1
$region0: #{tpu_custom_call.1}
  #allocation0 [shape = 'u32[]', space=smem, size = 0x4, offset = 0x4, fixed_abs, tag = 'smem constant byte address 0x4 - core index']
  #allocation1 [shape = 'u32[144,128]{1,0:T(1,128)}', space=vmem, size = 0x12000, scoped, tag = 'internal scratch']
  #allocation2 [shape = 'f32[2,6,8,128]{3,2,1,0:T(8,128)}', space=vmem, size = 0xc000, scoped, tag = 'scratch operand']
  #allocation3 [shape = 'f32[2,6,8,128]{3,2,1,0:T(8,128)}', space=vmem, size = 0xc000, scoped, tag = 'scratch operand']
  %s0 = inlined_call_operand.hbm [shape: f32[2,4,4,64], index: 0, kind: input, shape index: {}]
  %s1 = inlined_call_operand.hbm [shape: bf16[9,128,128], index: 1, kind: input, shape index: {}]
  %s2 = inlined_call_operand.vmem [shape: f32[1,128], index: 2, kind: input, shape index: {}]
  %s3 = inlined_call_operand.vmem [shape: f32[1,128], index: 3, kind: input, shape index: {}]
  %s4 = inlined_call_operand.hbm [shape: bf16[9,128,128], index: 4, kind: input, shape index: {}]
  %s5 = inlined_call_operand.vmem [shape: f32[1,128], index: 5, kind: input, shape index: {}]
  %s6 = inlined_call_operand.vmem [shape: f32[1,128], index: 6, kind: input, shape index: {}]
  %s7 = inlined_call_operand.hbm [shape: bf16[128,512], index: 7, kind: input, shape index: {}]
  %s8 = inlined_call_operand.vmem [shape: f32[1,512], index: 8, kind: input, shape index: {}]
  %s9 = inlined_call_operand.hbm [shape: bf16[2,4,2,4,256], index: 9, kind: output, shape index: {}]
  %s10 = sld [smem:[#allocation0]]
  $region62: #{tpu_custom_call.1} parent=0
    _
  %s12 = ssub.s32 1, %s10
  %s13 = scalar_select 0, %s12, %s10
  $region1: #{tpu_custom_call.1} parent=0
    #allocation4 [shape = 'u8[16384]{0}', space=vmem, size = 0x4000, scoped, tag = 'input window, operand 0, single buffered']
    #allocation5 [shape = 's32[1]{0}', space=sflag, size = 0x4, scoped, tag = 'scoped memory for tpu_custom_call.1']
    #allocation6 [shape = 's32[1]{0}', space=sflag, size = 0x4, scoped, tag = 'scoped memory for tpu_custom_call.1']
    #allocation7 [shape = 'u8[294912]{0}', space=vmem, size = 0x48000, scoped, tag = 'input window, operand 1, single buffered']
    #allocation8 [shape = 's32[1]{0}', space=sflag, size = 0x4, scoped, tag = 'scoped memory for tpu_custom_call.1']
    #allocation9 [shape = 'u8[294912]{0}', space=vmem, size = 0x48000, scoped, tag = 'input window, operand 4, single buffered']
    #allocation10 [shape = 'u8[131072]{0}', space=vmem, size = 0x20000, scoped, tag = 'input window, operand 7, single buffered']
    #allocation11 [shape = 's32[1]{0}', space=sflag, size = 0x4, scoped, tag = 'scoped memory for tpu_custom_call.1']
    #allocation12 [shape = 'u8[32768]{0}', space=vmem, size = 0x8000, scoped, tag = 'output window, operand 0, single buffered']
    %14 = vsyncpa [#allocation5], 0
    %15 = vsyncpa [#allocation8], 0
    %16 = vsyncpa [#allocation11], 0
    %17 = vsyncpa [#allocation6], 0
    // Predicated region
    $region2: #{tpu_custom_call.1} parent=1 // pred_check
      _
    $region3: #{tpu_custom_call.1} parent=1 // pred_check_branch
      %19 = sbr.rel (0) target = $region5
    $region4: #{tpu_custom_call.1} parent=1 // pred_region
      %s21 = ssub.s32 512, 512
      %22 = vsyncadd [#allocation5], %s21
      %s23 = sshll.u32 [#allocation4], 4
      %s24 = int_to_ptr.vmem [resolvable:$true] %s23
      %29 = dma.hbm_to_vmem [thread:$0]  %s0, 512, %s24, [#allocation5], 64, 64, 4
    $region5: #{tpu_custom_call.1} parent=1 // pred_fallthru
      _
    // Predicated region
    $region6: #{tpu_custom_call.1} parent=1 // pred_check
      _
    $region7: #{tpu_custom_call.1} parent=1 // pred_check_branch
      %31 = sbr.rel (0) target = $region9
    $region8: #{tpu_custom_call.1} parent=1 // pred_region
      %s33 = ssub.s32 9216, 9216
      %34 = vsyncadd [#allocation8], %s33
      %s35 = sshll.u32 [#allocation7], 4
      %s36 = int_to_ptr.vmem [resolvable:$true] %s35
      %41 = dma.hbm_to_vmem [thread:$0]  %s1, 9216, %s36, [#allocation8], 64, 64, 4
    $region9: #{tpu_custom_call.1} parent=1 // pred_fallthru
      _
    // Predicated region
    $region10: #{tpu_custom_call.1} parent=1 // pred_check
      _
    $region11: #{tpu_custom_call.1} parent=1 // pred_check_branch
      %43 = sbr.rel (0) target = $region13
    $region12: #{tpu_custom_call.1} parent=1 // pred_region
      _
    $region13: #{tpu_custom_call.1} parent=1 // pred_fallthru
      _
    // Predicated region
    $region14: #{tpu_custom_call.1} parent=1 // pred_check
      _
    $region15: #{tpu_custom_call.1} parent=1 // pred_check_branch
      %45 = sbr.rel (0) target = $region17
    $region16: #{tpu_custom_call.1} parent=1 // pred_region
      _
    $region17: #{tpu_custom_call.1} parent=1 // pred_fallthru
      _
    // Predicated region
    $region18: #{tpu_custom_call.1} parent=1 // pred_check
      _
    $region19: #{tpu_custom_call.1} parent=1 // pred_check_branch
      %47 = sbr.rel (0) target = $region21
    $region20: #{tpu_custom_call.1} parent=1 // pred_region
      %s49 = ssub.s32 9216, 9216
      %50 = vsyncadd [#allocation8], %s49
      %s51 = sshll.u32 [#allocation9], 4
      %s52 = int_to_ptr.vmem [resolvable:$true] %s51
      %57 = dma.hbm_to_vmem [thread:$0]  %s4, 9216, %s52, [#allocation8], 64, 64, 4
    $region21: #{tpu_custom_call.1} parent=1 // pred_fallthru
      _
    // Predicated region
    $region22: #{tpu_custom_call.1} parent=1 // pred_check
      _
    $region23: #{tpu_custom_call.1} parent=1 // pred_check_branch
      %59 = sbr.rel (0) target = $region25
    $region24: #{tpu_custom_call.1} parent=1 // pred_region
      _
    $region25: #{tpu_custom_call.1} parent=1 // pred_fallthru
      _
    // Predicated region
    $region26: #{tpu_custom_call.1} parent=1 // pred_check
      _
    $region27: #{tpu_custom_call.1} parent=1 // pred_check_branch
      %61 = sbr.rel (0) target = $region29
    $region28: #{tpu_custom_call.1} parent=1 // pred_region
      _
    $region29: #{tpu_custom_call.1} parent=1 // pred_fallthru
      _
    // Predicated region
    $region30: #{tpu_custom_call.1} parent=1 // pred_check
      _
    $region31: #{tpu_custom_call.1} parent=1 // pred_check_branch
      %63 = sbr.rel (0) target = $region33
    $region32: #{tpu_custom_call.1} parent=1 // pred_region
      %s65 = ssub.s32 4096, 4096
      %66 = vsyncadd [#allocation11], %s65
      %s67 = sshll.u32 [#allocation10], 4
      %s68 = int_to_ptr.vmem [resolvable:$true] %s67
      %73 = dma.hbm_to_vmem [thread:$0]  %s7, 4096, %s68, [#allocation11], 256, 256, 16
    $region33: #{tpu_custom_call.1} parent=1 // pred_fallthru
      _
    // Predicated region
    $region34: #{tpu_custom_call.1} parent=1 // pred_check
      _
    $region35: #{tpu_custom_call.1} parent=1 // pred_check_branch
      %75 = sbr.rel (0) target = $region37
    $region36: #{tpu_custom_call.1} parent=1 // pred_region
      _
    $region37: #{tpu_custom_call.1} parent=1 // pred_fallthru
      _
    // Predicated region
    $region38: #{tpu_custom_call.1} parent=1 // pred_check
      _
    $region39: #{tpu_custom_call.1} parent=1 // pred_check_branch
      %77 = sbr.rel (0) target = $region41
    $region40: #{tpu_custom_call.1} parent=1 // pred_region
      %78 = dma.done [#allocation5], 512
    $region41: #{tpu_custom_call.1} parent=1 // pred_fallthru
      _
    // Predicated region
    $region42: #{tpu_custom_call.1} parent=1 // pred_check
      _
    $region43: #{tpu_custom_call.1} parent=1 // pred_check_branch
      %80 = sbr.rel (0) target = $region45
    $region44: #{tpu_custom_call.1} parent=1 // pred_region
      %81 = dma.done [#allocation8], 9216
    $region45: #{tpu_custom_call.1} parent=1 // pred_fallthru
      _
    // Predicated region
    $region46: #{tpu_custom_call.1} parent=1 // pred_check
      _
    $region47: #{tpu_custom_call.1} parent=1 // pred_check_branch
      %83 = sbr.rel (0) target = $region49
    $region48: #{tpu_custom_call.1} parent=1 // pred_region
      %84 = dma.done [#allocation8], 9216
    $region49: #{tpu_custom_call.1} parent=1 // pred_fallthru
      _
    // Predicated region
    $region50: #{tpu_custom_call.1} parent=1 // pred_check
      _
    $region51: #{tpu_custom_call.1} parent=1 // pred_check_branch
      %86 = sbr.rel (0) target = $region53
    $region52: #{tpu_custom_call.1} parent=1 // pred_region
      %87 = dma.done [#allocation11], 4096
    $region53: #{tpu_custom_call.1} parent=1 // pred_fallthru
      _
    %v89 = vld [vmem:[#allocation4] sm:$0xf]
    %v90 = vld [vmem:[#allocation4 + $0x4] sm:$0xf]
    %v91 = vld [vmem:[#allocation4 + $0x8] sm:$0xf]
    %v92 = vld [vmem:[#allocation4 + $0xc] sm:$0xf]
    %v93 = vld [vmem:[#allocation4 + $0x10] sm:$0xf]
    %v94 = vld [vmem:[#allocation4 + $0x14] sm:$0xf]
    %v95 = vld [vmem:[#allocation4 + $0x18] sm:$0xf]
    %v96 = vld [vmem:[#allocation4 + $0x1c] sm:$0xf]
    %vm97 = vcmask 523264
    %v98 = vsel %vm97, %v89, 0.0
    %v99 = vsel %vm97, %v90, 0.0
    %v100 = vsel %vm97, %v91, 0.0
    %v101 = vsel %vm97, %v92, 0.0
    %v102 = vsel %vm97, %v93, 0.0
    %v103 = vsel %vm97, %v94, 0.0
    %v104 = vsel %vm97, %v95, 0.0
    %v105 = vsel %vm97, %v96, 0.0
    %106 = vst [vmem:[#allocation2] sm:$0xff] 0.0
    %107 = vst [vmem:[#allocation2 + $0x30] sm:$0xff] 0.0
    %s108 = scalar_lea.vmem [#allocation2], 40
    %109 = vst [vmem:[%s108] sm:$0xff] 0.0
    %110 = vst [vmem:[%s108 + $0x30] sm:$0xff] 0.0
    %s111 = scalar_lea.vmem [#allocation2], 8
    %112 = vst [vmem:[%s111] sm:$0x1] 0.0
    %113 = vst [vmem:[%s111 + $0x8] sm:$0x1] 0.0
    %114 = vst [vmem:[%s111 + $0x10] sm:$0x1] 0.0
    %115 = vst [vmem:[%s111 + $0x18] sm:$0x1] 0.0
    %116 = vst [vmem:[%s111 + $0x30] sm:$0x1] 0.0
    %117 = vst [vmem:[%s111 + $0x38] sm:$0x1] 0.0
    %118 = vst [vmem:[%s111 + $0x40] sm:$0x1] 0.0
    %119 = vst [vmem:[%s111 + $0x48] sm:$0x1] 0.0
    %120 = vst [vmem:[%s111 + $0x5] sm:$0x7] 0.0
    %121 = vst [vmem:[%s111 + $0xd] sm:$0x7] 0.0
    %122 = vst [vmem:[%s111 + $0x15] sm:$0x7] 0.0
    %123 = vst [vmem:[%s111 + $0x1d] sm:$0x7] 0.0
    %124 = vst [vmem:[%s111 + $0x35] sm:$0x7] 0.0
    %125 = vst [vmem:[%s111 + $0x3d] sm:$0x7] 0.0
    %126 = vst [vmem:[%s111 + $0x45] sm:$0x7] 0.0
    %127 = vst [vmem:[%s111 + $0x4d] sm:$0x7] 0.0
    %128 = vst [vmem:[%s111 + $0x1] sm:$0xf] %v98
    %129 = vst [vmem:[%s111 + $0x9] sm:$0xf] %v99
    %130 = vst [vmem:[%s111 + $0x11] sm:$0xf] %v100
    %131 = vst [vmem:[%s111 + $0x19] sm:$0xf] %v101
    %132 = vst [vmem:[%s111 + $0x31] sm:$0xf] %v102
    %133 = vst [vmem:[%s111 + $0x39] sm:$0xf] %v103
    %134 = vst [vmem:[%s111 + $0x41] sm:$0xf] %v104
    %135 = vst [vmem:[%s111 + $0x49] sm:$0xf] %v105
    %v136 = vld [vmem:[#allocation2] sm:$0xff]
    %v137 = vld [vmem:[#allocation2 + $0x8] sm:$0xff]
    %v138 = vld [vmem:[#allocation2 + $0x10] sm:$0xff]
    %v139 = vld [vmem:[#allocation2 + $0x18] sm:$0xff]
    %v140 = vld [vmem:[#allocation2 + $0x20] sm:$0xff]
    %v141 = vld [vmem:[#allocation2 + $0x28] sm:$0xff]
    %v142 = vld [vmem:[#allocation2 + $0x30] sm:$0xff]
    %v143 = vld [vmem:[#allocation2 + $0x38] sm:$0xff]
    %v144 = vld [vmem:[#allocation2 + $0x40] sm:$0xff]
    %v145 = vld [vmem:[#allocation2 + $0x48] sm:$0xff]
    %v146 = vld [vmem:[#allocation2 + $0x50] sm:$0xff]
    %v147 = vld [vmem:[#allocation2 + $0x58] sm:$0xff]
    %v148 = vpack.c.bf16 %v136, %v136
    %v149 = vpack.c.bf16 %v137, %v137
    %v150 = vpack.c.bf16 %v138, %v138
    %v151 = vpack.c.bf16 %v139, %v139
    %v152 = vpack.c.bf16 %v140, %v140
    %v153 = vpack.c.bf16 %v141, %v141
    %v154 = vpack.c.bf16 %v142, %v142
    %v155 = vpack.c.bf16 %v143, %v143
    %v156 = vpack.c.bf16 %v144, %v144
    %v157 = vpack.c.bf16 %v145, %v145
    %v158 = vpack.c.bf16 %v146, %v146
    %v159 = vpack.c.bf16 %v147, %v147
    %v160 = vld [vmem:[#allocation7] sm:$0xf]
    %v161 = vld [vmem:[#allocation7 + $0x4] sm:$0xf]
    %v162 = vld [vmem:[#allocation7 + $0x8] sm:$0xf]
    %v163 = vld [vmem:[#allocation7 + $0xc] sm:$0xf]
    %v164 = vld [vmem:[#allocation7 + $0x10] sm:$0xf]
    %v165 = vld [vmem:[#allocation7 + $0x14] sm:$0xf]
    %v166 = vld [vmem:[#allocation7 + $0x18] sm:$0xf]
    %v167 = vld [vmem:[#allocation7 + $0x1c] sm:$0xf]
    %v168 = vld [vmem:[#allocation7 + $0x20] sm:$0xf]
    %v169 = vld [vmem:[#allocation7 + $0x24] sm:$0xf]
    %v170 = vld [vmem:[#allocation7 + $0x28] sm:$0xf]
    %v171 = vld [vmem:[#allocation7 + $0x2c] sm:$0xf]
    %v172 = vld [vmem:[#allocation7 + $0x30] sm:$0xf]
    %v173 = vld [vmem:[#allocation7 + $0x34] sm:$0xf]
    %v174 = vld [vmem:[#allocation7 + $0x38] sm:$0xf]
    %v175 = vld [vmem:[#allocation7 + $0x3c] sm:$0xf]
    %v185 = vunpack.c.l.s4 1983009808
    %v186 = vunpack.c.0.s8 %v185
    %v187 = vlaneseq
    %v188 = vshrl.u32 %v187, 7
    %v189 = vsub.s32 %v186, %v188
    %v190 = vrot.slane %v148, %v189
    %v191 = vcombine.high %v190, %v190
    %v193 = vunpack.c.l.s4 1983009808
    %v194 = vunpack.c.0.s8 %v193
    %v195 = vlaneseq
    %v196 = vshrl.u32 %v195, 7
    %v197 = vsub.s32 %v194, %v196
    %v198 = vrot.slane %v149, %v197
    %v199 = vcombine.high %v198, %v198
    %v201 = vunpack.c.l.s4 1983009808
    %v202 = vunpack.c.0.s8 %v201
    %v203 = vlaneseq
    %v204 = vshrl.u32 %v203, 7
    %v205 = vsub.s32 %v202, %v204
    %v206 = vrot.slane %v150, %v205
    %v207 = vcombine.high %v206, %v206
    %v209 = vunpack.c.l.s4 1983009808
    %v210 = vunpack.c.0.s8 %v209
    %v211 = vlaneseq
    %v212 = vshrl.u32 %v211, 7
    %v213 = vsub.s32 %v210, %v212
    %v214 = vrot.slane %v151, %v213
    %v215 = vcombine.high %v214, %v214
    %v217 = vunpack.c.l.s4 1983009808
    %v218 = vunpack.c.0.s8 %v217
    %v219 = vlaneseq
    %v220 = vshrl.u32 %v219, 7
    %v221 = vsub.s32 %v218, %v220
    %v222 = vrot.slane %v154, %v221
    %v223 = vcombine.high %v222, %v222
    %v225 = vunpack.c.l.s4 1983009808
    %v226 = vunpack.c.0.s8 %v225
    %v227 = vlaneseq
    %v228 = vshrl.u32 %v227, 7
    %v229 = vsub.s32 %v226, %v228
    %v230 = vrot.slane %v155, %v229
    %v231 = vcombine.high %v230, %v230
    %v233 = vunpack.c.l.s4 1983009808
    %v234 = vunpack.c.0.s8 %v233
    %v235 = vlaneseq
    %v236 = vshrl.u32 %v235, 7
    %v237 = vsub.s32 %v234, %v236
    %v238 = vrot.slane %v156, %v237
    %v239 = vcombine.high %v238, %v238
    %v241 = vunpack.c.l.s4 1983009808
    %v242 = vunpack.c.0.s8 %v241
    %v243 = vlaneseq
    %v244 = vshrl.u32 %v243, 7
    %v245 = vsub.s32 %v242, %v244
    %v246 = vrot.slane %v157, %v245
    %v247 = vcombine.high %v246, %v246
    %vm248 = vsmask.f32 1280
    %vm249 = vsmask.f32 3336
    %vm250 = vmor %vm248, %vm249
    %vm251 = vsmask.f32 5392
    %vm252 = vmor %vm250, %vm251
    %vm253 = vsmask.f32 7448
    %vm254 = vmor %vm252, %vm253
    %v256 = vshrl.u32 %v190, 16
    %v258 = vrot.slane %v256, 6
    %v259 = vshll.u32 %v190, 16
    %v261 = vrot.slane %v259, 7
    %v262 = vor.u32 %v258, %v261
    %v263 = vrot.slane %v262, 2
    %v265 = vshll.u32 %v191, 16
    %v267 = vrot.slane %v265, 7
    %v268 = vsel %vm254, %v263, %v267
    %v270 = vshrl.u32 %v198, 16
    %v272 = vrot.slane %v270, 6
    %v273 = vshll.u32 %v198, 16
    %v275 = vrot.slane %v273, 7
    %v276 = vor.u32 %v272, %v275
    %v277 = vrot.slane %v276, 2
    %v279 = vshll.u32 %v199, 16
    %v281 = vrot.slane %v279, 7
    %v282 = vsel %vm254, %v277, %v281
    %v284 = vshrl.u32 %v206, 16
    %v286 = vrot.slane %v284, 6
    %v287 = vshll.u32 %v206, 16
    %v289 = vrot.slane %v287, 7
    %v290 = vor.u32 %v286, %v289
    %v291 = vrot.slane %v290, 2
    %v293 = vshll.u32 %v207, 16
    %v295 = vrot.slane %v293, 7
    %v296 = vsel %vm254, %v291, %v295
    %v298 = vshrl.u32 %v214, 16
    %v300 = vrot.slane %v298, 6
    %v301 = vshll.u32 %v214, 16
    %v303 = vrot.slane %v301, 7
    %v304 = vor.u32 %v300, %v303
    %v305 = vrot.slane %v304, 2
    %v307 = vshll.u32 %v215, 16
    %v309 = vrot.slane %v307, 7
    %v310 = vsel %vm254, %v305, %v309
    %v312 = vshrl.u32 %v222, 16
    %v314 = vrot.slane %v312, 6
    %v315 = vshll.u32 %v222, 16
    %v317 = vrot.slane %v315, 7
    %v318 = vor.u32 %v314, %v317
    %v319 = vrot.slane %v318, 2
    %v321 = vshll.u32 %v223, 16
    %v323 = vrot.slane %v321, 7
    %v324 = vsel %vm254, %v319, %v323
    %v326 = vshrl.u32 %v230, 16
    %v328 = vrot.slane %v326, 6
    %v329 = vshll.u32 %v230, 16
    %v331 = vrot.slane %v329, 7
    %v332 = vor.u32 %v328, %v331
    %v333 = vrot.slane %v332, 2
    %v335 = vshll.u32 %v231, 16
    %v337 = vrot.slane %v335, 7
    %v338 = vsel %vm254, %v333, %v337
    %v340 = vshrl.u32 %v238, 16
    %v342 = vrot.slane %v340, 6
    %v343 = vshll.u32 %v238, 16
    %v345 = vrot.slane %v343, 7
    %v346 = vor.u32 %v342, %v345
    %v347 = vrot.slane %v346, 2
    %v349 = vshll.u32 %v239, 16
    %v351 = vrot.slane %v349, 7
    %v352 = vsel %vm254, %v347, %v351
    %v354 = vshrl.u32 %v246, 16
    %v356 = vrot.slane %v354, 6
    %v357 = vshll.u32 %v246, 16
    %v359 = vrot.slane %v357, 7
    %v360 = vor.u32 %v356, %v359
    %v361 = vrot.slane %v360, 2
    %v363 = vshll.u32 %v247, 16
    %v365 = vrot.slane %v363, 7
    %v366 = vsel %vm254, %v361, %v365
    %s367 = scalar_lea.vmem [#allocation7], 64
    %v368 = vld [vmem:[%s367] sm:$0xf]
    %v369 = vld [vmem:[%s367 + $0x4] sm:$0xf]
    %v370 = vld [vmem:[%s367 + $0x8] sm:$0xf]
    %v371 = vld [vmem:[%s367 + $0xc] sm:$0xf]
    %v372 = vld [vmem:[%s367 + $0x10] sm:$0xf]
    %v373 = vld [vmem:[%s367 + $0x14] sm:$0xf]
    %v374 = vld [vmem:[%s367 + $0x18] sm:$0xf]
    %v375 = vld [vmem:[%s367 + $0x1c] sm:$0xf]
    %v376 = vld [vmem:[%s367 + $0x20] sm:$0xf]
    %v377 = vld [vmem:[%s367 + $0x24] sm:$0xf]
    %v378 = vld [vmem:[%s367 + $0x28] sm:$0xf]
    %v379 = vld [vmem:[%s367 + $0x2c] sm:$0xf]
    %v380 = vld [vmem:[%s367 + $0x30] sm:$0xf]
    %v381 = vld [vmem:[%s367 + $0x34] sm:$0xf]
    %v382 = vld [vmem:[%s367 + $0x38] sm:$0xf]
    %v383 = vld [vmem:[%s367 + $0x3c] sm:$0xf]
    %v384 = vcombine.low %v268, %v282
    %v385 = vcombine.low %v296, %v310
    %v387 = vunpack.c.l.s4 1983009808
    %v388 = vunpack.c.0.s8 %v387
    %v389 = vlaneseq
    %v390 = vshrl.u32 %v389, 7
    %v391 = vsub.s32 %v388, %v390
    %v392 = vrot.slane %v384, %v391
    %v394 = vunpack.c.l.s4 1983009808
    %v395 = vunpack.c.0.s8 %v394
    %v396 = vlaneseq
    %v397 = vshrl.u32 %v396, 7
    %v398 = vsub.s32 %v395, %v397
    %v399 = vrot.slane %v385, %v398
    %v400 = vcombine.low %v392, %v399
    %v401 = vcombine.low %v324, %v338
    %v402 = vcombine.low %v352, %v366
    %v404 = vunpack.c.l.s4 1983009808
    %v405 = vunpack.c.0.s8 %v404
    %v406 = vlaneseq
    %v407 = vshrl.u32 %v406, 7
    %v408 = vsub.s32 %v405, %v407
    %v409 = vrot.slane %v401, %v408
    %v411 = vunpack.c.l.s4 1983009808
    %v412 = vunpack.c.0.s8 %v411
    %v413 = vlaneseq
    %v414 = vshrl.u32 %v413, 7
    %v415 = vsub.s32 %v412, %v414
    %v416 = vrot.slane %v402, %v415
    %v417 = vcombine.low %v409, %v416
    %v436 = vunpack.c.l.b16 %v368
    %v437 = vunpack.c.l.b16 %v369
    %v438 = vunpack.c.l.b16 %v370
    %v439 = vunpack.c.l.b16 %v371
    %v440 = vunpack.c.l.b16 %v372
    %v441 = vunpack.c.l.b16 %v373
    %v442 = vunpack.c.l.b16 %v374
    %v443 = vunpack.c.l.b16 %v375
    %v444 = vunpack.c.l.b16 %v376
    %v445 = vunpack.c.l.b16 %v377
    %v446 = vunpack.c.l.b16 %v378
    %v447 = vunpack.c.l.b16 %v379
    %v448 = vunpack.c.l.b16 %v380
    %v449 = vunpack.c.l.b16 %v381
    %v450 = vunpack.c.l.b16 %v382
    %v451 = vunpack.c.l.b16 %v383
    %v452 = vpack.c.b16 %v437, %v436
    %v453 = vpack.c.b16 %v439, %v438
    %v454 = vpack.c.b16 %v441, %v440
    %v455 = vpack.c.b16 %v443, %v442
    %v456 = vpack.c.b16 %v445, %v444
    %v457 = vpack.c.b16 %v447, %v446
    %v458 = vpack.c.b16 %v449, %v448
    %v459 = vpack.c.b16 %v451, %v450
    %468 = vmatprep.subr.bf16.mxu0 0
    %469 = vmatpush1.bf16.msra.mxu0 %v452
    %470 = vmatprep.subr.bf16.mxu0 0
    %471 = vmatpush1.bf16.msra.mxu0 %v453
    %472 = vmatprep.subr.bf16.mxu0 0
    %473 = vmatpush1.bf16.msra.mxu0 %v454
    %474 = vmatprep.subr.bf16.mxu0 0
    %475 = vmatpush1.bf16.msra.mxu0 %v455
    %476 = vmatprep.subr.bf16.mxu0 0
    %477 = vmatpush1.bf16.msra.mxu0 %v456
    %478 = vmatprep.subr.bf16.mxu0 0
    %479 = vmatpush1.bf16.msra.mxu0 %v457
    %480 = vmatprep.subr.bf16.mxu0 0
    %481 = vmatpush1.bf16.msra.mxu0 %v458
    %482 = vmatprep.subr.bf16.mxu0 0
    %483 = vmatpush1.bf16.msra.mxu0 %v459
    %484 = vmatprep.subr.bf16.mxu0 0
    %485 = vmatpush1.bf16.msra.mxu0 0
    %486 = vmatprep.subr.bf16.mxu0 0
    %487 = vmatpush1.bf16.msra.mxu0 0
    %488 = vmatprep.subr.bf16.mxu0 0
    %489 = vmatpush1.bf16.msra.mxu0 0
    %490 = vmatprep.subr.bf16.mxu0 0
    %491 = vmatpush1.bf16.msra.mxu0 0
    %492 = vmatprep.subr.bf16.mxu0 0
    %493 = vmatpush1.bf16.msra.mxu0 0
    %494 = vmatprep.subr.bf16.mxu0 0
    %495 = vmatpush1.bf16.msra.mxu0 0
    %496 = vmatprep.subr.bf16.mxu0 0
    %497 = vmatpush1.bf16.msra.mxu0 0
    %498 = vmatprep.subr.bf16.mxu0 0
    %499 = vmatpush1.bf16.msra.mxu0 0
    %500 = vmatprep.mubr.bf16.mxu0 0
    %501 = vmatmul.mubr.bf16.gmra.mrb[0].mxu0 %v400
    %v502 = vpop.f32.mrb[0].mxu0
    %v503 = vadd.f32 0.0, %v502
    %v504 = vpop.f32.mrb[0].mxu0
    %v505 = vpop.f32.mrb[0].mxu0
    %v506 = vadd.f32 0.0, %v505
    %v507 = vpop.f32.mrb[0].mxu0
    %508 = vmatprep.mubr.bf16.mxu0 0
    %509 = vmatmul.mubr.bf16.gmra.mrb[0].mxu0 %v417
    %v510 = vpop.f32.mrb[0].mxu0
    %v511 = vadd.f32 0.0, %v510
    %v512 = vpop.f32.mrb[0].mxu0
    %v513 = vpop.f32.mrb[0].mxu0
    %v514 = vadd.f32 0.0, %v513
    %v515 = vpop.f32.mrb[0].mxu0
    %516 = vdwg.mxu0
    %v517 = vcombine.low %v148, %v149
    %v518 = vcombine.low %v150, %v151
    %v520 = vunpack.c.l.s4 1983009808
    %v521 = vunpack.c.0.s8 %v520
    %v522 = vlaneseq
    %v523 = vshrl.u32 %v522, 7
    %v524 = vsub.s32 %v521, %v523
    %v525 = vrot.slane %v517, %v524
    %v527 = vunpack.c.l.s4 1983009808
    %v528 = vunpack.c.0.s8 %v527
    %v529 = vlaneseq
    %v530 = vshrl.u32 %v529, 7
    %v531 = vsub.s32 %v528, %v530
    %v532 = vrot.slane %v518, %v531
    %v533 = vcombine.low %v525, %v532
    %v534 = vcombine.low %v154, %v155
    %v535 = vcombine.low %v156, %v157
    %v537 = vunpack.c.l.s4 1983009808
    %v538 = vunpack.c.0.s8 %v537
    %v539 = vlaneseq
    %v540 = vshrl.u32 %v539, 7
    %v541 = vsub.s32 %v538, %v540
    %v542 = vrot.slane %v534, %v541
    %v544 = vunpack.c.l.s4 1983009808
    %v545 = vunpack.c.0.s8 %v544
    %v546 = vlaneseq
    %v547 = vshrl.u32 %v546, 7
    %v548 = vsub.s32 %v545, %v547
    %v549 = vrot.slane %v535, %v548
    %v550 = vcombine.low %v542, %v549
    %v569 = vunpack.c.l.b16 %v160
    %v570 = vunpack.c.l.b16 %v161
    %v571 = vunpack.c.l.b16 %v162
    %v572 = vunpack.c.l.b16 %v163
    %v573 = vunpack.c.l.b16 %v164
    %v574 = vunpack.c.l.b16 %v165
    %v575 = vunpack.c.l.b16 %v166
    %v576 = vunpack.c.l.b16 %v167
    %v577 = vunpack.c.l.b16 %v168
    %v578 = vunpack.c.l.b16 %v169
    %v579 = vunpack.c.l.b16 %v170
    %v580 = vunpack.c.l.b16 %v171
    %v581 = vunpack.c.l.b16 %v172
    %v582 = vunpack.c.l.b16 %v173
    %v583 = vunpack.c.l.b16 %v174
    %v584 = vunpack.c.l.b16 %v175
    %v585 = vpack.c.b16 %v570, %v569
    %v586 = vpack.c.b16 %v572, %v571
    %v587 = vpack.c.b16 %v574, %v573
    %v588 = vpack.c.b16 %v576, %v575
    %v589 = vpack.c.b16 %v578, %v577
    %v590 = vpack.c.b16 %v580, %v579
    %v591 = vpack.c.b16 %v582, %v581
    %v592 = vpack.c.b16 %v584, %v583
    %601 = vmatprep.subr.bf16.mxu0 0
    %602 = vmatpush1.bf16.msra.mxu0 %v585
    %603 = vmatprep.subr.bf16.mxu0 0
    %604 = vmatpush1.bf16.msra.mxu0 %v586
    %605 = vmatprep.subr.bf16.mxu0 0
    %606 = vmatpush1.bf16.msra.mxu0 %v587
    %607 = vmatprep.subr.bf16.mxu0 0
    %608 = vmatpush1.bf16.msra.mxu0 %v588
    %609 = vmatprep.subr.bf16.mxu0 0
    %610 = vmatpush1.bf16.msra.mxu0 %v589
    %611 = vmatprep.subr.bf16.mxu0 0
    %612 = vmatpush1.bf16.msra.mxu0 %v590
    %613 = vmatprep.subr.bf16.mxu0 0
    %614 = vmatpush1.bf16.msra.mxu0 %v591
    %615 = vmatprep.subr.bf16.mxu0 0
    %616 = vmatpush1.bf16.msra.mxu0 %v592
    %617 = vmatprep.subr.bf16.mxu0 0
    %618 = vmatpush1.bf16.msra.mxu0 0
    %619 = vmatprep.subr.bf16.mxu0 0
    %620 = vmatpush1.bf16.msra.mxu0 0
    %621 = vmatprep.subr.bf16.mxu0 0
    %622 = vmatpush1.bf16.msra.mxu0 0
    %623 = vmatprep.subr.bf16.mxu0 0
    %624 = vmatpush1.bf16.msra.mxu0 0
    %625 = vmatprep.subr.bf16.mxu0 0
    %626 = vmatpush1.bf16.msra.mxu0 0
    %627 = vmatprep.subr.bf16.mxu0 0
    %628 = vmatpush1.bf16.msra.mxu0 0
    %629 = vmatprep.subr.bf16.mxu0 0
    %630 = vmatpush1.bf16.msra.mxu0 0
    %631 = vmatprep.subr.bf16.mxu0 0
    %632 = vmatpush1.bf16.msra.mxu0 0
    %633 = vmatprep.mubr.bf16.mxu0 0
    %634 = vmatmul.mubr.bf16.gmra.mrb[0].mxu0 %v533
    %v635 = vpop.f32.mrb[0].mxu0
    %v636 = vadd.f32 %v503, %v635
    %v637 = vpop.f32.mrb[0].mxu0
    %v638 = vpop.f32.mrb[0].mxu0
    %v639 = vadd.f32 %v506, %v638
    %v640 = vpop.f32.mrb[0].mxu0
    %641 = vmatprep.mubr.bf16.mxu0 0
    %642 = vmatmul.mubr.bf16.gmra.mrb[0].mxu0 %v550
    %v643 = vpop.f32.mrb[0].mxu0
    %v644 = vadd.f32 %v511, %v643
    %v645 = vpop.f32.mrb[0].mxu0
    %v646 = vpop.f32.mrb[0].mxu0
    %v647 = vadd.f32 %v514, %v646
    %v648 = vpop.f32.mrb[0].mxu0
    %649 = vdwg.mxu0
    %vm650 = vcmask 1040384
    %vm651 = vcmask 1042434
    %vm652 = vmor %vm650, %vm651
    %vm653 = vcmask 1044484
    %vm654 = vmor %vm652, %vm653
    %vm655 = vcmask 1046534
    %vm656 = vmor %vm654, %vm655
    %v657 = vrot.slane %v190, 7
    %v658 = vrot.slane %v657, 2
    %v659 = vrot.slane %v191, 7
    %v660 = vsel %vm656, %v658, %v659
    %v661 = vrot.slane %v198, 7
    %v662 = vrot.slane %v661, 2
    %v663 = vrot.slane %v199, 7
    %v664 = vsel %vm656, %v662, %v663
    %v665 = vrot.slane %v206, 7
    %v666 = vrot.slane %v665, 2
    %v667 = vrot.slane %v207, 7
    %v668 = vsel %vm656, %v666, %v667
    %v669 = vrot.slane %v214, 7
    %v670 = vrot.slane %v669, 2
    %v671 = vrot.slane %v215, 7
    %v672 = vsel %vm656, %v670, %v671
    %v673 = vrot.slane %v222, 7
    %v674 = vrot.slane %v673, 2
    %v675 = vrot.slane %v223, 7
    %v676 = vsel %vm656, %v674, %v675
    %v677 = vrot.slane %v230, 7
    %v678 = vrot.slane %v677, 2
    %v679 = vrot.slane %v231, 7
    %v680 = vsel %vm656, %v678, %v679
    %v681 = vrot.slane %v238, 7
    %v682 = vrot.slane %v681, 2
    %v683 = vrot.slane %v239, 7
    %v684 = vsel %vm656, %v682, %v683
    %v685 = vrot.slane %v246, 7
    %v686 = vrot.slane %v685, 2
    %v687 = vrot.slane %v247, 7
    %v688 = vsel %vm656, %v686, %v687
    %s689 = scalar_lea.vmem [#allocation7], 128
    %v690 = vld [vmem:[%s689] sm:$0xf]
    %v691 = vld [vmem:[%s689 + $0x4] sm:$0xf]
    %v692 = vld [vmem:[%s689 + $0x8] sm:$0xf]
    %v693 = vld [vmem:[%s689 + $0xc] sm:$0xf]
    %v694 = vld [vmem:[%s689 + $0x10] sm:$0xf]
    %v695 = vld [vmem:[%s689 + $0x14] sm:$0xf]
    %v696 = vld [vmem:[%s689 + $0x18] sm:$0xf]
    %v697 = vld [vmem:[%s689 + $0x1c] sm:$0xf]
    %v698 = vld [vmem:[%s689 + $0x20] sm:$0xf]
    %v699 = vld [vmem:[%s689 + $0x24] sm:$0xf]
    %v700 = vld [vmem:[%s689 + $0x28] sm:$0xf]
    %v701 = vld [vmem:[%s689 + $0x2c] sm:$0xf]
    %v702 = vld [vmem:[%s689 + $0x30] sm:$0xf]
    %v703 = vld [vmem:[%s689 + $0x34] sm:$0xf]
    %v704 = vld [vmem:[%s689 + $0x38] sm:$0xf]
    %v705 = vld [vmem:[%s689 + $0x3c] sm:$0xf]
    %v706 = vcombine.low %v660, %v664
    %v707 = vcombine.low %v668, %v672
    %v709 = vunpack.c.l.s4 1983009808
    %v710 = vunpack.c.0.s8 %v709
    %v711 = vlaneseq
    %v712 = vshrl.u32 %v711, 7
    %v713 = vsub.s32 %v710, %v712
    %v714 = vrot.slane %v706, %v713
    %v716 = vunpack.c.l.s4 1983009808
    %v717 = vunpack.c.0.s8 %v716
    %v718 = vlaneseq
    %v719 = vshrl.u32 %v718, 7
    %v720 = vsub.s32 %v717, %v719
    %v721 = vrot.slane %v707, %v720
    %v722 = vcombine.low %v714, %v721
    %v723 = vcombine.low %v676, %v680
    %v724 = vcombine.low %v684, %v688
    %v726 = vunpack.c.l.s4 1983009808
    %v727 = vunpack.c.0.s8 %v726
    %v728 = vlaneseq
    %v729 = vshrl.u32 %v728, 7
    %v730 = vsub.s32 %v727, %v729
    %v731 = vrot.slane %v723, %v730
    %v733 = vunpack.c.l.s4 1983009808
    %v734 = vunpack.c.0.s8 %v733
    %v735 = vlaneseq
    %v736 = vshrl.u32 %v735, 7
    %v737 = vsub.s32 %v734, %v736
    %v738 = vrot.slane %v724, %v737
    %v739 = vcombine.low %v731, %v738
    %v758 = vunpack.c.l.b16 %v690
    %v759 = vunpack.c.l.b16 %v691
    %v760 = vunpack.c.l.b16 %v692
    %v761 = vunpack.c.l.b16 %v693
    %v762 = vunpack.c.l.b16 %v694
    %v763 = vunpack.c.l.b16 %v695
    %v764 = vunpack.c.l.b16 %v696
    %v765 = vunpack.c.l.b16 %v697
    %v766 = vunpack.c.l.b16 %v698
    %v767 = vunpack.c.l.b16 %v699
    %v768 = vunpack.c.l.b16 %v700
    %v769 = vunpack.c.l.b16 %v701
    %v770 = vunpack.c.l.b16 %v702
    %v771 = vunpack.c.l.b16 %v703
    %v772 = vunpack.c.l.b16 %v704
    %v773 = vunpack.c.l.b16 %v705
    %v774 = vpack.c.b16 %v759, %v758
    %v775 = vpack.c.b16 %v761, %v760
    %v776 = vpack.c.b16 %v763, %v762
    %v777 = vpack.c.b16 %v765, %v764
    %v778 = vpack.c.b16 %v767, %v766
    %v779 = vpack.c.b16 %v769, %v768
    %v780 = vpack.c.b16 %v771, %v770
    %v781 = vpack.c.b16 %v773, %v772
    %790 = vmatprep.subr.bf16.mxu0 0
    %791 = vmatpush1.bf16.msra.mxu0 %v774
    %792 = vmatprep.subr.bf16.mxu0 0
    %793 = vmatpush1.bf16.msra.mxu0 %v775
    %794 = vmatprep.subr.bf16.mxu0 0
    %795 = vmatpush1.bf16.msra.mxu0 %v776
    %796 = vmatprep.subr.bf16.mxu0 0
    %797 = vmatpush1.bf16.msra.mxu0 %v777
    %798 = vmatprep.subr.bf16.mxu0 0
    %799 = vmatpush1.bf16.msra.mxu0 %v778
    %800 = vmatprep.subr.bf16.mxu0 0
    %801 = vmatpush1.bf16.msra.mxu0 %v779
    %802 = vmatprep.subr.bf16.mxu0 0
    %803 = vmatpush1.bf16.msra.mxu0 %v780
    %804 = vmatprep.subr.bf16.mxu0 0
    %805 = vmatpush1.bf16.msra.mxu0 %v781
    %806 = vmatprep.subr.bf16.mxu0 0
    %807 = vmatpush1.bf16.msra.mxu0 0
    %808 = vmatprep.subr.bf16.mxu0 0
    %809 = vmatpush1.bf16.msra.mxu0 0
    %810 = vmatprep.subr.bf16.mxu0 0
    %811 = vmatpush1.bf16.msra.mxu0 0
    %812 = vmatprep.subr.bf16.mxu0 0
    %813 = vmatpush1.bf16.msra.mxu0 0
    %814 = vmatprep.subr.bf16.mxu0 0
    %815 = vmatpush1.bf16.msra.mxu0 0
    %816 = vmatprep.subr.bf16.mxu0 0
    %817 = vmatpush1.bf16.msra.mxu0 0
    %818 = vmatprep.subr.bf16.mxu0 0
    %819 = vmatpush1.bf16.msra.mxu0 0
    %820 = vmatprep.subr.bf16.mxu0 0
    %821 = vmatpush1.bf16.msra.mxu0 0
    %822 = vmatprep.mubr.bf16.mxu0 0
    %823 = vmatmul.mubr.bf16.gmra.mrb[0].mxu0 %v722
    %v824 = vpop.f32.mrb[0].mxu0
    %v825 = vadd.f32 0.0, %v824
    %v826 = vpop.f32.mrb[0].mxu0
    %v827 = vpop.f32.mrb[0].mxu0
    %v828 = vadd.f32 0.0, %v827
    %v829 = vpop.f32.mrb[0].mxu0
    %830 = vmatprep.mubr.bf16.mxu0 0
    %831 = vmatmul.mubr.bf16.gmra.mrb[0].mxu0 %v739
    %v832 = vpop.f32.mrb[0].mxu0
    %v833 = vadd.f32 0.0, %v832
    %v834 = vpop.f32.mrb[0].mxu0
    %v835 = vpop.f32.mrb[0].mxu0
    %v836 = vadd.f32 0.0, %v835
    %v837 = vpop.f32.mrb[0].mxu0
    %838 = vdwg.mxu0
    %v839 = vadd.f32 %v636, %v825
    %v840 = vadd.f32 %v639, %v828
    %v841 = vadd.f32 %v644, %v833
    %v842 = vadd.f32 %v647, %v836
    %s843 = scalar_lea.vmem [#allocation7], 192
    %v844 = vld [vmem:[%s843] sm:$0xf]
    %v845 = vld [vmem:[%s843 + $0x4] sm:$0xf]
    %v846 = vld [vmem:[%s843 + $0x8] sm:$0xf]
    %v847 = vld [vmem:[%s843 + $0xc] sm:$0xf]
    %v848 = vld [vmem:[%s843 + $0x10] sm:$0xf]
    %v849 = vld [vmem:[%s843 + $0x14] sm:$0xf]
    %v850 = vld [vmem:[%s843 + $0x18] sm:$0xf]
    %v851 = vld [vmem:[%s843 + $0x1c] sm:$0xf]
    %v852 = vld [vmem:[%s843 + $0x20] sm:$0xf]
    %v853 = vld [vmem:[%s843 + $0x24] sm:$0xf]
    %v854 = vld [vmem:[%s843 + $0x28] sm:$0xf]
    %v855 = vld [vmem:[%s843 + $0x2c] sm:$0xf]
    %v856 = vld [vmem:[%s843 + $0x30] sm:$0xf]
    %v857 = vld [vmem:[%s843 + $0x34] sm:$0xf]
    %v858 = vld [vmem:[%s843 + $0x38] sm:$0xf]
    %v859 = vld [vmem:[%s843 + $0x3c] sm:$0xf]
    %v862 = vcombine.low %v149, %v150
    %v863 = vcombine.low %v151, %v152
    %v865 = vunpack.c.l.s4 1983009808
    %v866 = vunpack.c.0.s8 %v865
    %v867 = vlaneseq
    %v868 = vshrl.u32 %v867, 7
    %v869 = vsub.s32 %v866, %v868
    %v870 = vrot.slane %v862, %v869
    %v872 = vunpack.c.l.s4 1983009808
    %v873 = vunpack.c.0.s8 %v872
    %v874 = vlaneseq
    %v875 = vshrl.u32 %v874, 7
    %v876 = vsub.s32 %v873, %v875
    %v877 = vrot.slane %v863, %v876
    %v878 = vcombine.low %v870, %v877
    %v879 = vcombine.low %v155, %v156
    %v880 = vcombine.low %v157, %v158
    %v882 = vunpack.c.l.s4 1983009808
    %v883 = vunpack.c.0.s8 %v882
    %v884 = vlaneseq
    %v885 = vshrl.u32 %v884, 7
    %v886 = vsub.s32 %v883, %v885
    %v887 = vrot.slane %v879, %v886
    %v889 = vunpack.c.l.s4 1983009808
    %v890 = vunpack.c.0.s8 %v889
    %v891 = vlaneseq
    %v892 = vshrl.u32 %v891, 7
    %v893 = vsub.s32 %v890, %v892
    %v894 = vrot.slane %v880, %v893
    %v895 = vcombine.low %v887, %v894
    %v914 = vunpack.c.l.b16 %v844
    %v915 = vunpack.c.l.b16 %v845
    %v916 = vunpack.c.l.b16 %v846
    %v917 = vunpack.c.l.b16 %v847
    %v918 = vunpack.c.l.b16 %v848
    %v919 = vunpack.c.l.b16 %v849
    %v920 = vunpack.c.l.b16 %v850
    %v921 = vunpack.c.l.b16 %v851
    %v922 = vunpack.c.l.b16 %v852
    %v923 = vunpack.c.l.b16 %v853
    %v924 = vunpack.c.l.b16 %v854
    %v925 = vunpack.c.l.b16 %v855
    %v926 = vunpack.c.l.b16 %v856
    %v927 = vunpack.c.l.b16 %v857
    %v928 = vunpack.c.l.b16 %v858
    %v929 = vunpack.c.l.b16 %v859
    %v930 = vpack.c.b16 %v915, %v914
    %v931 = vpack.c.b16 %v917, %v916
    %v932 = vpack.c.b16 %v919, %v918
    %v933 = vpack.c.b16 %v921, %v920
    %v934 = vpack.c.b16 %v923, %v922
    %v935 = vpack.c.b16 %v925, %v924
    %v936 = vpack.c.b16 %v927, %v926
    %v937 = vpack.c.b16 %v929, %v928
    %946 = vmatprep.subr.bf16.mxu0 0
    %947 = vmatpush1.bf16.msra.mxu0 %v930
    %948 = vmatprep.subr.bf16.mxu0 0
    %949 = vmatpush1.bf16.msra.mxu0 %v931
    %950 = vmatprep.subr.bf16.mxu0 0
    %951 = vmatpush1.bf16.msra.mxu0 %v932
    %952 = vmatprep.subr.bf16.mxu0 0
    %953 = vmatpush1.bf16.msra.mxu0 %v933
    %954 = vmatprep.subr.bf16.mxu0 0
    %955 = vmatpush1.bf16.msra.mxu0 %v934
    %956 = vmatprep.subr.bf16.mxu0 0
    %957 = vmatpush1.bf16.msra.mxu0 %v935
    %958 = vmatprep.subr.bf16.mxu0 0
    %959 = vmatpush1.bf16.msra.mxu0 %v936
    %960 = vmatprep.subr.bf16.mxu0 0
    %961 = vmatpush1.bf16.msra.mxu0 %v937
    %962 = vmatprep.subr.bf16.mxu0 0
    %963 = vmatpush1.bf16.msra.mxu0 0
    %964 = vmatprep.subr.bf16.mxu0 0
    %965 = vmatpush1.bf16.msra.mxu0 0
    %966 = vmatprep.subr.bf16.mxu0 0
    %967 = vmatpush1.bf16.msra.mxu0 0
    %968 = vmatprep.subr.bf16.mxu0 0
    %969 = vmatpush1.bf16.msra.mxu0 0
    %970 = vmatprep.subr.bf16.mxu0 0
    %971 = vmatpush1.bf16.msra.mxu0 0
    %972 = vmatprep.subr.bf16.mxu0 0
    %973 = vmatpush1.bf16.msra.mxu0 0
    %974 = vmatprep.subr.bf16.mxu0 0
    %975 = vmatpush1.bf16.msra.mxu0 0
    %976 = vmatprep.subr.bf16.mxu0 0
    %977 = vmatpush1.bf16.msra.mxu0 0
    %978 = vmatprep.mubr.bf16.mxu0 0
    %979 = vmatmul.mubr.bf16.gmra.mrb[0].mxu0 %v878
    %v980 = vpop.f32.mrb[0].mxu0
    %v981 = vadd.f32 0.0, %v980
    %v982 = vpop.f32.mrb[0].mxu0
    %v983 = vpop.f32.mrb[0].mxu0
    %v984 = vadd.f32 0.0, %v983
    %v985 = vpop.f32.mrb[0].mxu0
    %986 = vmatprep.mubr.bf16.mxu0 0
    %987 = vmatmul.mubr.bf16.gmra.mrb[0].mxu0 %v895
    %v988 = vpop.f32.mrb[0].mxu0
    %v989 = vadd.f32 0.0, %v988
    %v990 = vpop.f32.mrb[0].mxu0
    %v991 = vpop.f32.mrb[0].mxu0
    %v992 = vadd.f32 0.0, %v991
    %v993 = vpop.f32.mrb[0].mxu0
    %994 = vdwg.mxu0
    %v995 = vadd.f32 %v839, %v981
    %v996 = vadd.f32 %v840, %v984
    %v997 = vadd.f32 %v841, %v989
    %v998 = vadd.f32 %v842, %v992
    %v1000 = vunpack.c.l.s4 1983009808
    %v1001 = vunpack.c.0.s8 %v1000
    %v1002 = vlaneseq
    %v1003 = vshrl.u32 %v1002, 7
    %v1004 = vsub.s32 %v1001, %v1003
    %v1005 = vrot.slane %v152, %v1004
    %v1006 = vcombine.high %v1005, %v1005
    %v1008 = vunpack.c.l.s4 1983009808
    %v1009 = vunpack.c.0.s8 %v1008
    %v1010 = vlaneseq
    %v1011 = vshrl.u32 %v1010, 7
    %v1012 = vsub.s32 %v1009, %v1011
    %v1013 = vrot.slane %v158, %v1012
    %v1014 = vcombine.high %v1013, %v1013
    %v1016 = vshrl.u32 %v1005, 16
    %v1018 = vrot.slane %v1016, 6
    %v1019 = vshll.u32 %v1005, 16
    %v1021 = vrot.slane %v1019, 7
    %v1022 = vor.u32 %v1018, %v1021
    %v1023 = vrot.slane %v1022, 2
    %v1025 = vshll.u32 %v1006, 16
    %v1027 = vrot.slane %v1025, 7
    %v1028 = vsel %vm254, %v1023, %v1027
    %v1030 = vshrl.u32 %v1013, 16
    %v1032 = vrot.slane %v1030, 6
    %v1033 = vshll.u32 %v1013, 16
    %v1035 = vrot.slane %v1033, 7
    %v1036 = vor.u32 %v1032, %v1035
    %v1037 = vrot.slane %v1036, 2
    %v1039 = vshll.u32 %v1014, 16
    %v1041 = vrot.slane %v1039, 7
    %v1042 = vsel %vm254, %v1037, %v1041
    %s1043 = scalar_lea.vmem [#allocation7], 256
    %v1044 = vld [vmem:[%s1043] sm:$0xf]
    %v1045 = vld [vmem:[%s1043 + $0x4] sm:$0xf]
    %v1046 = vld [vmem:[%s1043 + $0x8] sm:$0xf]
    %v1047 = vld [vmem:[%s1043 + $0xc] sm:$0xf]
    %v1048 = vld [vmem:[%s1043 + $0x10] sm:$0xf]
    %v1049 = vld [vmem:[%s1043 + $0x14] sm:$0xf]
    %v1050 = vld [vmem:[%s1043 + $0x18] sm:$0xf]
    %v1051 = vld [vmem:[%s1043 + $0x1c] sm:$0xf]
    %v1052 = vld [vmem:[%s1043 + $0x20] sm:$0xf]
    %v1053 = vld [vmem:[%s1043 + $0x24] sm:$0xf]
    %v1054 = vld [vmem:[%s1043 + $0x28] sm:$0xf]
    %v1055 = vld [vmem:[%s1043 + $0x2c] sm:$0xf]
    %v1056 = vld [vmem:[%s1043 + $0x30] sm:$0xf]
    %v1057 = vld [vmem:[%s1043 + $0x34] sm:$0xf]
    %v1058 = vld [vmem:[%s1043 + $0x38] sm:$0xf]
    %v1059 = vld [vmem:[%s1043 + $0x3c] sm:$0xf]
    %v1060 = vcombine.low %v282, %v296
    %v1061 = vcombine.low %v310, %v1028
    %v1063 = vunpack.c.l.s4 1983009808
    %v1064 = vunpack.c.0.s8 %v1063
    %v1065 = vlaneseq
    %v1066 = vshrl.u32 %v1065, 7
    %v1067 = vsub.s32 %v1064, %v1066
    %v1068 = vrot.slane %v1060, %v1067
    %v1070 = vunpack.c.l.s4 1983009808
    %v1071 = vunpack.c.0.s8 %v1070
    %v1072 = vlaneseq
    %v1073 = vshrl.u32 %v1072, 7
    %v1074 = vsub.s32 %v1071, %v1073
    %v1075 = vrot.slane %v1061, %v1074
    %v1076 = vcombine.low %v1068, %v1075
    %v1077 = vcombine.low %v338, %v352
    %v1078 = vcombine.low %v366, %v1042
    %v1080 = vunpack.c.l.s4 1983009808
    %v1081 = vunpack.c.0.s8 %v1080
    %v1082 = vlaneseq
    %v1083 = vshrl.u32 %v1082, 7
    %v1084 = vsub.s32 %v1081, %v1083
    %v1085 = vrot.slane %v1077, %v1084
    %v1087 = vunpack.c.l.s4 1983009808
    %v1088 = vunpack.c.0.s8 %v1087
    %v1089 = vlaneseq
    %v1090 = vshrl.u32 %v1089, 7
    %v1091 = vsub.s32 %v1088, %v1090
    %v1092 = vrot.slane %v1078, %v1091
    %v1093 = vcombine.low %v1085, %v1092
    %v1112 = vunpack.c.l.b16 %v1044
    %v1113 = vunpack.c.l.b16 %v1045
    %v1114 = vunpack.c.l.b16 %v1046
    %v1115 = vunpack.c.l.b16 %v1047
    %v1116 = vunpack.c.l.b16 %v1048
    %v1117 = vunpack.c.l.b16 %v1049
    %v1118 = vunpack.c.l.b16 %v1050
    %v1119 = vunpack.c.l.b16 %v1051
    %v1120 = vunpack.c.l.b16 %v1052
    %v1121 = vunpack.c.l.b16 %v1053
    %v1122 = vunpack.c.l.b16 %v1054
    %v1123 = vunpack.c.l.b16 %v1055
    %v1124 = vunpack.c.l.b16 %v1056
    %v1125 = vunpack.c.l.b16 %v1057
    %v1126 = vunpack.c.l.b16 %v1058
    %v1127 = vunpack.c.l.b16 %v1059
    %v1128 = vpack.c.b16 %v1113, %v1112
    %v1129 = vpack.c.b16 %v1115, %v1114
    %v1130 = vpack.c.b16 %v1117, %v1116
    %v1131 = vpack.c.b16 %v1119, %v1118
    %v1132 = vpack.c.b16 %v1121, %v1120
    %v1133 = vpack.c.b16 %v1123, %v1122
    %v1134 = vpack.c.b16 %v1125, %v1124
    %v1135 = vpack.c.b16 %v1127, %v1126
    %1144 = vmatprep.subr.bf16.mxu0 0
    %1145 = vmatpush1.bf16.msra.mxu0 %v1128
    %1146 = vmatprep.subr.bf16.mxu0 0
    %1147 = vmatpush1.bf16.msra.mxu0 %v1129
    %1148 = vmatprep.subr.bf16.mxu0 0
    %1149 = vmatpush1.bf16.msra.mxu0 %v1130
    %1150 = vmatprep.subr.bf16.mxu0 0
    %1151 = vmatpush1.bf16.msra.mxu0 %v1131
    %1152 = vmatprep.subr.bf16.mxu0 0
    %1153 = vmatpush1.bf16.msra.mxu0 %v1132
    %1154 = vmatprep.subr.bf16.mxu0 0
    %1155 = vmatpush1.bf16.msra.mxu0 %v1133
    %1156 = vmatprep.subr.bf16.mxu0 0
    %1157 = vmatpush1.bf16.msra.mxu0 %v1134
    %1158 = vmatprep.subr.bf16.mxu0 0
    %1159 = vmatpush1.bf16.msra.mxu0 %v1135
    %1160 = vmatprep.subr.bf16.mxu0 0
    %1161 = vmatpush1.bf16.msra.mxu0 0
    %1162 = vmatprep.subr.bf16.mxu0 0
    %1163 = vmatpush1.bf16.msra.mxu0 0
    %1164 = vmatprep.subr.bf16.mxu0 0
    %1165 = vmatpush1.bf16.msra.mxu0 0
    %1166 = vmatprep.subr.bf16.mxu0 0
    %1167 = vmatpush1.bf16.msra.mxu0 0
    %1168 = vmatprep.subr.bf16.mxu0 0
    %1169 = vmatpush1.bf16.msra.mxu0 0
    %1170 = vmatprep.subr.bf16.mxu0 0
    %1171 = vmatpush1.bf16.msra.mxu0 0
    %1172 = vmatprep.subr.bf16.mxu0 0
    %1173 = vmatpush1.bf16.msra.mxu0 0
    %1174 = vmatprep.subr.bf16.mxu0 0
    %1175 = vmatpush1.bf16.msra.mxu0 0
    %1176 = vmatprep.mubr.bf16.mxu0 0
    %1177 = vmatmul.mubr.bf16.gmra.mrb[0].mxu0 %v1076
    %v1178 = vpop.f32.mrb[0].mxu0
    %v1179 = vadd.f32 0.0, %v1178
    %v1180 = vpop.f32.mrb[0].mxu0
    %v1181 = vpop.f32.mrb[0].mxu0
    %v1182 = vadd.f32 0.0, %v1181
    %v1183 = vpop.f32.mrb[0].mxu0
    %1184 = vmatprep.mubr.bf16.mxu0 0
    %1185 = vmatmul.mubr.bf16.gmra.mrb[0].mxu0 %v1093
    %v1186 = vpop.f32.mrb[0].mxu0
    %v1187 = vadd.f32 0.0, %v1186
    %v1188 = vpop.f32.mrb[0].mxu0
    %v1189 = vpop.f32.mrb[0].mxu0
    %v1190 = vadd.f32 0.0, %v1189
    %v1191 = vpop.f32.mrb[0].mxu0
    %1192 = vdwg.mxu0
    %v1193 = vadd.f32 %v995, %v1179
    %v1194 = vadd.f32 %v996, %v1182
    %v1195 = vadd.f32 %v997, %v1187
    %v1196 = vadd.f32 %v998, %v1190
    %v1197 = vrot.slane %v1005, 7
    %v1198 = vrot.slane %v1197, 2
    %v1199 = vrot.slane %v1006, 7
    %v1200 = vsel %vm656, %v1198, %v1199
    %v1201 = vrot.slane %v1013, 7
    %v1202 = vrot.slane %v1201, 2
    %v1203 = vrot.slane %v1014, 7
    %v1204 = vsel %vm656, %v1202, %v1203
    %s1205 = scalar_lea.vmem [#allocation7], 320
    %v1206 = vld [vmem:[%s1205] sm:$0xf]
    %v1207 = vld [vmem:[%s1205 + $0x4] sm:$0xf]
    %v1208 = vld [vmem:[%s1205 + $0x8] sm:$0xf]
    %v1209 = vld [vmem:[%s1205 + $0xc] sm:$0xf]
    %v1210 = vld [vmem:[%s1205 + $0x10] sm:$0xf]
    %v1211 = vld [vmem:[%s1205 + $0x14] sm:$0xf]
    %v1212 = vld [vmem:[%s1205 + $0x18] sm:$0xf]
    %v1213 = vld [vmem:[%s1205 + $0x1c] sm:$0xf]
    %v1214 = vld [vmem:[%s1205 + $0x20] sm:$0xf]
    %v1215 = vld [vmem:[%s1205 + $0x24] sm:$0xf]
    %v1216 = vld [vmem:[%s1205 + $0x28] sm:$0xf]
    %v1217 = vld [vmem:[%s1205 + $0x2c] sm:$0xf]
    %v1218 = vld [vmem:[%s1205 + $0x30] sm:$0xf]
    %v1219 = vld [vmem:[%s1205 + $0x34] sm:$0xf]
    %v1220 = vld [vmem:[%s1205 + $0x38] sm:$0xf]
    %v1221 = vld [vmem:[%s1205 + $0x3c] sm:$0xf]
    %v1222 = vcombine.low %v664, %v668
    %v1223 = vcombine.low %v672, %v1200
    %v1225 = vunpack.c.l.s4 1983009808
    %v1226 = vunpack.c.0.s8 %v1225
    %v1227 = vlaneseq
    %v1228 = vshrl.u32 %v1227, 7
    %v1229 = vsub.s32 %v1226, %v1228
    %v1230 = vrot.slane %v1222, %v1229
    %v1232 = vunpack.c.l.s4 1983009808
    %v1233 = vunpack.c.0.s8 %v1232
    %v1234 = vlaneseq
    %v1235 = vshrl.u32 %v1234, 7
    %v1236 = vsub.s32 %v1233, %v1235
    %v1237 = vrot.slane %v1223, %v1236
    %v1238 = vcombine.low %v1230, %v1237
    %v1239 = vcombine.low %v680, %v684
    %v1240 = vcombine.low %v688, %v1204
    %v1242 = vunpack.c.l.s4 1983009808
    %v1243 = vunpack.c.0.s8 %v1242
    %v1244 = vlaneseq
    %v1245 = vshrl.u32 %v1244, 7
    %v1246 = vsub.s32 %v1243, %v1245
    %v1247 = vrot.slane %v1239, %v1246
    %v1249 = vunpack.c.l.s4 1983009808
    %v1250 = vunpack.c.0.s8 %v1249
    %v1251 = vlaneseq
    %v1252 = vshrl.u32 %v1251, 7
    %v1253 = vsub.s32 %v1250, %v1252
    %v1254 = vrot.slane %v1240, %v1253
    %v1255 = vcombine.low %v1247, %v1254
    %v1274 = vunpack.c.l.b16 %v1206
    %v1275 = vunpack.c.l.b16 %v1207
    %v1276 = vunpack.c.l.b16 %v1208
    %v1277 = vunpack.c.l.b16 %v1209
    %v1278 = vunpack.c.l.b16 %v1210
    %v1279 = vunpack.c.l.b16 %v1211
    %v1280 = vunpack.c.l.b16 %v1212
    %v1281 = vunpack.c.l.b16 %v1213
    %v1282 = vunpack.c.l.b16 %v1214
    %v1283 = vunpack.c.l.b16 %v1215
    %v1284 = vunpack.c.l.b16 %v1216
    %v1285 = vunpack.c.l.b16 %v1217
    %v1286 = vunpack.c.l.b16 %v1218
    %v1287 = vunpack.c.l.b16 %v1219
    %v1288 = vunpack.c.l.b16 %v1220
    %v1289 = vunpack.c.l.b16 %v1221
    %v1290 = vpack.c.b16 %v1275, %v1274
    %v1291 = vpack.c.b16 %v1277, %v1276
    %v1292 = vpack.c.b16 %v1279, %v1278
    %v1293 = vpack.c.b16 %v1281, %v1280
    %v1294 = vpack.c.b16 %v1283, %v1282
    %v1295 = vpack.c.b16 %v1285, %v1284
    %v1296 = vpack.c.b16 %v1287, %v1286
    %v1297 = vpack.c.b16 %v1289, %v1288
    %1306 = vmatprep.subr.bf16.mxu0 0
    %1307 = vmatpush1.bf16.msra.mxu0 %v1290
    %1308 = vmatprep.subr.bf16.mxu0 0
    %1309 = vmatpush1.bf16.msra.mxu0 %v1291
    %1310 = vmatprep.subr.bf16.mxu0 0
    %1311 = vmatpush1.bf16.msra.mxu0 %v1292
    %1312 = vmatprep.subr.bf16.mxu0 0
    %1313 = vmatpush1.bf16.msra.mxu0 %v1293
    %1314 = vmatprep.subr.bf16.mxu0 0
    %1315 = vmatpush1.bf16.msra.mxu0 %v1294
    %1316 = vmatprep.subr.bf16.mxu0 0
    %1317 = vmatpush1.bf16.msra.mxu0 %v1295
    %1318 = vmatprep.subr.bf16.mxu0 0
    %1319 = vmatpush1.bf16.msra.mxu0 %v1296
    %1320 = vmatprep.subr.bf16.mxu0 0
    %1321 = vmatpush1.bf16.msra.mxu0 %v1297
    %1322 = vmatprep.subr.bf16.mxu0 0
    %1323 = vmatpush1.bf16.msra.mxu0 0
    %1324 = vmatprep.subr.bf16.mxu0 0
    %1325 = vmatpush1.bf16.msra.mxu0 0
    %1326 = vmatprep.subr.bf16.mxu0 0
    %1327 = vmatpush1.bf16.msra.mxu0 0
    %1328 = vmatprep.subr.bf16.mxu0 0
    %1329 = vmatpush1.bf16.msra.mxu0 0
    %1330 = vmatprep.subr.bf16.mxu0 0
    %1331 = vmatpush1.bf16.msra.mxu0 0
    %1332 = vmatprep.subr.bf16.mxu0 0
    %1333 = vmatpush1.bf16.msra.mxu0 0
    %1334 = vmatprep.subr.bf16.mxu0 0
    %1335 = vmatpush1.bf16.msra.mxu0 0
    %1336 = vmatprep.subr.bf16.mxu0 0
    %1337 = vmatpush1.bf16.msra.mxu0 0
    %1338 = vmatprep.mubr.bf16.mxu0 0
    %1339 = vmatmul.mubr.bf16.gmra.mrb[0].mxu0 %v1238
    %v1340 = vpop.f32.mrb[0].mxu0
    %v1341 = vadd.f32 0.0, %v1340
    %v1342 = vpop.f32.mrb[0].mxu0
    %v1343 = vpop.f32.mrb[0].mxu0
    %v1344 = vadd.f32 0.0, %v1343
    %v1345 = vpop.f32.mrb[0].mxu0
    %1346 = vmatprep.mubr.bf16.mxu0 0
    %1347 = vmatmul.mubr.bf16.gmra.mrb[0].mxu0 %v1255
    %v1348 = vpop.f32.mrb[0].mxu0
    %v1349 = vadd.f32 0.0, %v1348
    %v1350 = vpop.f32.mrb[0].mxu0
    %v1351 = vpop.f32.mrb[0].mxu0
    %v1352 = vadd.f32 0.0, %v1351
    %v1353 = vpop.f32.mrb[0].mxu0
    %1354 = vdwg.mxu0
    %v1355 = vadd.f32 %v1193, %v1341
    %v1356 = vadd.f32 %v1194, %v1344
    %v1357 = vadd.f32 %v1195, %v1349
    %v1358 = vadd.f32 %v1196, %v1352
    %s1359 = scalar_lea.vmem [#allocation7], 384
    %v1360 = vld [vmem:[%s1359] sm:$0xf]
    %v1361 = vld [vmem:[%s1359 + $0x4] sm:$0xf]
    %v1362 = vld [vmem:[%s1359 + $0x8] sm:$0xf]
    %v1363 = vld [vmem:[%s1359 + $0xc] sm:$0xf]
    %v1364 = vld [vmem:[%s1359 + $0x10] sm:$0xf]
    %v1365 = vld [vmem:[%s1359 + $0x14] sm:$0xf]
    %v1366 = vld [vmem:[%s1359 + $0x18] sm:$0xf]
    %v1367 = vld [vmem:[%s1359 + $0x1c] sm:$0xf]
    %v1368 = vld [vmem:[%s1359 + $0x20] sm:$0xf]
    %v1369 = vld [vmem:[%s1359 + $0x24] sm:$0xf]
    %v1370 = vld [vmem:[%s1359 + $0x28] sm:$0xf]
    %v1371 = vld [vmem:[%s1359 + $0x2c] sm:$0xf]
    %v1372 = vld [vmem:[%s1359 + $0x30] sm:$0xf]
    %v1373 = vld [vmem:[%s1359 + $0x34] sm:$0xf]
    %v1374 = vld [vmem:[%s1359 + $0x38] sm:$0xf]
    %v1375 = vld [vmem:[%s1359 + $0x3c] sm:$0xf]
    %v1378 = vcombine.low %v152, %v153
    %v1380 = vunpack.c.l.s4 1983009808
    %v1381 = vunpack.c.0.s8 %v1380
    %v1382 = vlaneseq
    %v1383 = vshrl.u32 %v1382, 7
    %v1384 = vsub.s32 %v1381, %v1383
    %v1385 = vrot.slane %v1378, %v1384
    %v1386 = vcombine.low %v532, %v1385
    %v1387 = vcombine.low %v158, %v159
    %v1389 = vunpack.c.l.s4 1983009808
    %v1390 = vunpack.c.0.s8 %v1389
    %v1391 = vlaneseq
    %v1392 = vshrl.u32 %v1391, 7
    %v1393 = vsub.s32 %v1390, %v1392
    %v1394 = vrot.slane %v1387, %v1393
    %v1395 = vcombine.low %v549, %v1394
    %v1414 = vunpack.c.l.b16 %v1360
    %v1415 = vunpack.c.l.b16 %v1361
    %v1416 = vunpack.c.l.b16 %v1362
    %v1417 = vunpack.c.l.b16 %v1363
    %v1418 = vunpack.c.l.b16 %v1364
    %v1419 = vunpack.c.l.b16 %v1365
    %v1420 = vunpack.c.l.b16 %v1366
    %v1421 = vunpack.c.l.b16 %v1367
    %v1422 = vunpack.c.l.b16 %v1368
    %v1423 = vunpack.c.l.b16 %v1369
    %v1424 = vunpack.c.l.b16 %v1370
    %v1425 = vunpack.c.l.b16 %v1371
    %v1426 = vunpack.c.l.b16 %v1372
    %v1427 = vunpack.c.l.b16 %v1373
    %v1428 = vunpack.c.l.b16 %v1374
    %v1429 = vunpack.c.l.b16 %v1375
    %v1430 = vpack.c.b16 %v1415, %v1414
    %v1431 = vpack.c.b16 %v1417, %v1416
    %v1432 = vpack.c.b16 %v1419, %v1418
    %v1433 = vpack.c.b16 %v1421, %v1420
    %v1434 = vpack.c.b16 %v1423, %v1422
    %v1435 = vpack.c.b16 %v1425, %v1424
    %v1436 = vpack.c.b16 %v1427, %v1426
    %v1437 = vpack.c.b16 %v1429, %v1428
    %1446 = vmatprep.subr.bf16.mxu0 0
    %1447 = vmatpush1.bf16.msra.mxu0 %v1430
    %1448 = vmatprep.subr.bf16.mxu0 0
    %1449 = vmatpush1.bf16.msra.mxu0 %v1431
    %1450 = vmatprep.subr.bf16.mxu0 0
    %1451 = vmatpush1.bf16.msra.mxu0 %v1432
    %1452 = vmatprep.subr.bf16.mxu0 0
    %1453 = vmatpush1.bf16.msra.mxu0 %v1433
    %1454 = vmatprep.subr.bf16.mxu0 0
    %1455 = vmatpush1.bf16.msra.mxu0 %v1434
    %1456 = vmatprep.subr.bf16.mxu0 0
    %1457 = vmatpush1.bf16.msra.mxu0 %v1435
    %1458 = vmatprep.subr.bf16.mxu0 0
    %1459 = vmatpush1.bf16.msra.mxu0 %v1436
    %1460 = vmatprep.subr.bf16.mxu0 0
    %1461 = vmatpush1.bf16.msra.mxu0 %v1437
    %1462 = vmatprep.subr.bf16.mxu0 0
    %1463 = vmatpush1.bf16.msra.mxu0 0
    %1464 = vmatprep.subr.bf16.mxu0 0
    %1465 = vmatpush1.bf16.msra.mxu0 0
    %1466 = vmatprep.subr.bf16.mxu0 0
    %1467 = vmatpush1.bf16.msra.mxu0 0
    %1468 = vmatprep.subr.bf16.mxu0 0
    %1469 = vmatpush1.bf16.msra.mxu0 0
    %1470 = vmatprep.subr.bf16.mxu0 0
    %1471 = vmatpush1.bf16.msra.mxu0 0
    %1472 = vmatprep.subr.bf16.mxu0 0
    %1473 = vmatpush1.bf16.msra.mxu0 0
    %1474 = vmatprep.subr.bf16.mxu0 0
    %1475 = vmatpush1.bf16.msra.mxu0 0
    %1476 = vmatprep.subr.bf16.mxu0 0
    %1477 = vmatpush1.bf16.msra.mxu0 0
    %1478 = vmatprep.mubr.bf16.mxu0 0
    %1479 = vmatmul.mubr.bf16.gmra.mrb[0].mxu0 %v1386
    %v1480 = vpop.f32.mrb[0].mxu0
    %v1481 = vadd.f32 0.0, %v1480
    %v1482 = vpop.f32.mrb[0].mxu0
    %v1483 = vpop.f32.mrb[0].mxu0
    %v1484 = vadd.f32 0.0, %v1483
    %v1485 = vpop.f32.mrb[0].mxu0
    %1486 = vmatprep.mubr.bf16.mxu0 0
    %1487 = vmatmul.mubr.bf16.gmra.mrb[0].mxu0 %v1395
    %v1488 = vpop.f32.mrb[0].mxu0
    %v1489 = vadd.f32 0.0, %v1488
    %v1490 = vpop.f32.mrb[0].mxu0
    %v1491 = vpop.f32.mrb[0].mxu0
    %v1492 = vadd.f32 0.0, %v1491
    %v1493 = vpop.f32.mrb[0].mxu0
    %1494 = vdwg.mxu0
    %v1495 = vadd.f32 %v1355, %v1481
    %v1496 = vadd.f32 %v1356, %v1484
    %v1497 = vadd.f32 %v1357, %v1489
    %v1498 = vadd.f32 %v1358, %v1492
    %v1500 = vunpack.c.l.s4 1983009808
    %v1501 = vunpack.c.0.s8 %v1500
    %v1502 = vlaneseq
    %v1503 = vshrl.u32 %v1502, 7
    %v1504 = vsub.s32 %v1501, %v1503
    %v1505 = vrot.slane %v153, %v1504
    %v1506 = vcombine.high %v1505, %v1505
    %v1508 = vunpack.c.l.s4 1983009808
    %v1509 = vunpack.c.0.s8 %v1508
    %v1510 = vlaneseq
    %v1511 = vshrl.u32 %v1510, 7
    %v1512 = vsub.s32 %v1509, %v1511
    %v1513 = vrot.slane %v159, %v1512
    %v1514 = vcombine.high %v1513, %v1513
    %v1516 = vshrl.u32 %v1505, 16
    %v1518 = vrot.slane %v1516, 6
    %v1519 = vshll.u32 %v1505, 16
    %v1521 = vrot.slane %v1519, 7
    %v1522 = vor.u32 %v1518, %v1521
    %v1523 = vrot.slane %v1522, 2
    %v1525 = vshll.u32 %v1506, 16
    %v1527 = vrot.slane %v1525, 7
    %v1528 = vsel %vm254, %v1523, %v1527
    %v1530 = vshrl.u32 %v1513, 16
    %v1532 = vrot.slane %v1530, 6
    %v1533 = vshll.u32 %v1513, 16
    %v1535 = vrot.slane %v1533, 7
    %v1536 = vor.u32 %v1532, %v1535
    %v1537 = vrot.slane %v1536, 2
    %v1539 = vshll.u32 %v1514, 16
    %v1541 = vrot.slane %v1539, 7
    %v1542 = vsel %vm254, %v1537, %v1541
    %s1543 = scalar_lea.vmem [#allocation7], 448
    %v1544 = vld [vmem:[%s1543] sm:$0xf]
    %v1545 = vld [vmem:[%s1543 + $0x4] sm:$0xf]
    %v1546 = vld [vmem:[%s1543 + $0x8] sm:$0xf]
    %v1547 = vld [vmem:[%s1543 + $0xc] sm:$0xf]
    %v1548 = vld [vmem:[%s1543 + $0x10] sm:$0xf]
    %v1549 = vld [vmem:[%s1543 + $0x14] sm:$0xf]
    %v1550 = vld [vmem:[%s1543 + $0x18] sm:$0xf]
    %v1551 = vld [vmem:[%s1543 + $0x1c] sm:$0xf]
    %v1552 = vld [vmem:[%s1543 + $0x20] sm:$0xf]
    %v1553 = vld [vmem:[%s1543 + $0x24] sm:$0xf]
    %v1554 = vld [vmem:[%s1543 + $0x28] sm:$0xf]
    %v1555 = vld [vmem:[%s1543 + $0x2c] sm:$0xf]
    %v1556 = vld [vmem:[%s1543 + $0x30] sm:$0xf]
    %v1557 = vld [vmem:[%s1543 + $0x34] sm:$0xf]
    %v1558 = vld [vmem:[%s1543 + $0x38] sm:$0xf]
    %v1559 = vld [vmem:[%s1543 + $0x3c] sm:$0xf]
    %v1560 = vcombine.low %v1028, %v1528
    %v1562 = vunpack.c.l.s4 1983009808
    %v1563 = vunpack.c.0.s8 %v1562
    %v1564 = vlaneseq
    %v1565 = vshrl.u32 %v1564, 7
    %v1566 = vsub.s32 %v1563, %v1565
    %v1567 = vrot.slane %v1560, %v1566
    %v1568 = vcombine.low %v399, %v1567
    %v1569 = vcombine.low %v1042, %v1542
    %v1571 = vunpack.c.l.s4 1983009808
    %v1572 = vunpack.c.0.s8 %v1571
    %v1573 = vlaneseq
    %v1574 = vshrl.u32 %v1573, 7
    %v1575 = vsub.s32 %v1572, %v1574
    %v1576 = vrot.slane %v1569, %v1575
    %v1577 = vcombine.low %v416, %v1576
    %v1596 = vunpack.c.l.b16 %v1544
    %v1597 = vunpack.c.l.b16 %v1545
    %v1598 = vunpack.c.l.b16 %v1546
    %v1599 = vunpack.c.l.b16 %v1547
    %v1600 = vunpack.c.l.b16 %v1548
    %v1601 = vunpack.c.l.b16 %v1549
    %v1602 = vunpack.c.l.b16 %v1550
    %v1603 = vunpack.c.l.b16 %v1551
    %v1604 = vunpack.c.l.b16 %v1552
    %v1605 = vunpack.c.l.b16 %v1553
    %v1606 = vunpack.c.l.b16 %v1554
    %v1607 = vunpack.c.l.b16 %v1555
    %v1608 = vunpack.c.l.b16 %v1556
    %v1609 = vunpack.c.l.b16 %v1557
    %v1610 = vunpack.c.l.b16 %v1558
    %v1611 = vunpack.c.l.b16 %v1559
    %v1612 = vpack.c.b16 %v1597, %v1596
    %v1613 = vpack.c.b16 %v1599, %v1598
    %v1614 = vpack.c.b16 %v1601, %v1600
    %v1615 = vpack.c.b16 %v1603, %v1602
    %v1616 = vpack.c.b16 %v1605, %v1604
    %v1617 = vpack.c.b16 %v1607, %v1606
    %v1618 = vpack.c.b16 %v1609, %v1608
    %v1619 = vpack.c.b16 %v1611, %v1610
    %1628 = vmatprep.subr.bf16.mxu0 0
    %1629 = vmatpush1.bf16.msra.mxu0 %v1612
    %1630 = vmatprep.subr.bf16.mxu0 0
    %1631 = vmatpush1.bf16.msra.mxu0 %v1613
    %1632 = vmatprep.subr.bf16.mxu0 0
    %1633 = vmatpush1.bf16.msra.mxu0 %v1614
    %1634 = vmatprep.subr.bf16.mxu0 0
    %1635 = vmatpush1.bf16.msra.mxu0 %v1615
    %1636 = vmatprep.subr.bf16.mxu0 0
    %1637 = vmatpush1.bf16.msra.mxu0 %v1616
    %1638 = vmatprep.subr.bf16.mxu0 0
    %1639 = vmatpush1.bf16.msra.mxu0 %v1617
    %1640 = vmatprep.subr.bf16.mxu0 0
    %1641 = vmatpush1.bf16.msra.mxu0 %v1618
    %1642 = vmatprep.subr.bf16.mxu0 0
    %1643 = vmatpush1.bf16.msra.mxu0 %v1619
    %1644 = vmatprep.subr.bf16.mxu0 0
    %1645 = vmatpush1.bf16.msra.mxu0 0
    %1646 = vmatprep.subr.bf16.mxu0 0
    %1647 = vmatpush1.bf16.msra.mxu0 0
    %1648 = vmatprep.subr.bf16.mxu0 0
    %1649 = vmatpush1.bf16.msra.mxu0 0
    %1650 = vmatprep.subr.bf16.mxu0 0
    %1651 = vmatpush1.bf16.msra.mxu0 0
    %1652 = vmatprep.subr.bf16.mxu0 0
    %1653 = vmatpush1.bf16.msra.mxu0 0
    %1654 = vmatprep.subr.bf16.mxu0 0
    %1655 = vmatpush1.bf16.msra.mxu0 0
    %1656 = vmatprep.subr.bf16.mxu0 0
    %1657 = vmatpush1.bf16.msra.mxu0 0
    %1658 = vmatprep.subr.bf16.mxu0 0
    %1659 = vmatpush1.bf16.msra.mxu0 0
    %1660 = vmatprep.mubr.bf16.mxu0 0
    %1661 = vmatmul.mubr.bf16.gmra.mrb[0].mxu0 %v1568
    %v1662 = vpop.f32.mrb[0].mxu0
    %v1663 = vadd.f32 0.0, %v1662
    %v1664 = vpop.f32.mrb[0].mxu0
    %v1665 = vpop.f32.mrb[0].mxu0
    %v1666 = vadd.f32 0.0, %v1665
    %v1667 = vpop.f32.mrb[0].mxu0
    %1668 = vmatprep.mubr.bf16.mxu0 0
    %1669 = vmatmul.mubr.bf16.gmra.mrb[0].mxu0 %v1577
    %v1670 = vpop.f32.mrb[0].mxu0
    %v1671 = vadd.f32 0.0, %v1670
    %v1672 = vpop.f32.mrb[0].mxu0
    %v1673 = vpop.f32.mrb[0].mxu0
    %v1674 = vadd.f32 0.0, %v1673
    %v1675 = vpop.f32.mrb[0].mxu0
    %1676 = vdwg.mxu0
    %v1677 = vadd.f32 %v1495, %v1663
    %v1678 = vadd.f32 %v1496, %v1666
    %v1679 = vadd.f32 %v1497, %v1671
    %v1680 = vadd.f32 %v1498, %v1674
    %v1681 = vrot.slane %v1505, 7
    %v1682 = vrot.slane %v1681, 2
    %v1683 = vrot.slane %v1506, 7
    %v1684 = vsel %vm656, %v1682, %v1683
    %v1685 = vrot.slane %v1513, 7
    %v1686 = vrot.slane %v1685, 2
    %v1687 = vrot.slane %v1514, 7
    %v1688 = vsel %vm656, %v1686, %v1687
    %s1689 = scalar_lea.vmem [#allocation7], 512
    %v1690 = vld [vmem:[%s1689] sm:$0xf]
    %v1691 = vld [vmem:[%s1689 + $0x4] sm:$0xf]
    %v1692 = vld [vmem:[%s1689 + $0x8] sm:$0xf]
    %v1693 = vld [vmem:[%s1689 + $0xc] sm:$0xf]
    %v1694 = vld [vmem:[%s1689 + $0x10] sm:$0xf]
    %v1695 = vld [vmem:[%s1689 + $0x14] sm:$0xf]
    %v1696 = vld [vmem:[%s1689 + $0x18] sm:$0xf]
    %v1697 = vld [vmem:[%s1689 + $0x1c] sm:$0xf]
    %v1698 = vld [vmem:[%s1689 + $0x20] sm:$0xf]
    %v1699 = vld [vmem:[%s1689 + $0x24] sm:$0xf]
    %v1700 = vld [vmem:[%s1689 + $0x28] sm:$0xf]
    %v1701 = vld [vmem:[%s1689 + $0x2c] sm:$0xf]
    %v1702 = vld [vmem:[%s1689 + $0x30] sm:$0xf]
    %v1703 = vld [vmem:[%s1689 + $0x34] sm:$0xf]
    %v1704 = vld [vmem:[%s1689 + $0x38] sm:$0xf]
    %v1705 = vld [vmem:[%s1689 + $0x3c] sm:$0xf]
    %v1706 = vcombine.low %v1200, %v1684
    %v1708 = vunpack.c.l.s4 1983009808
    %v1709 = vunpack.c.0.s8 %v1708
    %v1710 = vlaneseq
    %v1711 = vshrl.u32 %v1710, 7
    %v1712 = vsub.s32 %v1709, %v1711
    %v1713 = vrot.slane %v1706, %v1712
    %v1714 = vcombine.low %v721, %v1713
    %v1715 = vcombine.low %v1204, %v1688
    %v1717 = vunpack.c.l.s4 1983009808
    %v1718 = vunpack.c.0.s8 %v1717
    %v1719 = vlaneseq
    %v1720 = vshrl.u32 %v1719, 7
    %v1721 = vsub.s32 %v1718, %v1720
    %v1722 = vrot.slane %v1715, %v1721
    %v1723 = vcombine.low %v738, %v1722
    %v1742 = vunpack.c.l.b16 %v1690
    %v1743 = vunpack.c.l.b16 %v1691
    %v1744 = vunpack.c.l.b16 %v1692
    %v1745 = vunpack.c.l.b16 %v1693
    %v1746 = vunpack.c.l.b16 %v1694
    %v1747 = vunpack.c.l.b16 %v1695
    %v1748 = vunpack.c.l.b16 %v1696
    %v1749 = vunpack.c.l.b16 %v1697
    %v1750 = vunpack.c.l.b16 %v1698
    %v1751 = vunpack.c.l.b16 %v1699
    %v1752 = vunpack.c.l.b16 %v1700
    %v1753 = vunpack.c.l.b16 %v1701
    %v1754 = vunpack.c.l.b16 %v1702
    %v1755 = vunpack.c.l.b16 %v1703
    %v1756 = vunpack.c.l.b16 %v1704
    %v1757 = vunpack.c.l.b16 %v1705
    %v1758 = vpack.c.b16 %v1743, %v1742
    %v1759 = vpack.c.b16 %v1745, %v1744
    %v1760 = vpack.c.b16 %v1747, %v1746
    %v1761 = vpack.c.b16 %v1749, %v1748
    %v1762 = vpack.c.b16 %v1751, %v1750
    %v1763 = vpack.c.b16 %v1753, %v1752
    %v1764 = vpack.c.b16 %v1755, %v1754
    %v1765 = vpack.c.b16 %v1757, %v1756
    %1774 = vmatprep.subr.bf16.mxu0 0
    %1775 = vmatpush1.bf16.msra.mxu0 %v1758
    %1776 = vmatprep.subr.bf16.mxu0 0
    %1777 = vmatpush1.bf16.msra.mxu0 %v1759
    %1778 = vmatprep.subr.bf16.mxu0 0
    %1779 = vmatpush1.bf16.msra.mxu0 %v1760
    %1780 = vmatprep.subr.bf16.mxu0 0
    %1781 = vmatpush1.bf16.msra.mxu0 %v1761
    %1782 = vmatprep.subr.bf16.mxu0 0
    %1783 = vmatpush1.bf16.msra.mxu0 %v1762
    %1784 = vmatprep.subr.bf16.mxu0 0
    %1785 = vmatpush1.bf16.msra.mxu0 %v1763
    %1786 = vmatprep.subr.bf16.mxu0 0
    %1787 = vmatpush1.bf16.msra.mxu0 %v1764
    %1788 = vmatprep.subr.bf16.mxu0 0
    %1789 = vmatpush1.bf16.msra.mxu0 %v1765
    %1790 = vmatprep.subr.bf16.mxu0 0
    %1791 = vmatpush1.bf16.msra.mxu0 0
    %1792 = vmatprep.subr.bf16.mxu0 0
    %1793 = vmatpush1.bf16.msra.mxu0 0
    %1794 = vmatprep.subr.bf16.mxu0 0
    %1795 = vmatpush1.bf16.msra.mxu0 0
    %1796 = vmatprep.subr.bf16.mxu0 0
    %1797 = vmatpush1.bf16.msra.mxu0 0
    %1798 = vmatprep.subr.bf16.mxu0 0
    %1799 = vmatpush1.bf16.msra.mxu0 0
    %1800 = vmatprep.subr.bf16.mxu0 0
    %1801 = vmatpush1.bf16.msra.mxu0 0
    %1802 = vmatprep.subr.bf16.mxu0 0
    %1803 = vmatpush1.bf16.msra.mxu0 0
    %1804 = vmatprep.subr.bf16.mxu0 0
    %1805 = vmatpush1.bf16.msra.mxu0 0
    %1806 = vmatprep.mubr.bf16.mxu0 0
    %1807 = vmatmul.mubr.bf16.gmra.mrb[0].mxu0 %v1714
    %v1808 = vpop.f32.mrb[0].mxu0
    %v1809 = vadd.f32 0.0, %v1808
    %v1810 = vpop.f32.mrb[0].mxu0
    %v1811 = vpop.f32.mrb[0].mxu0
    %v1812 = vadd.f32 0.0, %v1811
    %v1813 = vpop.f32.mrb[0].mxu0
    %1814 = vmatprep.mubr.bf16.mxu0 0
    %1815 = vmatmul.mubr.bf16.gmra.mrb[0].mxu0 %v1723
    %v1816 = vpop.f32.mrb[0].mxu0
    %v1817 = vadd.f32 0.0, %v1816
    %v1818 = vpop.f32.mrb[0].mxu0
    %v1819 = vpop.f32.mrb[0].mxu0
    %v1820 = vadd.f32 0.0, %v1819
    %v1821 = vpop.f32.mrb[0].mxu0
    %1822 = vdwg.mxu0
    %v1823 = vadd.f32 %v1677, %v1809
    %v1824 = vadd.f32 %v1678, %v1812
    %v1825 = vadd.f32 %v1679, %v1817
    %v1826 = vadd.f32 %v1680, %v1820
    %v1827 = vld [vmem:[%s2] sm:$0x1]
    %v1829 = vlaneseq
    %v1830 = vshrl.u32 %v1829, 7
    %v1831 = vsub.s32 0, %v1830
    %v1832 = vrot.slane %v1827, %v1831
    %v1834 = vmul.f32 %v1823, %v1832
    %v1835 = vmul.f32 %v1824, %v1832
    %v1836 = vmul.f32 %v1825, %v1832
    %v1837 = vmul.f32 %v1826, %v1832
    %v1838 = vld [vmem:[%s3] sm:$0x1]
    %v1840 = vlaneseq
    %v1841 = vshrl.u32 %v1840, 7
    %v1842 = vsub.s32 0, %v1841
    %v1843 = vrot.slane %v1838, %v1842
    %v1845 = vadd.f32 %v1834, %v1843
    %v1846 = vadd.f32 %v1835, %v1843
    %v1847 = vadd.f32 %v1836, %v1843
    %v1848 = vadd.f32 %v1837, %v1843
    %v1849 = vmax.f32 %v1845, 0.0
    %v1850 = vmax.f32 %v1846, 0.0
    %v1851 = vmax.f32 %v1847, 0.0
    %v1852 = vmax.f32 %v1848, 0.0
    %v1857 = vcombine.high %v1849, %v1849
    %v1858 = vcombine.high %v1850, %v1850
    %v1859 = vcombine.high %v1851, %v1851
    %v1860 = vcombine.high %v1852, %v1852
    %1865 = vst [vmem:[#allocation3] sm:$0xff] 0.0
    %1866 = vst [vmem:[#allocation3 + $0x30] sm:$0xff] 0.0
    %s1867 = scalar_lea.vmem [#allocation3], 40
    %1868 = vst [vmem:[%s1867] sm:$0xff] 0.0
    %1869 = vst [vmem:[%s1867 + $0x30] sm:$0xff] 0.0
    %s1870 = scalar_lea.vmem [#allocation3], 8
    %1871 = vst [vmem:[%s1870] sm:$0x1] 0.0
    %1872 = vst [vmem:[%s1870 + $0x8] sm:$0x1] 0.0
    %1873 = vst [vmem:[%s1870 + $0x10] sm:$0x1] 0.0
    %1874 = vst [vmem:[%s1870 + $0x18] sm:$0x1] 0.0
    %1875 = vst [vmem:[%s1870 + $0x30] sm:$0x1] 0.0
    %1876 = vst [vmem:[%s1870 + $0x38] sm:$0x1] 0.0
    %1877 = vst [vmem:[%s1870 + $0x40] sm:$0x1] 0.0
    %1878 = vst [vmem:[%s1870 + $0x48] sm:$0x1] 0.0
    %1879 = vst [vmem:[%s1870 + $0x5] sm:$0x7] 0.0
    %1880 = vst [vmem:[%s1870 + $0xd] sm:$0x7] 0.0
    %1881 = vst [vmem:[%s1870 + $0x15] sm:$0x7] 0.0
    %1882 = vst [vmem:[%s1870 + $0x1d] sm:$0x7] 0.0
    %1883 = vst [vmem:[%s1870 + $0x35] sm:$0x7] 0.0
    %1884 = vst [vmem:[%s1870 + $0x3d] sm:$0x7] 0.0
    %1885 = vst [vmem:[%s1870 + $0x45] sm:$0x7] 0.0
    %1886 = vst [vmem:[%s1870 + $0x4d] sm:$0x7] 0.0
    %1887 = vst [vmem:[%s1870 + $0x1] sm:$0xf] %v1849
    %1888 = vst [vmem:[%s1870 + $0x9] sm:$0xf] %v1857
    %1889 = vst [vmem:[%s1870 + $0x11] sm:$0xf] %v1850
    %1890 = vst [vmem:[%s1870 + $0x19] sm:$0xf] %v1858
    %1891 = vst [vmem:[%s1870 + $0x31] sm:$0xf] %v1851
    %1892 = vst [vmem:[%s1870 + $0x39] sm:$0xf] %v1859
    %1893 = vst [vmem:[%s1870 + $0x41] sm:$0xf] %v1852
    %1894 = vst [vmem:[%s1870 + $0x49] sm:$0xf] %v1860
    %v1895 = vld [vmem:[#allocation3] sm:$0xff]
    %v1896 = vld [vmem:[#allocation3 + $0x8] sm:$0xff]
    %v1897 = vld [vmem:[#allocation3 + $0x10] sm:$0xff]
    %v1898 = vld [vmem:[#allocation3 + $0x18] sm:$0xff]
    %v1899 = vld [vmem:[#allocation3 + $0x20] sm:$0xff]
    %v1900 = vld [vmem:[#allocation3 + $0x28] sm:$0xff]
    %v1901 = vld [vmem:[#allocation3 + $0x30] sm:$0xff]
    %v1902 = vld [vmem:[#allocation3 + $0x38] sm:$0xff]
    %v1903 = vld [vmem:[#allocation3 + $0x40] sm:$0xff]
    %v1904 = vld [vmem:[#allocation3 + $0x48] sm:$0xff]
    %v1905 = vld [vmem:[#allocation3 + $0x50] sm:$0xff]
    %v1906 = vld [vmem:[#allocation3 + $0x58] sm:$0xff]
    %v1907 = vpack.c.bf16 %v1895, %v1895
    %v1908 = vpack.c.bf16 %v1896, %v1896
    %v1909 = vpack.c.bf16 %v1897, %v1897
    %v1910 = vpack.c.bf16 %v1898, %v1898
    %v1911 = vpack.c.bf16 %v1899, %v1899
    %v1912 = vpack.c.bf16 %v1900, %v1900
    %v1913 = vpack.c.bf16 %v1901, %v1901
    %v1914 = vpack.c.bf16 %v1902, %v1902
    %v1915 = vpack.c.bf16 %v1903, %v1903
    %v1916 = vpack.c.bf16 %v1904, %v1904
    %v1917 = vpack.c.bf16 %v1905, %v1905
    %v1918 = vpack.c.bf16 %v1906, %v1906
    %v1919 = vld [vmem:[#allocation9] sm:$0xf]
    %v1920 = vld [vmem:[#allocation9 + $0x4] sm:$0xf]
    %v1921 = vld [vmem:[#allocation9 + $0x8] sm:$0xf]
    %v1922 = vld [vmem:[#allocation9 + $0xc] sm:$0xf]
    %v1923 = vld [vmem:[#allocation9 + $0x10] sm:$0xf]
    %v1924 = vld [vmem:[#allocation9 + $0x14] sm:$0xf]
    %v1925 = vld [vmem:[#allocation9 + $0x18] sm:$0xf]
    %v1926 = vld [vmem:[#allocation9 + $0x1c] sm:$0xf]
    %v1927 = vld [vmem:[#allocation9 + $0x20] sm:$0xf]
    %v1928 = vld [vmem:[#allocation9 + $0x24] sm:$0xf]
    %v1929 = vld [vmem:[#allocation9 + $0x28] sm:$0xf]
    %v1930 = vld [vmem:[#allocation9 + $0x2c] sm:$0xf]
    %v1931 = vld [vmem:[#allocation9 + $0x30] sm:$0xf]
    %v1932 = vld [vmem:[#allocation9 + $0x34] sm:$0xf]
    %v1933 = vld [vmem:[#allocation9 + $0x38] sm:$0xf]
    %v1934 = vld [vmem:[#allocation9 + $0x3c] sm:$0xf]
    %v1944 = vunpack.c.l.s4 1983009808
    %v1945 = vunpack.c.0.s8 %v1944
    %v1946 = vlaneseq
    %v1947 = vshrl.u32 %v1946, 7
    %v1948 = vsub.s32 %v1945, %v1947
    %v1949 = vrot.slane %v1907, %v1948
    %v1950 = vcombine.high %v1949, %v1949
    %v1952 = vunpack.c.l.s4 1983009808
    %v1953 = vunpack.c.0.s8 %v1952
    %v1954 = vlaneseq
    %v1955 = vshrl.u32 %v1954, 7
    %v1956 = vsub.s32 %v1953, %v1955
    %v1957 = vrot.slane %v1908, %v1956
    %v1958 = vcombine.high %v1957, %v1957
    %v1960 = vunpack.c.l.s4 1983009808
    %v1961 = vunpack.c.0.s8 %v1960
    %v1962 = vlaneseq
    %v1963 = vshrl.u32 %v1962, 7
    %v1964 = vsub.s32 %v1961, %v1963
    %v1965 = vrot.slane %v1909, %v1964
    %v1966 = vcombine.high %v1965, %v1965
    %v1968 = vunpack.c.l.s4 1983009808
    %v1969 = vunpack.c.0.s8 %v1968
    %v1970 = vlaneseq
    %v1971 = vshrl.u32 %v1970, 7
    %v1972 = vsub.s32 %v1969, %v1971
    %v1973 = vrot.slane %v1910, %v1972
    %v1974 = vcombine.high %v1973, %v1973
    %v1976 = vunpack.c.l.s4 1983009808
    %v1977 = vunpack.c.0.s8 %v1976
    %v1978 = vlaneseq
    %v1979 = vshrl.u32 %v1978, 7
    %v1980 = vsub.s32 %v1977, %v1979
    %v1981 = vrot.slane %v1913, %v1980
    %v1982 = vcombine.high %v1981, %v1981
    %v1984 = vunpack.c.l.s4 1983009808
    %v1985 = vunpack.c.0.s8 %v1984
    %v1986 = vlaneseq
    %v1987 = vshrl.u32 %v1986, 7
    %v1988 = vsub.s32 %v1985, %v1987
    %v1989 = vrot.slane %v1914, %v1988
    %v1990 = vcombine.high %v1989, %v1989
    %v1992 = vunpack.c.l.s4 1983009808
    %v1993 = vunpack.c.0.s8 %v1992
    %v1994 = vlaneseq
    %v1995 = vshrl.u32 %v1994, 7
    %v1996 = vsub.s32 %v1993, %v1995
    %v1997 = vrot.slane %v1915, %v1996
    %v1998 = vcombine.high %v1997, %v1997
    %v2000 = vunpack.c.l.s4 1983009808
    %v2001 = vunpack.c.0.s8 %v2000
    %v2002 = vlaneseq
    %v2003 = vshrl.u32 %v2002, 7
    %v2004 = vsub.s32 %v2001, %v2003
    %v2005 = vrot.slane %v1916, %v2004
    %v2006 = vcombine.high %v2005, %v2005
    %v2008 = vshrl.u32 %v1949, 16
    %v2010 = vrot.slane %v2008, 6
    %v2011 = vshll.u32 %v1949, 16
    %v2013 = vrot.slane %v2011, 7
    %v2014 = vor.u32 %v2010, %v2013
    %v2015 = vrot.slane %v2014, 2
    %v2017 = vshll.u32 %v1950, 16
    %v2019 = vrot.slane %v2017, 7
    %v2020 = vsel %vm254, %v2015, %v2019
    %v2022 = vshrl.u32 %v1957, 16
    %v2024 = vrot.slane %v2022, 6
    %v2025 = vshll.u32 %v1957, 16
    %v2027 = vrot.slane %v2025, 7
    %v2028 = vor.u32 %v2024, %v2027
    %v2029 = vrot.slane %v2028, 2
    %v2031 = vshll.u32 %v1958, 16
    %v2033 = vrot.slane %v2031, 7
    %v2034 = vsel %vm254, %v2029, %v2033
    %v2036 = vshrl.u32 %v1965, 16
    %v2038 = vrot.slane %v2036, 6
    %v2039 = vshll.u32 %v1965, 16
    %v2041 = vrot.slane %v2039, 7
    %v2042 = vor.u32 %v2038, %v2041
    %v2043 = vrot.slane %v2042, 2
    %v2045 = vshll.u32 %v1966, 16
    %v2047 = vrot.slane %v2045, 7
    %v2048 = vsel %vm254, %v2043, %v2047
    %v2050 = vshrl.u32 %v1973, 16
    %v2052 = vrot.slane %v2050, 6
    %v2053 = vshll.u32 %v1973, 16
    %v2055 = vrot.slane %v2053, 7
    %v2056 = vor.u32 %v2052, %v2055
    %v2057 = vrot.slane %v2056, 2
    %v2059 = vshll.u32 %v1974, 16
    %v2061 = vrot.slane %v2059, 7
    %v2062 = vsel %vm254, %v2057, %v2061
    %v2064 = vshrl.u32 %v1981, 16
    %v2066 = vrot.slane %v2064, 6
    %v2067 = vshll.u32 %v1981, 16
    %v2069 = vrot.slane %v2067, 7
    %v2070 = vor.u32 %v2066, %v2069
    %v2071 = vrot.slane %v2070, 2
    %v2073 = vshll.u32 %v1982, 16
    %v2075 = vrot.slane %v2073, 7
    %v2076 = vsel %vm254, %v2071, %v2075
    %v2078 = vshrl.u32 %v1989, 16
    %v2080 = vrot.slane %v2078, 6
    %v2081 = vshll.u32 %v1989, 16
    %v2083 = vrot.slane %v2081, 7
    %v2084 = vor.u32 %v2080, %v2083
    %v2085 = vrot.slane %v2084, 2
    %v2087 = vshll.u32 %v1990, 16
    %v2089 = vrot.slane %v2087, 7
    %v2090 = vsel %vm254, %v2085, %v2089
    %v2092 = vshrl.u32 %v1997, 16
    %v2094 = vrot.slane %v2092, 6
    %v2095 = vshll.u32 %v1997, 16
    %v2097 = vrot.slane %v2095, 7
    %v2098 = vor.u32 %v2094, %v2097
    %v2099 = vrot.slane %v2098, 2
    %v2101 = vshll.u32 %v1998, 16
    %v2103 = vrot.slane %v2101, 7
    %v2104 = vsel %vm254, %v2099, %v2103
    %v2106 = vshrl.u32 %v2005, 16
    %v2108 = vrot.slane %v2106, 6
    %v2109 = vshll.u32 %v2005, 16
    %v2111 = vrot.slane %v2109, 7
    %v2112 = vor.u32 %v2108, %v2111
    %v2113 = vrot.slane %v2112, 2
    %v2115 = vshll.u32 %v2006, 16
    %v2117 = vrot.slane %v2115, 7
    %v2118 = vsel %vm254, %v2113, %v2117
    %s2119 = scalar_lea.vmem [#allocation9], 64
    %v2120 = vld [vmem:[%s2119] sm:$0xf]
    %v2121 = vld [vmem:[%s2119 + $0x4] sm:$0xf]
    %v2122 = vld [vmem:[%s2119 + $0x8] sm:$0xf]
    %v2123 = vld [vmem:[%s2119 + $0xc] sm:$0xf]
    %v2124 = vld [vmem:[%s2119 + $0x10] sm:$0xf]
    %v2125 = vld [vmem:[%s2119 + $0x14] sm:$0xf]
    %v2126 = vld [vmem:[%s2119 + $0x18] sm:$0xf]
    %v2127 = vld [vmem:[%s2119 + $0x1c] sm:$0xf]
    %v2128 = vld [vmem:[%s2119 + $0x20] sm:$0xf]
    %v2129 = vld [vmem:[%s2119 + $0x24] sm:$0xf]
    %v2130 = vld [vmem:[%s2119 + $0x28] sm:$0xf]
    %v2131 = vld [vmem:[%s2119 + $0x2c] sm:$0xf]
    %v2132 = vld [vmem:[%s2119 + $0x30] sm:$0xf]
    %v2133 = vld [vmem:[%s2119 + $0x34] sm:$0xf]
    %v2134 = vld [vmem:[%s2119 + $0x38] sm:$0xf]
    %v2135 = vld [vmem:[%s2119 + $0x3c] sm:$0xf]
    %v2136 = vcombine.low %v2020, %v2034
    %v2137 = vcombine.low %v2048, %v2062
    %v2139 = vunpack.c.l.s4 1983009808
    %v2140 = vunpack.c.0.s8 %v2139
    %v2141 = vlaneseq
    %v2142 = vshrl.u32 %v2141, 7
    %v2143 = vsub.s32 %v2140, %v2142
    %v2144 = vrot.slane %v2136, %v2143
    %v2146 = vunpack.c.l.s4 1983009808
    %v2147 = vunpack.c.0.s8 %v2146
    %v2148 = vlaneseq
    %v2149 = vshrl.u32 %v2148, 7
    %v2150 = vsub.s32 %v2147, %v2149
    %v2151 = vrot.slane %v2137, %v2150
    %v2152 = vcombine.low %v2144, %v2151
    %v2153 = vcombine.low %v2076, %v2090
    %v2154 = vcombine.low %v2104, %v2118
    %v2156 = vunpack.c.l.s4 1983009808
    %v2157 = vunpack.c.0.s8 %v2156
    %v2158 = vlaneseq
    %v2159 = vshrl.u32 %v2158, 7
    %v2160 = vsub.s32 %v2157, %v2159
    %v2161 = vrot.slane %v2153, %v2160
    %v2163 = vunpack.c.l.s4 1983009808
    %v2164 = vunpack.c.0.s8 %v2163
    %v2165 = vlaneseq
    %v2166 = vshrl.u32 %v2165, 7
    %v2167 = vsub.s32 %v2164, %v2166
    %v2168 = vrot.slane %v2154, %v2167
    %v2169 = vcombine.low %v2161, %v2168
    %v2188 = vunpack.c.l.b16 %v2120
    %v2189 = vunpack.c.l.b16 %v2121
    %v2190 = vunpack.c.l.b16 %v2122
    %v2191 = vunpack.c.l.b16 %v2123
    %v2192 = vunpack.c.l.b16 %v2124
    %v2193 = vunpack.c.l.b16 %v2125
    %v2194 = vunpack.c.l.b16 %v2126
    %v2195 = vunpack.c.l.b16 %v2127
    %v2196 = vunpack.c.l.b16 %v2128
    %v2197 = vunpack.c.l.b16 %v2129
    %v2198 = vunpack.c.l.b16 %v2130
    %v2199 = vunpack.c.l.b16 %v2131
    %v2200 = vunpack.c.l.b16 %v2132
    %v2201 = vunpack.c.l.b16 %v2133
    %v2202 = vunpack.c.l.b16 %v2134
    %v2203 = vunpack.c.l.b16 %v2135
    %v2204 = vpack.c.b16 %v2189, %v2188
    %v2205 = vpack.c.b16 %v2191, %v2190
    %v2206 = vpack.c.b16 %v2193, %v2192
    %v2207 = vpack.c.b16 %v2195, %v2194
    %v2208 = vpack.c.b16 %v2197, %v2196
    %v2209 = vpack.c.b16 %v2199, %v2198
    %v2210 = vpack.c.b16 %v2201, %v2200
    %v2211 = vpack.c.b16 %v2203, %v2202
    %2220 = vmatprep.subr.bf16.mxu0 0
    %2221 = vmatpush1.bf16.msra.mxu0 %v2204
    %2222 = vmatprep.subr.bf16.mxu0 0
    %2223 = vmatpush1.bf16.msra.mxu0 %v2205
    %2224 = vmatprep.subr.bf16.mxu0 0
    %2225 = vmatpush1.bf16.msra.mxu0 %v2206
    %2226 = vmatprep.subr.bf16.mxu0 0
    %2227 = vmatpush1.bf16.msra.mxu0 %v2207
    %2228 = vmatprep.subr.bf16.mxu0 0
    %2229 = vmatpush1.bf16.msra.mxu0 %v2208
    %2230 = vmatprep.subr.bf16.mxu0 0
    %2231 = vmatpush1.bf16.msra.mxu0 %v2209
    %2232 = vmatprep.subr.bf16.mxu0 0
    %2233 = vmatpush1.bf16.msra.mxu0 %v2210
    %2234 = vmatprep.subr.bf16.mxu0 0
    %2235 = vmatpush1.bf16.msra.mxu0 %v2211
    %2236 = vmatprep.subr.bf16.mxu0 0
    %2237 = vmatpush1.bf16.msra.mxu0 0
    %2238 = vmatprep.subr.bf16.mxu0 0
    %2239 = vmatpush1.bf16.msra.mxu0 0
    %2240 = vmatprep.subr.bf16.mxu0 0
    %2241 = vmatpush1.bf16.msra.mxu0 0
    %2242 = vmatprep.subr.bf16.mxu0 0
    %2243 = vmatpush1.bf16.msra.mxu0 0
    %2244 = vmatprep.subr.bf16.mxu0 0
    %2245 = vmatpush1.bf16.msra.mxu0 0
    %2246 = vmatprep.subr.bf16.mxu0 0
    %2247 = vmatpush1.bf16.msra.mxu0 0
    %2248 = vmatprep.subr.bf16.mxu0 0
    %2249 = vmatpush1.bf16.msra.mxu0 0
    %2250 = vmatprep.subr.bf16.mxu0 0
    %2251 = vmatpush1.bf16.msra.mxu0 0
    %2252 = vmatprep.mubr.bf16.mxu0 0
    %2253 = vmatmul.mubr.bf16.gmra.mrb[0].mxu0 %v2152
    %v2254 = vpop.f32.mrb[0].mxu0
    %v2255 = vadd.f32 0.0, %v2254
    %v2256 = vpop.f32.mrb[0].mxu0
    %v2257 = vpop.f32.mrb[0].mxu0
    %v2258 = vadd.f32 0.0, %v2257
    %v2259 = vpop.f32.mrb[0].mxu0
    %2260 = vmatprep.mubr.bf16.mxu0 0
    %2261 = vmatmul.mubr.bf16.gmra.mrb[0].mxu0 %v2169
    %v2262 = vpop.f32.mrb[0].mxu0
    %v2263 = vadd.f32 0.0, %v2262
    %v2264 = vpop.f32.mrb[0].mxu0
    %v2265 = vpop.f32.mrb[0].mxu0
    %v2266 = vadd.f32 0.0, %v2265
    %v2267 = vpop.f32.mrb[0].mxu0
    %2268 = vdwg.mxu0
    %v2269 = vcombine.low %v1907, %v1908
    %v2270 = vcombine.low %v1909, %v1910
    %v2272 = vunpack.c.l.s4 1983009808
    %v2273 = vunpack.c.0.s8 %v2272
    %v2274 = vlaneseq
    %v2275 = vshrl.u32 %v2274, 7
    %v2276 = vsub.s32 %v2273, %v2275
    %v2277 = vrot.slane %v2269, %v2276
    %v2279 = vunpack.c.l.s4 1983009808
    %v2280 = vunpack.c.0.s8 %v2279
    %v2281 = vlaneseq
    %v2282 = vshrl.u32 %v2281, 7
    %v2283 = vsub.s32 %v2280, %v2282
    %v2284 = vrot.slane %v2270, %v2283
    %v2285 = vcombine.low %v2277, %v2284
    %v2286 = vcombine.low %v1913, %v1914
    %v2287 = vcombine.low %v1915, %v1916
    %v2289 = vunpack.c.l.s4 1983009808
    %v2290 = vunpack.c.0.s8 %v2289
    %v2291 = vlaneseq
    %v2292 = vshrl.u32 %v2291, 7
    %v2293 = vsub.s32 %v2290, %v2292
    %v2294 = vrot.slane %v2286, %v2293
    %v2296 = vunpack.c.l.s4 1983009808
    %v2297 = vunpack.c.0.s8 %v2296
    %v2298 = vlaneseq
    %v2299 = vshrl.u32 %v2298, 7
    %v2300 = vsub.s32 %v2297, %v2299
    %v2301 = vrot.slane %v2287, %v2300
    %v2302 = vcombine.low %v2294, %v2301
    %v2321 = vunpack.c.l.b16 %v1919
    %v2322 = vunpack.c.l.b16 %v1920
    %v2323 = vunpack.c.l.b16 %v1921
    %v2324 = vunpack.c.l.b16 %v1922
    %v2325 = vunpack.c.l.b16 %v1923
    %v2326 = vunpack.c.l.b16 %v1924
    %v2327 = vunpack.c.l.b16 %v1925
    %v2328 = vunpack.c.l.b16 %v1926
    %v2329 = vunpack.c.l.b16 %v1927
    %v2330 = vunpack.c.l.b16 %v1928
    %v2331 = vunpack.c.l.b16 %v1929
    %v2332 = vunpack.c.l.b16 %v1930
    %v2333 = vunpack.c.l.b16 %v1931
    %v2334 = vunpack.c.l.b16 %v1932
    %v2335 = vunpack.c.l.b16 %v1933
    %v2336 = vunpack.c.l.b16 %v1934
    %v2337 = vpack.c.b16 %v2322, %v2321
    %v2338 = vpack.c.b16 %v2324, %v2323
    %v2339 = vpack.c.b16 %v2326, %v2325
    %v2340 = vpack.c.b16 %v2328, %v2327
    %v2341 = vpack.c.b16 %v2330, %v2329
    %v2342 = vpack.c.b16 %v2332, %v2331
    %v2343 = vpack.c.b16 %v2334, %v2333
    %v2344 = vpack.c.b16 %v2336, %v2335
    %2353 = vmatprep.subr.bf16.mxu0 0
    %2354 = vmatpush1.bf16.msra.mxu0 %v2337
    %2355 = vmatprep.subr.bf16.mxu0 0
    %2356 = vmatpush1.bf16.msra.mxu0 %v2338
    %2357 = vmatprep.subr.bf16.mxu0 0
    %2358 = vmatpush1.bf16.msra.mxu0 %v2339
    %2359 = vmatprep.subr.bf16.mxu0 0
    %2360 = vmatpush1.bf16.msra.mxu0 %v2340
    %2361 = vmatprep.subr.bf16.mxu0 0
    %2362 = vmatpush1.bf16.msra.mxu0 %v2341
    %2363 = vmatprep.subr.bf16.mxu0 0
    %2364 = vmatpush1.bf16.msra.mxu0 %v2342
    %2365 = vmatprep.subr.bf16.mxu0 0
    %2366 = vmatpush1.bf16.msra.mxu0 %v2343
    %2367 = vmatprep.subr.bf16.mxu0 0
    %2368 = vmatpush1.bf16.msra.mxu0 %v2344
    %2369 = vmatprep.subr.bf16.mxu0 0
    %2370 = vmatpush1.bf16.msra.mxu0 0
    %2371 = vmatprep.subr.bf16.mxu0 0
    %2372 = vmatpush1.bf16.msra.mxu0 0
    %2373 = vmatprep.subr.bf16.mxu0 0
    %2374 = vmatpush1.bf16.msra.mxu0 0
    %2375 = vmatprep.subr.bf16.mxu0 0
    %2376 = vmatpush1.bf16.msra.mxu0 0
    %2377 = vmatprep.subr.bf16.mxu0 0
    %2378 = vmatpush1.bf16.msra.mxu0 0
    %2379 = vmatprep.subr.bf16.mxu0 0
    %2380 = vmatpush1.bf16.msra.mxu0 0
    %2381 = vmatprep.subr.bf16.mxu0 0
    %2382 = vmatpush1.bf16.msra.mxu0 0
    %2383 = vmatprep.subr.bf16.mxu0 0
    %2384 = vmatpush1.bf16.msra.mxu0 0
    %2385 = vmatprep.mubr.bf16.mxu0 0
    %2386 = vmatmul.mubr.bf16.gmra.mrb[0].mxu0 %v2285
    %v2387 = vpop.f32.mrb[0].mxu0
    %v2388 = vadd.f32 %v2255, %v2387
    %v2389 = vpop.f32.mrb[0].mxu0
    %v2390 = vpop.f32.mrb[0].mxu0
    %v2391 = vadd.f32 %v2258, %v2390
    %v2392 = vpop.f32.mrb[0].mxu0
    %2393 = vmatprep.mubr.bf16.mxu0 0
    %2394 = vmatmul.mubr.bf16.gmra.mrb[0].mxu0 %v2302
    %v2395 = vpop.f32.mrb[0].mxu0
    %v2396 = vadd.f32 %v2263, %v2395
    %v2397 = vpop.f32.mrb[0].mxu0
    %v2398 = vpop.f32.mrb[0].mxu0
    %v2399 = vadd.f32 %v2266, %v2398
    %v2400 = vpop.f32.mrb[0].mxu0
    %2401 = vdwg.mxu0
    %v2402 = vrot.slane %v1949, 7
    %v2403 = vrot.slane %v2402, 2
    %v2404 = vrot.slane %v1950, 7
    %v2405 = vsel %vm656, %v2403, %v2404
    %v2406 = vrot.slane %v1957, 7
    %v2407 = vrot.slane %v2406, 2
    %v2408 = vrot.slane %v1958, 7
    %v2409 = vsel %vm656, %v2407, %v2408
    %v2410 = vrot.slane %v1965, 7
    %v2411 = vrot.slane %v2410, 2
    %v2412 = vrot.slane %v1966, 7
    %v2413 = vsel %vm656, %v2411, %v2412
    %v2414 = vrot.slane %v1973, 7
    %v2415 = vrot.slane %v2414, 2
    %v2416 = vrot.slane %v1974, 7
    %v2417 = vsel %vm656, %v2415, %v2416
    %v2418 = vrot.slane %v1981, 7
    %v2419 = vrot.slane %v2418, 2
    %v2420 = vrot.slane %v1982, 7
    %v2421 = vsel %vm656, %v2419, %v2420
    %v2422 = vrot.slane %v1989, 7
    %v2423 = vrot.slane %v2422, 2
    %v2424 = vrot.slane %v1990, 7
    %v2425 = vsel %vm656, %v2423, %v2424
    %v2426 = vrot.slane %v1997, 7
    %v2427 = vrot.slane %v2426, 2
    %v2428 = vrot.slane %v1998, 7
    %v2429 = vsel %vm656, %v2427, %v2428
    %v2430 = vrot.slane %v2005, 7
    %v2431 = vrot.slane %v2430, 2
    %v2432 = vrot.slane %v2006, 7
    %v2433 = vsel %vm656, %v2431, %v2432
    %s2434 = scalar_lea.vmem [#allocation9], 128
    %v2435 = vld [vmem:[%s2434] sm:$0xf]
    %v2436 = vld [vmem:[%s2434 + $0x4] sm:$0xf]
    %v2437 = vld [vmem:[%s2434 + $0x8] sm:$0xf]
    %v2438 = vld [vmem:[%s2434 + $0xc] sm:$0xf]
    %v2439 = vld [vmem:[%s2434 + $0x10] sm:$0xf]
    %v2440 = vld [vmem:[%s2434 + $0x14] sm:$0xf]
    %v2441 = vld [vmem:[%s2434 + $0x18] sm:$0xf]
    %v2442 = vld [vmem:[%s2434 + $0x1c] sm:$0xf]
    %v2443 = vld [vmem:[%s2434 + $0x20] sm:$0xf]
    %v2444 = vld [vmem:[%s2434 + $0x24] sm:$0xf]
    %v2445 = vld [vmem:[%s2434 + $0x28] sm:$0xf]
    %v2446 = vld [vmem:[%s2434 + $0x2c] sm:$0xf]
    %v2447 = vld [vmem:[%s2434 + $0x30] sm:$0xf]
    %v2448 = vld [vmem:[%s2434 + $0x34] sm:$0xf]
    %v2449 = vld [vmem:[%s2434 + $0x38] sm:$0xf]
    %v2450 = vld [vmem:[%s2434 + $0x3c] sm:$0xf]
    %v2451 = vcombine.low %v2405, %v2409
    %v2452 = vcombine.low %v2413, %v2417
    %v2454 = vunpack.c.l.s4 1983009808
    %v2455 = vunpack.c.0.s8 %v2454
    %v2456 = vlaneseq
    %v2457 = vshrl.u32 %v2456, 7
    %v2458 = vsub.s32 %v2455, %v2457
    %v2459 = vrot.slane %v2451, %v2458
    %v2461 = vunpack.c.l.s4 1983009808
    %v2462 = vunpack.c.0.s8 %v2461
    %v2463 = vlaneseq
    %v2464 = vshrl.u32 %v2463, 7
    %v2465 = vsub.s32 %v2462, %v2464
    %v2466 = vrot.slane %v2452, %v2465
    %v2467 = vcombine.low %v2459, %v2466
    %v2468 = vcombine.low %v2421, %v2425
    %v2469 = vcombine.low %v2429, %v2433
    %v2471 = vunpack.c.l.s4 1983009808
    %v2472 = vunpack.c.0.s8 %v2471
    %v2473 = vlaneseq
    %v2474 = vshrl.u32 %v2473, 7
    %v2475 = vsub.s32 %v2472, %v2474
    %v2476 = vrot.slane %v2468, %v2475
    %v2478 = vunpack.c.l.s4 1983009808
    %v2479 = vunpack.c.0.s8 %v2478
    %v2480 = vlaneseq
    %v2481 = vshrl.u32 %v2480, 7
    %v2482 = vsub.s32 %v2479, %v2481
    %v2483 = vrot.slane %v2469, %v2482
    %v2484 = vcombine.low %v2476, %v2483
    %v2503 = vunpack.c.l.b16 %v2435
    %v2504 = vunpack.c.l.b16 %v2436
    %v2505 = vunpack.c.l.b16 %v2437
    %v2506 = vunpack.c.l.b16 %v2438
    %v2507 = vunpack.c.l.b16 %v2439
    %v2508 = vunpack.c.l.b16 %v2440
    %v2509 = vunpack.c.l.b16 %v2441
    %v2510 = vunpack.c.l.b16 %v2442
    %v2511 = vunpack.c.l.b16 %v2443
    %v2512 = vunpack.c.l.b16 %v2444
    %v2513 = vunpack.c.l.b16 %v2445
    %v2514 = vunpack.c.l.b16 %v2446
    %v2515 = vunpack.c.l.b16 %v2447
    %v2516 = vunpack.c.l.b16 %v2448
    %v2517 = vunpack.c.l.b16 %v2449
    %v2518 = vunpack.c.l.b16 %v2450
    %v2519 = vpack.c.b16 %v2504, %v2503
    %v2520 = vpack.c.b16 %v2506, %v2505
    %v2521 = vpack.c.b16 %v2508, %v2507
    %v2522 = vpack.c.b16 %v2510, %v2509
    %v2523 = vpack.c.b16 %v2512, %v2511
    %v2524 = vpack.c.b16 %v2514, %v2513
    %v2525 = vpack.c.b16 %v2516, %v2515
    %v2526 = vpack.c.b16 %v2518, %v2517
    %2535 = vmatprep.subr.bf16.mxu0 0
    %2536 = vmatpush1.bf16.msra.mxu0 %v2519
    %2537 = vmatprep.subr.bf16.mxu0 0
    %2538 = vmatpush1.bf16.msra.mxu0 %v2520
    %2539 = vmatprep.subr.bf16.mxu0 0
    %2540 = vmatpush1.bf16.msra.mxu0 %v2521
    %2541 = vmatprep.subr.bf16.mxu0 0
    %2542 = vmatpush1.bf16.msra.mxu0 %v2522
    %2543 = vmatprep.subr.bf16.mxu0 0
    %2544 = vmatpush1.bf16.msra.mxu0 %v2523
    %2545 = vmatprep.subr.bf16.mxu0 0
    %2546 = vmatpush1.bf16.msra.mxu0 %v2524
    %2547 = vmatprep.subr.bf16.mxu0 0
    %2548 = vmatpush1.bf16.msra.mxu0 %v2525
    %2549 = vmatprep.subr.bf16.mxu0 0
    %2550 = vmatpush1.bf16.msra.mxu0 %v2526
    %2551 = vmatprep.subr.bf16.mxu0 0
    %2552 = vmatpush1.bf16.msra.mxu0 0
    %2553 = vmatprep.subr.bf16.mxu0 0
    %2554 = vmatpush1.bf16.msra.mxu0 0
    %2555 = vmatprep.subr.bf16.mxu0 0
    %2556 = vmatpush1.bf16.msra.mxu0 0
    %2557 = vmatprep.subr.bf16.mxu0 0
    %2558 = vmatpush1.bf16.msra.mxu0 0
    %2559 = vmatprep.subr.bf16.mxu0 0
    %2560 = vmatpush1.bf16.msra.mxu0 0
    %2561 = vmatprep.subr.bf16.mxu0 0
    %2562 = vmatpush1.bf16.msra.mxu0 0
    %2563 = vmatprep.subr.bf16.mxu0 0
    %2564 = vmatpush1.bf16.msra.mxu0 0
    %2565 = vmatprep.subr.bf16.mxu0 0
    %2566 = vmatpush1.bf16.msra.mxu0 0
    %2567 = vmatprep.mubr.bf16.mxu0 0
    %2568 = vmatmul.mubr.bf16.gmra.mrb[0].mxu0 %v2467
    %v2569 = vpop.f32.mrb[0].mxu0
    %v2570 = vadd.f32 0.0, %v2569
    %v2571 = vpop.f32.mrb[0].mxu0
    %v2572 = vpop.f32.mrb[0].mxu0
    %v2573 = vadd.f32 0.0, %v2572
    %v2574 = vpop.f32.mrb[0].mxu0
    %2575 = vmatprep.mubr.bf16.mxu0 0
    %2576 = vmatmul.mubr.bf16.gmra.mrb[0].mxu0 %v2484
    %v2577 = vpop.f32.mrb[0].mxu0
    %v2578 = vadd.f32 0.0, %v2577
    %v2579 = vpop.f32.mrb[0].mxu0
    %v2580 = vpop.f32.mrb[0].mxu0
    %v2581 = vadd.f32 0.0, %v2580
    %v2582 = vpop.f32.mrb[0].mxu0
    %2583 = vdwg.mxu0
    %v2584 = vadd.f32 %v2388, %v2570
    %v2585 = vadd.f32 %v2391, %v2573
    %v2586 = vadd.f32 %v2396, %v2578
    %v2587 = vadd.f32 %v2399, %v2581
    %s2588 = scalar_lea.vmem [#allocation9], 192
    %v2589 = vld [vmem:[%s2588] sm:$0xf]
    %v2590 = vld [vmem:[%s2588 + $0x4] sm:$0xf]
    %v2591 = vld [vmem:[%s2588 + $0x8] sm:$0xf]
    %v2592 = vld [vmem:[%s2588 + $0xc] sm:$0xf]
    %v2593 = vld [vmem:[%s2588 + $0x10] sm:$0xf]
    %v2594 = vld [vmem:[%s2588 + $0x14] sm:$0xf]
    %v2595 = vld [vmem:[%s2588 + $0x18] sm:$0xf]
    %v2596 = vld [vmem:[%s2588 + $0x1c] sm:$0xf]
    %v2597 = vld [vmem:[%s2588 + $0x20] sm:$0xf]
    %v2598 = vld [vmem:[%s2588 + $0x24] sm:$0xf]
    %v2599 = vld [vmem:[%s2588 + $0x28] sm:$0xf]
    %v2600 = vld [vmem:[%s2588 + $0x2c] sm:$0xf]
    %v2601 = vld [vmem:[%s2588 + $0x30] sm:$0xf]
    %v2602 = vld [vmem:[%s2588 + $0x34] sm:$0xf]
    %v2603 = vld [vmem:[%s2588 + $0x38] sm:$0xf]
    %v2604 = vld [vmem:[%s2588 + $0x3c] sm:$0xf]
    %v2607 = vcombine.low %v1908, %v1909
    %v2608 = vcombine.low %v1910, %v1911
    %v2610 = vunpack.c.l.s4 1983009808
    %v2611 = vunpack.c.0.s8 %v2610
    %v2612 = vlaneseq
    %v2613 = vshrl.u32 %v2612, 7
    %v2614 = vsub.s32 %v2611, %v2613
    %v2615 = vrot.slane %v2607, %v2614
    %v2617 = vunpack.c.l.s4 1983009808
    %v2618 = vunpack.c.0.s8 %v2617
    %v2619 = vlaneseq
    %v2620 = vshrl.u32 %v2619, 7
    %v2621 = vsub.s32 %v2618, %v2620
    %v2622 = vrot.slane %v2608, %v2621
    %v2623 = vcombine.low %v2615, %v2622
    %v2624 = vcombine.low %v1914, %v1915
    %v2625 = vcombine.low %v1916, %v1917
    %v2627 = vunpack.c.l.s4 1983009808
    %v2628 = vunpack.c.0.s8 %v2627
    %v2629 = vlaneseq
    %v2630 = vshrl.u32 %v2629, 7
    %v2631 = vsub.s32 %v2628, %v2630
    %v2632 = vrot.slane %v2624, %v2631
    %v2634 = vunpack.c.l.s4 1983009808
    %v2635 = vunpack.c.0.s8 %v2634
    %v2636 = vlaneseq
    %v2637 = vshrl.u32 %v2636, 7
    %v2638 = vsub.s32 %v2635, %v2637
    %v2639 = vrot.slane %v2625, %v2638
    %v2640 = vcombine.low %v2632, %v2639
    %v2659 = vunpack.c.l.b16 %v2589
    %v2660 = vunpack.c.l.b16 %v2590
    %v2661 = vunpack.c.l.b16 %v2591
    %v2662 = vunpack.c.l.b16 %v2592
    %v2663 = vunpack.c.l.b16 %v2593
    %v2664 = vunpack.c.l.b16 %v2594
    %v2665 = vunpack.c.l.b16 %v2595
    %v2666 = vunpack.c.l.b16 %v2596
    %v2667 = vunpack.c.l.b16 %v2597
    %v2668 = vunpack.c.l.b16 %v2598
    %v2669 = vunpack.c.l.b16 %v2599
    %v2670 = vunpack.c.l.b16 %v2600
    %v2671 = vunpack.c.l.b16 %v2601
    %v2672 = vunpack.c.l.b16 %v2602
    %v2673 = vunpack.c.l.b16 %v2603
    %v2674 = vunpack.c.l.b16 %v2604
    %v2675 = vpack.c.b16 %v2660, %v2659
    %v2676 = vpack.c.b16 %v2662, %v2661
    %v2677 = vpack.c.b16 %v2664, %v2663
    %v2678 = vpack.c.b16 %v2666, %v2665
    %v2679 = vpack.c.b16 %v2668, %v2667
    %v2680 = vpack.c.b16 %v2670, %v2669
    %v2681 = vpack.c.b16 %v2672, %v2671
    %v2682 = vpack.c.b16 %v2674, %v2673
    %2691 = vmatprep.subr.bf16.mxu0 0
    %2692 = vmatpush1.bf16.msra.mxu0 %v2675
    %2693 = vmatprep.subr.bf16.mxu0 0
    %2694 = vmatpush1.bf16.msra.mxu0 %v2676
    %2695 = vmatprep.subr.bf16.mxu0 0
    %2696 = vmatpush1.bf16.msra.mxu0 %v2677
    %2697 = vmatprep.subr.bf16.mxu0 0
    %2698 = vmatpush1.bf16.msra.mxu0 %v2678
    %2699 = vmatprep.subr.bf16.mxu0 0
    %2700 = vmatpush1.bf16.msra.mxu0 %v2679
    %2701 = vmatprep.subr.bf16.mxu0 0
    %2702 = vmatpush1.bf16.msra.mxu0 %v2680
    %2703 = vmatprep.subr.bf16.mxu0 0
    %2704 = vmatpush1.bf16.msra.mxu0 %v2681
    %2705 = vmatprep.subr.bf16.mxu0 0
    %2706 = vmatpush1.bf16.msra.mxu0 %v2682
    %2707 = vmatprep.subr.bf16.mxu0 0
    %2708 = vmatpush1.bf16.msra.mxu0 0
    %2709 = vmatprep.subr.bf16.mxu0 0
    %2710 = vmatpush1.bf16.msra.mxu0 0
    %2711 = vmatprep.subr.bf16.mxu0 0
    %2712 = vmatpush1.bf16.msra.mxu0 0
    %2713 = vmatprep.subr.bf16.mxu0 0
    %2714 = vmatpush1.bf16.msra.mxu0 0
    %2715 = vmatprep.subr.bf16.mxu0 0
    %2716 = vmatpush1.bf16.msra.mxu0 0
    %2717 = vmatprep.subr.bf16.mxu0 0
    %2718 = vmatpush1.bf16.msra.mxu0 0
    %2719 = vmatprep.subr.bf16.mxu0 0
    %2720 = vmatpush1.bf16.msra.mxu0 0
    %2721 = vmatprep.subr.bf16.mxu0 0
    %2722 = vmatpush1.bf16.msra.mxu0 0
    %2723 = vmatprep.mubr.bf16.mxu0 0
    %2724 = vmatmul.mubr.bf16.gmra.mrb[0].mxu0 %v2623
    %v2725 = vpop.f32.mrb[0].mxu0
    %v2726 = vadd.f32 0.0, %v2725
    %v2727 = vpop.f32.mrb[0].mxu0
    %v2728 = vpop.f32.mrb[0].mxu0
    %v2729 = vadd.f32 0.0, %v2728
    %v2730 = vpop.f32.mrb[0].mxu0
    %2731 = vmatprep.mubr.bf16.mxu0 0
    %2732 = vmatmul.mubr.bf16.gmra.mrb[0].mxu0 %v2640
    %v2733 = vpop.f32.mrb[0].mxu0
    %v2734 = vadd.f32 0.0, %v2733
    %v2735 = vpop.f32.mrb[0].mxu0
    %v2736 = vpop.f32.mrb[0].mxu0
    %v2737 = vadd.f32 0.0, %v2736
    %v2738 = vpop.f32.mrb[0].mxu0
    %2739 = vdwg.mxu0
    %v2740 = vadd.f32 %v2584, %v2726
    %v2741 = vadd.f32 %v2585, %v2729
    %v2742 = vadd.f32 %v2586, %v2734
    %v2743 = vadd.f32 %v2587, %v2737
    %v2745 = vunpack.c.l.s4 1983009808
    %v2746 = vunpack.c.0.s8 %v2745
    %v2747 = vlaneseq
    %v2748 = vshrl.u32 %v2747, 7
    %v2749 = vsub.s32 %v2746, %v2748
    %v2750 = vrot.slane %v1911, %v2749
    %v2751 = vcombine.high %v2750, %v2750
    %v2753 = vunpack.c.l.s4 1983009808
    %v2754 = vunpack.c.0.s8 %v2753
    %v2755 = vlaneseq
    %v2756 = vshrl.u32 %v2755, 7
    %v2757 = vsub.s32 %v2754, %v2756
    %v2758 = vrot.slane %v1917, %v2757
    %v2759 = vcombine.high %v2758, %v2758
    %v2761 = vshrl.u32 %v2750, 16
    %v2763 = vrot.slane %v2761, 6
    %v2764 = vshll.u32 %v2750, 16
    %v2766 = vrot.slane %v2764, 7
    %v2767 = vor.u32 %v2763, %v2766
    %v2768 = vrot.slane %v2767, 2
    %v2770 = vshll.u32 %v2751, 16
    %v2772 = vrot.slane %v2770, 7
    %v2773 = vsel %vm254, %v2768, %v2772
    %v2775 = vshrl.u32 %v2758, 16
    %v2777 = vrot.slane %v2775, 6
    %v2778 = vshll.u32 %v2758, 16
    %v2780 = vrot.slane %v2778, 7
    %v2781 = vor.u32 %v2777, %v2780
    %v2782 = vrot.slane %v2781, 2
    %v2784 = vshll.u32 %v2759, 16
    %v2786 = vrot.slane %v2784, 7
    %v2787 = vsel %vm254, %v2782, %v2786
    %s2788 = scalar_lea.vmem [#allocation9], 256
    %v2789 = vld [vmem:[%s2788] sm:$0xf]
    %v2790 = vld [vmem:[%s2788 + $0x4] sm:$0xf]
    %v2791 = vld [vmem:[%s2788 + $0x8] sm:$0xf]
    %v2792 = vld [vmem:[%s2788 + $0xc] sm:$0xf]
    %v2793 = vld [vmem:[%s2788 + $0x10] sm:$0xf]
    %v2794 = vld [vmem:[%s2788 + $0x14] sm:$0xf]
    %v2795 = vld [vmem:[%s2788 + $0x18] sm:$0xf]
    %v2796 = vld [vmem:[%s2788 + $0x1c] sm:$0xf]
    %v2797 = vld [vmem:[%s2788 + $0x20] sm:$0xf]
    %v2798 = vld [vmem:[%s2788 + $0x24] sm:$0xf]
    %v2799 = vld [vmem:[%s2788 + $0x28] sm:$0xf]
    %v2800 = vld [vmem:[%s2788 + $0x2c] sm:$0xf]
    %v2801 = vld [vmem:[%s2788 + $0x30] sm:$0xf]
    %v2802 = vld [vmem:[%s2788 + $0x34] sm:$0xf]
    %v2803 = vld [vmem:[%s2788 + $0x38] sm:$0xf]
    %v2804 = vld [vmem:[%s2788 + $0x3c] sm:$0xf]
    %v2805 = vcombine.low %v2034, %v2048
    %v2806 = vcombine.low %v2062, %v2773
    %v2808 = vunpack.c.l.s4 1983009808
    %v2809 = vunpack.c.0.s8 %v2808
    %v2810 = vlaneseq
    %v2811 = vshrl.u32 %v2810, 7
    %v2812 = vsub.s32 %v2809, %v2811
    %v2813 = vrot.slane %v2805, %v2812
    %v2815 = vunpack.c.l.s4 1983009808
    %v2816 = vunpack.c.0.s8 %v2815
    %v2817 = vlaneseq
    %v2818 = vshrl.u32 %v2817, 7
    %v2819 = vsub.s32 %v2816, %v2818
    %v2820 = vrot.slane %v2806, %v2819
    %v2821 = vcombine.low %v2813, %v2820
    %v2822 = vcombine.low %v2090, %v2104
    %v2823 = vcombine.low %v2118, %v2787
    %v2825 = vunpack.c.l.s4 1983009808
    %v2826 = vunpack.c.0.s8 %v2825
    %v2827 = vlaneseq
    %v2828 = vshrl.u32 %v2827, 7
    %v2829 = vsub.s32 %v2826, %v2828
    %v2830 = vrot.slane %v2822, %v2829
    %v2832 = vunpack.c.l.s4 1983009808
    %v2833 = vunpack.c.0.s8 %v2832
    %v2834 = vlaneseq
    %v2835 = vshrl.u32 %v2834, 7
    %v2836 = vsub.s32 %v2833, %v2835
    %v2837 = vrot.slane %v2823, %v2836
    %v2838 = vcombine.low %v2830, %v2837
    %v2857 = vunpack.c.l.b16 %v2789
    %v2858 = vunpack.c.l.b16 %v2790
    %v2859 = vunpack.c.l.b16 %v2791
    %v2860 = vunpack.c.l.b16 %v2792
    %v2861 = vunpack.c.l.b16 %v2793
    %v2862 = vunpack.c.l.b16 %v2794
    %v2863 = vunpack.c.l.b16 %v2795
    %v2864 = vunpack.c.l.b16 %v2796
    %v2865 = vunpack.c.l.b16 %v2797
    %v2866 = vunpack.c.l.b16 %v2798
    %v2867 = vunpack.c.l.b16 %v2799
    %v2868 = vunpack.c.l.b16 %v2800
    %v2869 = vunpack.c.l.b16 %v2801
    %v2870 = vunpack.c.l.b16 %v2802
    %v2871 = vunpack.c.l.b16 %v2803
    %v2872 = vunpack.c.l.b16 %v2804
    %v2873 = vpack.c.b16 %v2858, %v2857
    %v2874 = vpack.c.b16 %v2860, %v2859
    %v2875 = vpack.c.b16 %v2862, %v2861
    %v2876 = vpack.c.b16 %v2864, %v2863
    %v2877 = vpack.c.b16 %v2866, %v2865
    %v2878 = vpack.c.b16 %v2868, %v2867
    %v2879 = vpack.c.b16 %v2870, %v2869
    %v2880 = vpack.c.b16 %v2872, %v2871
    %2889 = vmatprep.subr.bf16.mxu0 0
    %2890 = vmatpush1.bf16.msra.mxu0 %v2873
    %2891 = vmatprep.subr.bf16.mxu0 0
    %2892 = vmatpush1.bf16.msra.mxu0 %v2874
    %2893 = vmatprep.subr.bf16.mxu0 0
    %2894 = vmatpush1.bf16.msra.mxu0 %v2875
    %2895 = vmatprep.subr.bf16.mxu0 0
    %2896 = vmatpush1.bf16.msra.mxu0 %v2876
    %2897 = vmatprep.subr.bf16.mxu0 0
    %2898 = vmatpush1.bf16.msra.mxu0 %v2877
    %2899 = vmatprep.subr.bf16.mxu0 0
    %2900 = vmatpush1.bf16.msra.mxu0 %v2878
    %2901 = vmatprep.subr.bf16.mxu0 0
    %2902 = vmatpush1.bf16.msra.mxu0 %v2879
    %2903 = vmatprep.subr.bf16.mxu0 0
    %2904 = vmatpush1.bf16.msra.mxu0 %v2880
    %2905 = vmatprep.subr.bf16.mxu0 0
    %2906 = vmatpush1.bf16.msra.mxu0 0
    %2907 = vmatprep.subr.bf16.mxu0 0
    %2908 = vmatpush1.bf16.msra.mxu0 0
    %2909 = vmatprep.subr.bf16.mxu0 0
    %2910 = vmatpush1.bf16.msra.mxu0 0
    %2911 = vmatprep.subr.bf16.mxu0 0
    %2912 = vmatpush1.bf16.msra.mxu0 0
    %2913 = vmatprep.subr.bf16.mxu0 0
    %2914 = vmatpush1.bf16.msra.mxu0 0
    %2915 = vmatprep.subr.bf16.mxu0 0
    %2916 = vmatpush1.bf16.msra.mxu0 0
    %2917 = vmatprep.subr.bf16.mxu0 0
    %2918 = vmatpush1.bf16.msra.mxu0 0
    %2919 = vmatprep.subr.bf16.mxu0 0
    %2920 = vmatpush1.bf16.msra.mxu0 0
    %2921 = vmatprep.mubr.bf16.mxu0 0
    %2922 = vmatmul.mubr.bf16.gmra.mrb[0].mxu0 %v2821
    %v2923 = vpop.f32.mrb[0].mxu0
    %v2924 = vadd.f32 0.0, %v2923
    %v2925 = vpop.f32.mrb[0].mxu0
    %v2926 = vpop.f32.mrb[0].mxu0
    %v2927 = vadd.f32 0.0, %v2926
    %v2928 = vpop.f32.mrb[0].mxu0
    %2929 = vmatprep.mubr.bf16.mxu0 0
    %2930 = vmatmul.mubr.bf16.gmra.mrb[0].mxu0 %v2838
    %v2931 = vpop.f32.mrb[0].mxu0
    %v2932 = vadd.f32 0.0, %v2931
    %v2933 = vpop.f32.mrb[0].mxu0
    %v2934 = vpop.f32.mrb[0].mxu0
    %v2935 = vadd.f32 0.0, %v2934
    %v2936 = vpop.f32.mrb[0].mxu0
    %2937 = vdwg.mxu0
    %v2938 = vadd.f32 %v2740, %v2924
    %v2939 = vadd.f32 %v2741, %v2927
    %v2940 = vadd.f32 %v2742, %v2932
    %v2941 = vadd.f32 %v2743, %v2935
    %v2942 = vrot.slane %v2750, 7
    %v2943 = vrot.slane %v2942, 2
    %v2944 = vrot.slane %v2751, 7
    %v2945 = vsel %vm656, %v2943, %v2944
    %v2946 = vrot.slane %v2758, 7
    %v2947 = vrot.slane %v2946, 2
    %v2948 = vrot.slane %v2759, 7
    %v2949 = vsel %vm656, %v2947, %v2948
    %s2950 = scalar_lea.vmem [#allocation9], 320
    %v2951 = vld [vmem:[%s2950] sm:$0xf]
    %v2952 = vld [vmem:[%s2950 + $0x4] sm:$0xf]
    %v2953 = vld [vmem:[%s2950 + $0x8] sm:$0xf]
    %v2954 = vld [vmem:[%s2950 + $0xc] sm:$0xf]
    %v2955 = vld [vmem:[%s2950 + $0x10] sm:$0xf]
    %v2956 = vld [vmem:[%s2950 + $0x14] sm:$0xf]
    %v2957 = vld [vmem:[%s2950 + $0x18] sm:$0xf]
    %v2958 = vld [vmem:[%s2950 + $0x1c] sm:$0xf]
    %v2959 = vld [vmem:[%s2950 + $0x20] sm:$0xf]
    %v2960 = vld [vmem:[%s2950 + $0x24] sm:$0xf]
    %v2961 = vld [vmem:[%s2950 + $0x28] sm:$0xf]
    %v2962 = vld [vmem:[%s2950 + $0x2c] sm:$0xf]
    %v2963 = vld [vmem:[%s2950 + $0x30] sm:$0xf]
    %v2964 = vld [vmem:[%s2950 + $0x34] sm:$0xf]
    %v2965 = vld [vmem:[%s2950 + $0x38] sm:$0xf]
    %v2966 = vld [vmem:[%s2950 + $0x3c] sm:$0xf]
    %v2967 = vcombine.low %v2409, %v2413
    %v2968 = vcombine.low %v2417, %v2945
    %v2970 = vunpack.c.l.s4 1983009808
    %v2971 = vunpack.c.0.s8 %v2970
    %v2972 = vlaneseq
    %v2973 = vshrl.u32 %v2972, 7
    %v2974 = vsub.s32 %v2971, %v2973
    %v2975 = vrot.slane %v2967, %v2974
    %v2977 = vunpack.c.l.s4 1983009808
    %v2978 = vunpack.c.0.s8 %v2977
    %v2979 = vlaneseq
    %v2980 = vshrl.u32 %v2979, 7
    %v2981 = vsub.s32 %v2978, %v2980
    %v2982 = vrot.slane %v2968, %v2981
    %v2983 = vcombine.low %v2975, %v2982
    %v2984 = vcombine.low %v2425, %v2429
    %v2985 = vcombine.low %v2433, %v2949
    %v2987 = vunpack.c.l.s4 1983009808
    %v2988 = vunpack.c.0.s8 %v2987
    %v2989 = vlaneseq
    %v2990 = vshrl.u32 %v2989, 7
    %v2991 = vsub.s32 %v2988, %v2990
    %v2992 = vrot.slane %v2984, %v2991
    %v2994 = vunpack.c.l.s4 1983009808
    %v2995 = vunpack.c.0.s8 %v2994
    %v2996 = vlaneseq
    %v2997 = vshrl.u32 %v2996, 7
    %v2998 = vsub.s32 %v2995, %v2997
    %v2999 = vrot.slane %v2985, %v2998
    %v3000 = vcombine.low %v2992, %v2999
    %v3019 = vunpack.c.l.b16 %v2951
    %v3020 = vunpack.c.l.b16 %v2952
    %v3021 = vunpack.c.l.b16 %v2953
    %v3022 = vunpack.c.l.b16 %v2954
    %v3023 = vunpack.c.l.b16 %v2955
    %v3024 = vunpack.c.l.b16 %v2956
    %v3025 = vunpack.c.l.b16 %v2957
    %v3026 = vunpack.c.l.b16 %v2958
    %v3027 = vunpack.c.l.b16 %v2959
    %v3028 = vunpack.c.l.b16 %v2960
    %v3029 = vunpack.c.l.b16 %v2961
    %v3030 = vunpack.c.l.b16 %v2962
    %v3031 = vunpack.c.l.b16 %v2963
    %v3032 = vunpack.c.l.b16 %v2964
    %v3033 = vunpack.c.l.b16 %v2965
    %v3034 = vunpack.c.l.b16 %v2966
    %v3035 = vpack.c.b16 %v3020, %v3019
    %v3036 = vpack.c.b16 %v3022, %v3021
    %v3037 = vpack.c.b16 %v3024, %v3023
    %v3038 = vpack.c.b16 %v3026, %v3025
    %v3039 = vpack.c.b16 %v3028, %v3027
    %v3040 = vpack.c.b16 %v3030, %v3029
    %v3041 = vpack.c.b16 %v3032, %v3031
    %v3042 = vpack.c.b16 %v3034, %v3033
    %3051 = vmatprep.subr.bf16.mxu0 0
    %3052 = vmatpush1.bf16.msra.mxu0 %v3035
    %3053 = vmatprep.subr.bf16.mxu0 0
    %3054 = vmatpush1.bf16.msra.mxu0 %v3036
    %3055 = vmatprep.subr.bf16.mxu0 0
    %3056 = vmatpush1.bf16.msra.mxu0 %v3037
    %3057 = vmatprep.subr.bf16.mxu0 0
    %3058 = vmatpush1.bf16.msra.mxu0 %v3038
    %3059 = vmatprep.subr.bf16.mxu0 0
    %3060 = vmatpush1.bf16.msra.mxu0 %v3039
    %3061 = vmatprep.subr.bf16.mxu0 0
    %3062 = vmatpush1.bf16.msra.mxu0 %v3040
    %3063 = vmatprep.subr.bf16.mxu0 0
    %3064 = vmatpush1.bf16.msra.mxu0 %v3041
    %3065 = vmatprep.subr.bf16.mxu0 0
    %3066 = vmatpush1.bf16.msra.mxu0 %v3042
    %3067 = vmatprep.subr.bf16.mxu0 0
    %3068 = vmatpush1.bf16.msra.mxu0 0
    %3069 = vmatprep.subr.bf16.mxu0 0
    %3070 = vmatpush1.bf16.msra.mxu0 0
    %3071 = vmatprep.subr.bf16.mxu0 0
    %3072 = vmatpush1.bf16.msra.mxu0 0
    %3073 = vmatprep.subr.bf16.mxu0 0
    %3074 = vmatpush1.bf16.msra.mxu0 0
    %3075 = vmatprep.subr.bf16.mxu0 0
    %3076 = vmatpush1.bf16.msra.mxu0 0
    %3077 = vmatprep.subr.bf16.mxu0 0
    %3078 = vmatpush1.bf16.msra.mxu0 0
    %3079 = vmatprep.subr.bf16.mxu0 0
    %3080 = vmatpush1.bf16.msra.mxu0 0
    %3081 = vmatprep.subr.bf16.mxu0 0
    %3082 = vmatpush1.bf16.msra.mxu0 0
    %3083 = vmatprep.mubr.bf16.mxu0 0
    %3084 = vmatmul.mubr.bf16.gmra.mrb[0].mxu0 %v2983
    %v3085 = vpop.f32.mrb[0].mxu0
    %v3086 = vadd.f32 0.0, %v3085
    %v3087 = vpop.f32.mrb[0].mxu0
    %v3088 = vpop.f32.mrb[0].mxu0
    %v3089 = vadd.f32 0.0, %v3088
    %v3090 = vpop.f32.mrb[0].mxu0
    %3091 = vmatprep.mubr.bf16.mxu0 0
    %3092 = vmatmul.mubr.bf16.gmra.mrb[0].mxu0 %v3000
    %v3093 = vpop.f32.mrb[0].mxu0
    %v3094 = vadd.f32 0.0, %v3093
    %v3095 = vpop.f32.mrb[0].mxu0
    %v3096 = vpop.f32.mrb[0].mxu0
    %v3097 = vadd.f32 0.0, %v3096
    %v3098 = vpop.f32.mrb[0].mxu0
    %3099 = vdwg.mxu0
    %v3100 = vadd.f32 %v2938, %v3086
    %v3101 = vadd.f32 %v2939, %v3089
    %v3102 = vadd.f32 %v2940, %v3094
    %v3103 = vadd.f32 %v2941, %v3097
    %s3104 = scalar_lea.vmem [#allocation9], 384
    %v3105 = vld [vmem:[%s3104] sm:$0xf]
    %v3106 = vld [vmem:[%s3104 + $0x4] sm:$0xf]
    %v3107 = vld [vmem:[%s3104 + $0x8] sm:$0xf]
    %v3108 = vld [vmem:[%s3104 + $0xc] sm:$0xf]
    %v3109 = vld [vmem:[%s3104 + $0x10] sm:$0xf]
    %v3110 = vld [vmem:[%s3104 + $0x14] sm:$0xf]
    %v3111 = vld [vmem:[%s3104 + $0x18] sm:$0xf]
    %v3112 = vld [vmem:[%s3104 + $0x1c] sm:$0xf]
    %v3113 = vld [vmem:[%s3104 + $0x20] sm:$0xf]
    %v3114 = vld [vmem:[%s3104 + $0x24] sm:$0xf]
    %v3115 = vld [vmem:[%s3104 + $0x28] sm:$0xf]
    %v3116 = vld [vmem:[%s3104 + $0x2c] sm:$0xf]
    %v3117 = vld [vmem:[%s3104 + $0x30] sm:$0xf]
    %v3118 = vld [vmem:[%s3104 + $0x34] sm:$0xf]
    %v3119 = vld [vmem:[%s3104 + $0x38] sm:$0xf]
    %v3120 = vld [vmem:[%s3104 + $0x3c] sm:$0xf]
    %v3123 = vcombine.low %v1911, %v1912
    %v3125 = vunpack.c.l.s4 1983009808
    %v3126 = vunpack.c.0.s8 %v3125
    %v3127 = vlaneseq
    %v3128 = vshrl.u32 %v3127, 7
    %v3129 = vsub.s32 %v3126, %v3128
    %v3130 = vrot.slane %v3123, %v3129
    %v3131 = vcombine.low %v2284, %v3130
    %v3132 = vcombine.low %v1917, %v1918
    %v3134 = vunpack.c.l.s4 1983009808
    %v3135 = vunpack.c.0.s8 %v3134
    %v3136 = vlaneseq
    %v3137 = vshrl.u32 %v3136, 7
    %v3138 = vsub.s32 %v3135, %v3137
    %v3139 = vrot.slane %v3132, %v3138
    %v3140 = vcombine.low %v2301, %v3139
    %v3159 = vunpack.c.l.b16 %v3105
    %v3160 = vunpack.c.l.b16 %v3106
    %v3161 = vunpack.c.l.b16 %v3107
    %v3162 = vunpack.c.l.b16 %v3108
    %v3163 = vunpack.c.l.b16 %v3109
    %v3164 = vunpack.c.l.b16 %v3110
    %v3165 = vunpack.c.l.b16 %v3111
    %v3166 = vunpack.c.l.b16 %v3112
    %v3167 = vunpack.c.l.b16 %v3113
    %v3168 = vunpack.c.l.b16 %v3114
    %v3169 = vunpack.c.l.b16 %v3115
    %v3170 = vunpack.c.l.b16 %v3116
    %v3171 = vunpack.c.l.b16 %v3117
    %v3172 = vunpack.c.l.b16 %v3118
    %v3173 = vunpack.c.l.b16 %v3119
    %v3174 = vunpack.c.l.b16 %v3120
    %v3175 = vpack.c.b16 %v3160, %v3159
    %v3176 = vpack.c.b16 %v3162, %v3161
    %v3177 = vpack.c.b16 %v3164, %v3163
    %v3178 = vpack.c.b16 %v3166, %v3165
    %v3179 = vpack.c.b16 %v3168, %v3167
    %v3180 = vpack.c.b16 %v3170, %v3169
    %v3181 = vpack.c.b16 %v3172, %v3171
    %v3182 = vpack.c.b16 %v3174, %v3173
    %3191 = vmatprep.subr.bf16.mxu0 0
    %3192 = vmatpush1.bf16.msra.mxu0 %v3175
    %3193 = vmatprep.subr.bf16.mxu0 0
    %3194 = vmatpush1.bf16.msra.mxu0 %v3176
    %3195 = vmatprep.subr.bf16.mxu0 0
    %3196 = vmatpush1.bf16.msra.mxu0 %v3177
    %3197 = vmatprep.subr.bf16.mxu0 0
    %3198 = vmatpush1.bf16.msra.mxu0 %v3178
    %3199 = vmatprep.subr.bf16.mxu0 0
    %3200 = vmatpush1.bf16.msra.mxu0 %v3179
    %3201 = vmatprep.subr.bf16.mxu0 0
    %3202 = vmatpush1.bf16.msra.mxu0 %v3180
    %3203 = vmatprep.subr.bf16.mxu0 0
    %3204 = vmatpush1.bf16.msra.mxu0 %v3181
    %3205 = vmatprep.subr.bf16.mxu0 0
    %3206 = vmatpush1.bf16.msra.mxu0 %v3182
    %3207 = vmatprep.subr.bf16.mxu0 0
    %3208 = vmatpush1.bf16.msra.mxu0 0
    %3209 = vmatprep.subr.bf16.mxu0 0
    %3210 = vmatpush1.bf16.msra.mxu0 0
    %3211 = vmatprep.subr.bf16.mxu0 0
    %3212 = vmatpush1.bf16.msra.mxu0 0
    %3213 = vmatprep.subr.bf16.mxu0 0
    %3214 = vmatpush1.bf16.msra.mxu0 0
    %3215 = vmatprep.subr.bf16.mxu0 0
    %3216 = vmatpush1.bf16.msra.mxu0 0
    %3217 = vmatprep.subr.bf16.mxu0 0
    %3218 = vmatpush1.bf16.msra.mxu0 0
    %3219 = vmatprep.subr.bf16.mxu0 0
    %3220 = vmatpush1.bf16.msra.mxu0 0
    %3221 = vmatprep.subr.bf16.mxu0 0
    %3222 = vmatpush1.bf16.msra.mxu0 0
    %3223 = vmatprep.mubr.bf16.mxu0 0
    %3224 = vmatmul.mubr.bf16.gmra.mrb[0].mxu0 %v3131
    %v3225 = vpop.f32.mrb[0].mxu0
    %v3226 = vadd.f32 0.0, %v3225
    %v3227 = vpop.f32.mrb[0].mxu0
    %v3228 = vpop.f32.mrb[0].mxu0
    %v3229 = vadd.f32 0.0, %v3228
    %v3230 = vpop.f32.mrb[0].mxu0
    %3231 = vmatprep.mubr.bf16.mxu0 0
    %3232 = vmatmul.mubr.bf16.gmra.mrb[0].mxu0 %v3140
    %v3233 = vpop.f32.mrb[0].mxu0
    %v3234 = vadd.f32 0.0, %v3233
    %v3235 = vpop.f32.mrb[0].mxu0
    %v3236 = vpop.f32.mrb[0].mxu0
    %v3237 = vadd.f32 0.0, %v3236
    %v3238 = vpop.f32.mrb[0].mxu0
    %3239 = vdwg.mxu0
    %v3240 = vadd.f32 %v3100, %v3226
    %v3241 = vadd.f32 %v3101, %v3229
    %v3242 = vadd.f32 %v3102, %v3234
    %v3243 = vadd.f32 %v3103, %v3237
    %v3245 = vunpack.c.l.s4 1983009808
    %v3246 = vunpack.c.0.s8 %v3245
    %v3247 = vlaneseq
    %v3248 = vshrl.u32 %v3247, 7
    %v3249 = vsub.s32 %v3246, %v3248
    %v3250 = vrot.slane %v1912, %v3249
    %v3251 = vcombine.high %v3250, %v3250
    %v3253 = vunpack.c.l.s4 1983009808
    %v3254 = vunpack.c.0.s8 %v3253
    %v3255 = vlaneseq
    %v3256 = vshrl.u32 %v3255, 7
    %v3257 = vsub.s32 %v3254, %v3256
    %v3258 = vrot.slane %v1918, %v3257
    %v3259 = vcombine.high %v3258, %v3258
    %v3261 = vshrl.u32 %v3250, 16
    %v3263 = vrot.slane %v3261, 6
    %v3264 = vshll.u32 %v3250, 16
    %v3266 = vrot.slane %v3264, 7
    %v3267 = vor.u32 %v3263, %v3266
    %v3268 = vrot.slane %v3267, 2
    %v3270 = vshll.u32 %v3251, 16
    %v3272 = vrot.slane %v3270, 7
    %v3273 = vsel %vm254, %v3268, %v3272
    %v3275 = vshrl.u32 %v3258, 16
    %v3277 = vrot.slane %v3275, 6
    %v3278 = vshll.u32 %v3258, 16
    %v3280 = vrot.slane %v3278, 7
    %v3281 = vor.u32 %v3277, %v3280
    %v3282 = vrot.slane %v3281, 2
    %v3284 = vshll.u32 %v3259, 16
    %v3286 = vrot.slane %v3284, 7
    %v3287 = vsel %vm254, %v3282, %v3286
    %s3288 = scalar_lea.vmem [#allocation9], 448
    %v3289 = vld [vmem:[%s3288] sm:$0xf]
    %v3290 = vld [vmem:[%s3288 + $0x4] sm:$0xf]
    %v3291 = vld [vmem:[%s3288 + $0x8] sm:$0xf]
    %v3292 = vld [vmem:[%s3288 + $0xc] sm:$0xf]
    %v3293 = vld [vmem:[%s3288 + $0x10] sm:$0xf]
    %v3294 = vld [vmem:[%s3288 + $0x14] sm:$0xf]
    %v3295 = vld [vmem:[%s3288 + $0x18] sm:$0xf]
    %v3296 = vld [vmem:[%s3288 + $0x1c] sm:$0xf]
    %v3297 = vld [vmem:[%s3288 + $0x20] sm:$0xf]
    %v3298 = vld [vmem:[%s3288 + $0x24] sm:$0xf]
    %v3299 = vld [vmem:[%s3288 + $0x28] sm:$0xf]
    %v3300 = vld [vmem:[%s3288 + $0x2c] sm:$0xf]
    %v3301 = vld [vmem:[%s3288 + $0x30] sm:$0xf]
    %v3302 = vld [vmem:[%s3288 + $0x34] sm:$0xf]
    %v3303 = vld [vmem:[%s3288 + $0x38] sm:$0xf]
    %v3304 = vld [vmem:[%s3288 + $0x3c] sm:$0xf]
    %v3305 = vcombine.low %v2773, %v3273
    %v3307 = vunpack.c.l.s4 1983009808
    %v3308 = vunpack.c.0.s8 %v3307
    %v3309 = vlaneseq
    %v3310 = vshrl.u32 %v3309, 7
    %v3311 = vsub.s32 %v3308, %v3310
    %v3312 = vrot.slane %v3305, %v3311
    %v3313 = vcombine.low %v2151, %v3312
    %v3314 = vcombine.low %v2787, %v3287
    %v3316 = vunpack.c.l.s4 1983009808
    %v3317 = vunpack.c.0.s8 %v3316
    %v3318 = vlaneseq
    %v3319 = vshrl.u32 %v3318, 7
    %v3320 = vsub.s32 %v3317, %v3319
    %v3321 = vrot.slane %v3314, %v3320
    %v3322 = vcombine.low %v2168, %v3321
    %v3341 = vunpack.c.l.b16 %v3289
    %v3342 = vunpack.c.l.b16 %v3290
    %v3343 = vunpack.c.l.b16 %v3291
    %v3344 = vunpack.c.l.b16 %v3292
    %v3345 = vunpack.c.l.b16 %v3293
    %v3346 = vunpack.c.l.b16 %v3294
    %v3347 = vunpack.c.l.b16 %v3295
    %v3348 = vunpack.c.l.b16 %v3296
    %v3349 = vunpack.c.l.b16 %v3297
    %v3350 = vunpack.c.l.b16 %v3298
    %v3351 = vunpack.c.l.b16 %v3299
    %v3352 = vunpack.c.l.b16 %v3300
    %v3353 = vunpack.c.l.b16 %v3301
    %v3354 = vunpack.c.l.b16 %v3302
    %v3355 = vunpack.c.l.b16 %v3303
    %v3356 = vunpack.c.l.b16 %v3304
    %v3357 = vpack.c.b16 %v3342, %v3341
    %v3358 = vpack.c.b16 %v3344, %v3343
    %v3359 = vpack.c.b16 %v3346, %v3345
    %v3360 = vpack.c.b16 %v3348, %v3347
    %v3361 = vpack.c.b16 %v3350, %v3349
    %v3362 = vpack.c.b16 %v3352, %v3351
    %v3363 = vpack.c.b16 %v3354, %v3353
    %v3364 = vpack.c.b16 %v3356, %v3355
    %3373 = vmatprep.subr.bf16.mxu0 0
    %3374 = vmatpush1.bf16.msra.mxu0 %v3357
    %3375 = vmatprep.subr.bf16.mxu0 0
    %3376 = vmatpush1.bf16.msra.mxu0 %v3358
    %3377 = vmatprep.subr.bf16.mxu0 0
    %3378 = vmatpush1.bf16.msra.mxu0 %v3359
    %3379 = vmatprep.subr.bf16.mxu0 0
    %3380 = vmatpush1.bf16.msra.mxu0 %v3360
    %3381 = vmatprep.subr.bf16.mxu0 0
    %3382 = vmatpush1.bf16.msra.mxu0 %v3361
    %3383 = vmatprep.subr.bf16.mxu0 0
    %3384 = vmatpush1.bf16.msra.mxu0 %v3362
    %3385 = vmatprep.subr.bf16.mxu0 0
    %3386 = vmatpush1.bf16.msra.mxu0 %v3363
    %3387 = vmatprep.subr.bf16.mxu0 0
    %3388 = vmatpush1.bf16.msra.mxu0 %v3364
    %3389 = vmatprep.subr.bf16.mxu0 0
    %3390 = vmatpush1.bf16.msra.mxu0 0
    %3391 = vmatprep.subr.bf16.mxu0 0
    %3392 = vmatpush1.bf16.msra.mxu0 0
    %3393 = vmatprep.subr.bf16.mxu0 0
    %3394 = vmatpush1.bf16.msra.mxu0 0
    %3395 = vmatprep.subr.bf16.mxu0 0
    %3396 = vmatpush1.bf16.msra.mxu0 0
    %3397 = vmatprep.subr.bf16.mxu0 0
    %3398 = vmatpush1.bf16.msra.mxu0 0
    %3399 = vmatprep.subr.bf16.mxu0 0
    %3400 = vmatpush1.bf16.msra.mxu0 0
    %3401 = vmatprep.subr.bf16.mxu0 0
    %3402 = vmatpush1.bf16.msra.mxu0 0
    %3403 = vmatprep.subr.bf16.mxu0 0
    %3404 = vmatpush1.bf16.msra.mxu0 0
    %3405 = vmatprep.mubr.bf16.mxu0 0
    %3406 = vmatmul.mubr.bf16.gmra.mrb[0].mxu0 %v3313
    %v3407 = vpop.f32.mrb[0].mxu0
    %v3408 = vadd.f32 0.0, %v3407
    %v3409 = vpop.f32.mrb[0].mxu0
    %v3410 = vpop.f32.mrb[0].mxu0
    %v3411 = vadd.f32 0.0, %v3410
    %v3412 = vpop.f32.mrb[0].mxu0
    %3413 = vmatprep.mubr.bf16.mxu0 0
    %3414 = vmatmul.mubr.bf16.gmra.mrb[0].mxu0 %v3322
    %v3415 = vpop.f32.mrb[0].mxu0
    %v3416 = vadd.f32 0.0, %v3415
    %v3417 = vpop.f32.mrb[0].mxu0
    %v3418 = vpop.f32.mrb[0].mxu0
    %v3419 = vadd.f32 0.0, %v3418
    %v3420 = vpop.f32.mrb[0].mxu0
    %3421 = vdwg.mxu0
    %v3422 = vadd.f32 %v3240, %v3408
    %v3423 = vadd.f32 %v3241, %v3411
    %v3424 = vadd.f32 %v3242, %v3416
    %v3425 = vadd.f32 %v3243, %v3419
    %v3426 = vrot.slane %v3250, 7
    %v3427 = vrot.slane %v3426, 2
    %v3428 = vrot.slane %v3251, 7
    %v3429 = vsel %vm656, %v3427, %v3428
    %v3430 = vrot.slane %v3258, 7
    %v3431 = vrot.slane %v3430, 2
    %v3432 = vrot.slane %v3259, 7
    %v3433 = vsel %vm656, %v3431, %v3432
    %s3434 = scalar_lea.vmem [#allocation9], 512
    %v3435 = vld [vmem:[%s3434] sm:$0xf]
    %v3436 = vld [vmem:[%s3434 + $0x4] sm:$0xf]
    %v3437 = vld [vmem:[%s3434 + $0x8] sm:$0xf]
    %v3438 = vld [vmem:[%s3434 + $0xc] sm:$0xf]
    %v3439 = vld [vmem:[%s3434 + $0x10] sm:$0xf]
    %v3440 = vld [vmem:[%s3434 + $0x14] sm:$0xf]
    %v3441 = vld [vmem:[%s3434 + $0x18] sm:$0xf]
    %v3442 = vld [vmem:[%s3434 + $0x1c] sm:$0xf]
    %v3443 = vld [vmem:[%s3434 + $0x20] sm:$0xf]
    %v3444 = vld [vmem:[%s3434 + $0x24] sm:$0xf]
    %v3445 = vld [vmem:[%s3434 + $0x28] sm:$0xf]
    %v3446 = vld [vmem:[%s3434 + $0x2c] sm:$0xf]
    %v3447 = vld [vmem:[%s3434 + $0x30] sm:$0xf]
    %v3448 = vld [vmem:[%s3434 + $0x34] sm:$0xf]
    %v3449 = vld [vmem:[%s3434 + $0x38] sm:$0xf]
    %v3450 = vld [vmem:[%s3434 + $0x3c] sm:$0xf]
    %v3451 = vcombine.low %v2945, %v3429
    %v3453 = vunpack.c.l.s4 1983009808
    %v3454 = vunpack.c.0.s8 %v3453
    %v3455 = vlaneseq
    %v3456 = vshrl.u32 %v3455, 7
    %v3457 = vsub.s32 %v3454, %v3456
    %v3458 = vrot.slane %v3451, %v3457
    %v3459 = vcombine.low %v2466, %v3458
    %v3460 = vcombine.low %v2949, %v3433
    %v3462 = vunpack.c.l.s4 1983009808
    %v3463 = vunpack.c.0.s8 %v3462
    %v3464 = vlaneseq
    %v3465 = vshrl.u32 %v3464, 7
    %v3466 = vsub.s32 %v3463, %v3465
    %v3467 = vrot.slane %v3460, %v3466
    %v3468 = vcombine.low %v2483, %v3467
    %v3487 = vunpack.c.l.b16 %v3435
    %v3488 = vunpack.c.l.b16 %v3436
    %v3489 = vunpack.c.l.b16 %v3437
    %v3490 = vunpack.c.l.b16 %v3438
    %v3491 = vunpack.c.l.b16 %v3439
    %v3492 = vunpack.c.l.b16 %v3440
    %v3493 = vunpack.c.l.b16 %v3441
    %v3494 = vunpack.c.l.b16 %v3442
    %v3495 = vunpack.c.l.b16 %v3443
    %v3496 = vunpack.c.l.b16 %v3444
    %v3497 = vunpack.c.l.b16 %v3445
    %v3498 = vunpack.c.l.b16 %v3446
    %v3499 = vunpack.c.l.b16 %v3447
    %v3500 = vunpack.c.l.b16 %v3448
    %v3501 = vunpack.c.l.b16 %v3449
    %v3502 = vunpack.c.l.b16 %v3450
    %v3503 = vpack.c.b16 %v3488, %v3487
    %v3504 = vpack.c.b16 %v3490, %v3489
    %v3505 = vpack.c.b16 %v3492, %v3491
    %v3506 = vpack.c.b16 %v3494, %v3493
    %v3507 = vpack.c.b16 %v3496, %v3495
    %v3508 = vpack.c.b16 %v3498, %v3497
    %v3509 = vpack.c.b16 %v3500, %v3499
    %v3510 = vpack.c.b16 %v3502, %v3501
    %3519 = vmatprep.subr.bf16.mxu0 0
    %3520 = vmatpush1.bf16.msra.mxu0 %v3503
    %3521 = vmatprep.subr.bf16.mxu0 0
    %3522 = vmatpush1.bf16.msra.mxu0 %v3504
    %3523 = vmatprep.subr.bf16.mxu0 0
    %3524 = vmatpush1.bf16.msra.mxu0 %v3505
    %3525 = vmatprep.subr.bf16.mxu0 0
    %3526 = vmatpush1.bf16.msra.mxu0 %v3506
    %3527 = vmatprep.subr.bf16.mxu0 0
    %3528 = vmatpush1.bf16.msra.mxu0 %v3507
    %3529 = vmatprep.subr.bf16.mxu0 0
    %3530 = vmatpush1.bf16.msra.mxu0 %v3508
    %3531 = vmatprep.subr.bf16.mxu0 0
    %3532 = vmatpush1.bf16.msra.mxu0 %v3509
    %3533 = vmatprep.subr.bf16.mxu0 0
    %3534 = vmatpush1.bf16.msra.mxu0 %v3510
    %3535 = vmatprep.subr.bf16.mxu0 0
    %3536 = vmatpush1.bf16.msra.mxu0 0
    %3537 = vmatprep.subr.bf16.mxu0 0
    %3538 = vmatpush1.bf16.msra.mxu0 0
    %3539 = vmatprep.subr.bf16.mxu0 0
    %3540 = vmatpush1.bf16.msra.mxu0 0
    %3541 = vmatprep.subr.bf16.mxu0 0
    %3542 = vmatpush1.bf16.msra.mxu0 0
    %3543 = vmatprep.subr.bf16.mxu0 0
    %3544 = vmatpush1.bf16.msra.mxu0 0
    %3545 = vmatprep.subr.bf16.mxu0 0
    %3546 = vmatpush1.bf16.msra.mxu0 0
    %3547 = vmatprep.subr.bf16.mxu0 0
    %3548 = vmatpush1.bf16.msra.mxu0 0
    %3549 = vmatprep.subr.bf16.mxu0 0
    %3550 = vmatpush1.bf16.msra.mxu0 0
    %3551 = vmatprep.mubr.bf16.mxu0 0
    %3552 = vmatmul.mubr.bf16.gmra.mrb[0].mxu0 %v3459
    %v3553 = vpop.f32.mrb[0].mxu0
    %v3554 = vadd.f32 0.0, %v3553
    %v3555 = vpop.f32.mrb[0].mxu0
    %v3556 = vpop.f32.mrb[0].mxu0
    %v3557 = vadd.f32 0.0, %v3556
    %v3558 = vpop.f32.mrb[0].mxu0
    %3559 = vmatprep.mubr.bf16.mxu0 0
    %3560 = vmatmul.mubr.bf16.gmra.mrb[0].mxu0 %v3468
    %v3561 = vpop.f32.mrb[0].mxu0
    %v3562 = vadd.f32 0.0, %v3561
    %v3563 = vpop.f32.mrb[0].mxu0
    %v3564 = vpop.f32.mrb[0].mxu0
    %v3565 = vadd.f32 0.0, %v3564
    %v3566 = vpop.f32.mrb[0].mxu0
    %3567 = vdwg.mxu0
    %v3568 = vadd.f32 %v3422, %v3554
    %v3569 = vadd.f32 %v3423, %v3557
    %v3570 = vadd.f32 %v3424, %v3562
    %v3571 = vadd.f32 %v3425, %v3565
    %v3572 = vld [vmem:[%s5] sm:$0x1]
    %v3574 = vlaneseq
    %v3575 = vshrl.u32 %v3574, 7
    %v3576 = vsub.s32 0, %v3575
    %v3577 = vrot.slane %v3572, %v3576
    %v3579 = vmul.f32 %v3568, %v3577
    %v3580 = vmul.f32 %v3569, %v3577
    %v3581 = vmul.f32 %v3570, %v3577
    %v3582 = vmul.f32 %v3571, %v3577
    %v3583 = vld [vmem:[%s6] sm:$0x1]
    %v3585 = vlaneseq
    %v3586 = vshrl.u32 %v3585, 7
    %v3587 = vsub.s32 0, %v3586
    %v3588 = vrot.slane %v3583, %v3587
    %v3590 = vadd.f32 %v3579, %v3588
    %v3591 = vadd.f32 %v3580, %v3588
    %v3592 = vadd.f32 %v3581, %v3588
    %v3593 = vadd.f32 %v3582, %v3588
    %v3594 = vmax.f32 %v3590, 0.0
    %v3595 = vmax.f32 %v3591, 0.0
    %v3596 = vmax.f32 %v3592, 0.0
    %v3597 = vmax.f32 %v3593, 0.0
    %v3598 = vpack.c.bf16 %v3595, %v3594
    %v3599 = vpack.c.bf16 %v3597, %v3596
    %v3600 = vld [vmem:[#allocation10] sm:$0xff]
    %v3601 = vld [vmem:[#allocation10 + $0x8] sm:$0xff]
    %v3602 = vld [vmem:[#allocation10 + $0x10] sm:$0xff]
    %v3603 = vld [vmem:[#allocation10 + $0x18] sm:$0xff]
    %v3604 = vld [vmem:[#allocation10 + $0x20] sm:$0xff]
    %v3605 = vld [vmem:[#allocation10 + $0x28] sm:$0xff]
    %v3606 = vld [vmem:[#allocation10 + $0x30] sm:$0xff]
    %v3607 = vld [vmem:[#allocation10 + $0x38] sm:$0xff]
    %v3608 = vld [vmem:[#allocation10 + $0x40] sm:$0xff]
    %v3609 = vld [vmem:[#allocation10 + $0x48] sm:$0xff]
    %v3610 = vld [vmem:[#allocation10 + $0x50] sm:$0xff]
    %v3611 = vld [vmem:[#allocation10 + $0x58] sm:$0xff]
    %v3612 = vld [vmem:[#allocation10 + $0x60] sm:$0xff]
    %v3613 = vld [vmem:[#allocation10 + $0x68] sm:$0xff]
    %v3614 = vld [vmem:[#allocation10 + $0x70] sm:$0xff]
    %v3615 = vld [vmem:[#allocation10 + $0x78] sm:$0xff]
    %v3616 = vld [vmem:[#allocation10 + $0x80] sm:$0xff]
    %v3617 = vld [vmem:[#allocation10 + $0x88] sm:$0xff]
    %v3618 = vld [vmem:[#allocation10 + $0x90] sm:$0xff]
    %v3619 = vld [vmem:[#allocation10 + $0x98] sm:$0xff]
    %v3620 = vld [vmem:[#allocation10 + $0xa0] sm:$0xff]
    %v3621 = vld [vmem:[#allocation10 + $0xa8] sm:$0xff]
    %v3622 = vld [vmem:[#allocation10 + $0xb0] sm:$0xff]
    %v3623 = vld [vmem:[#allocation10 + $0xb8] sm:$0xff]
    %v3624 = vld [vmem:[#allocation10 + $0xc0] sm:$0xff]
    %v3625 = vld [vmem:[#allocation10 + $0xc8] sm:$0xff]
    %v3626 = vld [vmem:[#allocation10 + $0xd0] sm:$0xff]
    %v3627 = vld [vmem:[#allocation10 + $0xd8] sm:$0xff]
    %v3628 = vld [vmem:[#allocation10 + $0xe0] sm:$0xff]
    %v3629 = vld [vmem:[#allocation10 + $0xe8] sm:$0xff]
    %v3630 = vld [vmem:[#allocation10 + $0xf0] sm:$0xff]
    %v3631 = vld [vmem:[#allocation10 + $0xf8] sm:$0xff]
    %v3632 = vld [vmem:[%s8] sm:$0xf]
    %v3634 = vlaneseq
    %v3635 = vshrl.u32 %v3634, 7
    %v3636 = vsub.s32 0, %v3635
    %v3637 = vrot.slane %v3632, %v3636
    %v3638 = vlaneseq
    %v3639 = vshrl.u32 %v3638, 7
    %v3640 = vsub.s32 1, %v3639
    %v3641 = vrot.slane %v3632, %v3640
    %v3642 = vlaneseq
    %v3643 = vshrl.u32 %v3642, 7
    %v3644 = vsub.s32 2, %v3643
    %v3645 = vrot.slane %v3632, %v3644
    %v3646 = vlaneseq
    %v3647 = vshrl.u32 %v3646, 7
    %v3648 = vsub.s32 3, %v3647
    %v3649 = vrot.slane %v3632, %v3648
    %v3686 = vunpack.c.l.b16 %v3600
    %v3687 = vunpack.c.h.b16 %v3600
    %v3688 = vunpack.c.l.b16 %v3601
    %v3689 = vunpack.c.h.b16 %v3601
    %v3690 = vunpack.c.l.b16 %v3602
    %v3691 = vunpack.c.h.b16 %v3602
    %v3692 = vunpack.c.l.b16 %v3603
    %v3693 = vunpack.c.h.b16 %v3603
    %v3694 = vunpack.c.l.b16 %v3604
    %v3695 = vunpack.c.h.b16 %v3604
    %v3696 = vunpack.c.l.b16 %v3605
    %v3697 = vunpack.c.h.b16 %v3605
    %v3698 = vunpack.c.l.b16 %v3606
    %v3699 = vunpack.c.h.b16 %v3606
    %v3700 = vunpack.c.l.b16 %v3607
    %v3701 = vunpack.c.h.b16 %v3607
    %v3702 = vunpack.c.l.b16 %v3608
    %v3703 = vunpack.c.h.b16 %v3608
    %v3704 = vunpack.c.l.b16 %v3609
    %v3705 = vunpack.c.h.b16 %v3609
    %v3706 = vunpack.c.l.b16 %v3610
    %v3707 = vunpack.c.h.b16 %v3610
    %v3708 = vunpack.c.l.b16 %v3611
    %v3709 = vunpack.c.h.b16 %v3611
    %v3710 = vunpack.c.l.b16 %v3612
    %v3711 = vunpack.c.h.b16 %v3612
    %v3712 = vunpack.c.l.b16 %v3613
    %v3713 = vunpack.c.h.b16 %v3613
    %v3714 = vunpack.c.l.b16 %v3614
    %v3715 = vunpack.c.h.b16 %v3614
    %v3716 = vunpack.c.l.b16 %v3615
    %v3717 = vunpack.c.h.b16 %v3615
    %v3718 = vunpack.c.l.b16 %v3616
    %v3719 = vunpack.c.h.b16 %v3616
    %v3720 = vunpack.c.l.b16 %v3617
    %v3721 = vunpack.c.h.b16 %v3617
    %v3722 = vunpack.c.l.b16 %v3618
    %v3723 = vunpack.c.h.b16 %v3618
    %v3724 = vunpack.c.l.b16 %v3619
    %v3725 = vunpack.c.h.b16 %v3619
    %v3726 = vunpack.c.l.b16 %v3620
    %v3727 = vunpack.c.h.b16 %v3620
    %v3728 = vunpack.c.l.b16 %v3621
    %v3729 = vunpack.c.h.b16 %v3621
    %v3730 = vunpack.c.l.b16 %v3622
    %v3731 = vunpack.c.h.b16 %v3622
    %v3732 = vunpack.c.l.b16 %v3623
    %v3733 = vunpack.c.h.b16 %v3623
    %v3734 = vunpack.c.l.b16 %v3624
    %v3735 = vunpack.c.h.b16 %v3624
    %v3736 = vunpack.c.l.b16 %v3625
    %v3737 = vunpack.c.h.b16 %v3625
    %v3738 = vunpack.c.l.b16 %v3626
    %v3739 = vunpack.c.h.b16 %v3626
    %v3740 = vunpack.c.l.b16 %v3627
    %v3741 = vunpack.c.h.b16 %v3627
    %v3742 = vunpack.c.l.b16 %v3628
    %v3743 = vunpack.c.h.b16 %v3628
    %v3744 = vunpack.c.l.b16 %v3629
    %v3745 = vunpack.c.h.b16 %v3629
    %v3746 = vunpack.c.l.b16 %v3630
    %v3747 = vunpack.c.h.b16 %v3630
    %v3748 = vunpack.c.l.b16 %v3631
    %v3749 = vunpack.c.h.b16 %v3631
    %v3750 = vpack.c.b16 %v3690, %v3686
    %v3751 = vpack.c.b16 %v3691, %v3687
    %v3752 = vpack.c.b16 %v3692, %v3688
    %v3753 = vpack.c.b16 %v3693, %v3689
    %v3754 = vpack.c.b16 %v3698, %v3694
    %v3755 = vpack.c.b16 %v3699, %v3695
    %v3756 = vpack.c.b16 %v3700, %v3696
    %v3757 = vpack.c.b16 %v3701, %v3697
    %v3758 = vpack.c.b16 %v3706, %v3702
    %v3759 = vpack.c.b16 %v3707, %v3703
    %v3760 = vpack.c.b16 %v3708, %v3704
    %v3761 = vpack.c.b16 %v3709, %v3705
    %v3762 = vpack.c.b16 %v3714, %v3710
    %v3763 = vpack.c.b16 %v3715, %v3711
    %v3764 = vpack.c.b16 %v3716, %v3712
    %v3765 = vpack.c.b16 %v3717, %v3713
    %v3766 = vpack.c.b16 %v3722, %v3718
    %v3767 = vpack.c.b16 %v3723, %v3719
    %v3768 = vpack.c.b16 %v3724, %v3720
    %v3769 = vpack.c.b16 %v3725, %v3721
    %v3770 = vpack.c.b16 %v3730, %v3726
    %v3771 = vpack.c.b16 %v3731, %v3727
    %v3772 = vpack.c.b16 %v3732, %v3728
    %v3773 = vpack.c.b16 %v3733, %v3729
    %v3774 = vpack.c.b16 %v3738, %v3734
    %v3775 = vpack.c.b16 %v3739, %v3735
    %v3776 = vpack.c.b16 %v3740, %v3736
    %v3777 = vpack.c.b16 %v3741, %v3737
    %v3778 = vpack.c.b16 %v3746, %v3742
    %v3779 = vpack.c.b16 %v3747, %v3743
    %v3780 = vpack.c.b16 %v3748, %v3744
    %v3781 = vpack.c.b16 %v3749, %v3745
    %3814 = vmatprep.subr.bf16.mxu0 %v3751
    %3815 = vmatpush1.bf16.msra.mxu0 %v3750
    %3816 = vmatprep.subr.bf16.mxu0 %v3755
    %3817 = vmatpush1.bf16.msra.mxu0 %v3754
    %3818 = vmatprep.subr.bf16.mxu0 %v3759
    %3819 = vmatpush1.bf16.msra.mxu0 %v3758
    %3820 = vmatprep.subr.bf16.mxu0 %v3763
    %3821 = vmatpush1.bf16.msra.mxu0 %v3762
    %3822 = vmatprep.subr.bf16.mxu0 %v3767
    %3823 = vmatpush1.bf16.msra.mxu0 %v3766
    %3824 = vmatprep.subr.bf16.mxu0 %v3771
    %3825 = vmatpush1.bf16.msra.mxu0 %v3770
    %3826 = vmatprep.subr.bf16.mxu0 %v3775
    %3827 = vmatpush1.bf16.msra.mxu0 %v3774
    %3828 = vmatprep.subr.bf16.mxu0 %v3779
    %3829 = vmatpush1.bf16.msra.mxu0 %v3778
    %3830 = vmatprep.subr.bf16.mxu0 0
    %3831 = vmatpush1.bf16.msra.mxu0 0
    %3832 = vmatprep.subr.bf16.mxu0 0
    %3833 = vmatpush1.bf16.msra.mxu0 0
    %3834 = vmatprep.subr.bf16.mxu0 0
    %3835 = vmatpush1.bf16.msra.mxu0 0
    %3836 = vmatprep.subr.bf16.mxu0 0
    %3837 = vmatpush1.bf16.msra.mxu0 0
    %3838 = vmatprep.subr.bf16.mxu0 0
    %3839 = vmatpush1.bf16.msra.mxu0 0
    %3840 = vmatprep.subr.bf16.mxu0 0
    %3841 = vmatpush1.bf16.msra.mxu0 0
    %3842 = vmatprep.subr.bf16.mxu0 0
    %3843 = vmatpush1.bf16.msra.mxu0 0
    %3844 = vmatprep.subr.bf16.mxu0 0
    %3845 = vmatpush1.bf16.msra.mxu0 0
    %3846 = vmatprep.mubr.bf16.mxu0 0
    %3847 = vmatmul.mubr.bf16.gmra.mrb[0].mxu0 %v3598
    %v3848 = vpop.f32.mrb[0].mxu0
    %v3849 = vadd.f32 %v3637, %v3848
    %v3850 = vpop.f32.mrb[0].mxu0
    %v3851 = vadd.f32 %v3641, %v3850
    %v3852 = vpop.f32.mrb[0].mxu0
    %v3853 = vadd.f32 %v3637, %v3852
    %v3854 = vpop.f32.mrb[0].mxu0
    %v3855 = vadd.f32 %v3641, %v3854
    %3856 = vmatprep.mubr.bf16.mxu0 0
    %3857 = vmatmul.mubr.bf16.gmra.mrb[0].mxu0 %v3599
    %v3858 = vpop.f32.mrb[0].mxu0
    %v3859 = vadd.f32 %v3637, %v3858
    %v3860 = vpop.f32.mrb[0].mxu0
    %v3861 = vadd.f32 %v3641, %v3860
    %v3862 = vpop.f32.mrb[0].mxu0
    %v3863 = vadd.f32 %v3637, %v3862
    %v3864 = vpop.f32.mrb[0].mxu0
    %v3865 = vadd.f32 %v3641, %v3864
    %3866 = vdwg.mxu0
    %3867 = vmatprep.subr.bf16.mxu0 %v3753
    %3868 = vmatpush1.bf16.msra.mxu0 %v3752
    %3869 = vmatprep.subr.bf16.mxu0 %v3757
    %3870 = vmatpush1.bf16.msra.mxu0 %v3756
    %3871 = vmatprep.subr.bf16.mxu0 %v3761
    %3872 = vmatpush1.bf16.msra.mxu0 %v3760
    %3873 = vmatprep.subr.bf16.mxu0 %v3765
    %3874 = vmatpush1.bf16.msra.mxu0 %v3764
    %3875 = vmatprep.subr.bf16.mxu0 %v3769
    %3876 = vmatpush1.bf16.msra.mxu0 %v3768
    %3877 = vmatprep.subr.bf16.mxu0 %v3773
    %3878 = vmatpush1.bf16.msra.mxu0 %v3772
    %3879 = vmatprep.subr.bf16.mxu0 %v3777
    %3880 = vmatpush1.bf16.msra.mxu0 %v3776
    %3881 = vmatprep.subr.bf16.mxu0 %v3781
    %3882 = vmatpush1.bf16.msra.mxu0 %v3780
    %3883 = vmatprep.subr.bf16.mxu0 0
    %3884 = vmatpush1.bf16.msra.mxu0 0
    %3885 = vmatprep.subr.bf16.mxu0 0
    %3886 = vmatpush1.bf16.msra.mxu0 0
    %3887 = vmatprep.subr.bf16.mxu0 0
    %3888 = vmatpush1.bf16.msra.mxu0 0
    %3889 = vmatprep.subr.bf16.mxu0 0
    %3890 = vmatpush1.bf16.msra.mxu0 0
    %3891 = vmatprep.subr.bf16.mxu0 0
    %3892 = vmatpush1.bf16.msra.mxu0 0
    %3893 = vmatprep.subr.bf16.mxu0 0
    %3894 = vmatpush1.bf16.msra.mxu0 0
    %3895 = vmatprep.subr.bf16.mxu0 0
    %3896 = vmatpush1.bf16.msra.mxu0 0
    %3897 = vmatprep.subr.bf16.mxu0 0
    %3898 = vmatpush1.bf16.msra.mxu0 0
    %3899 = vmatprep.mubr.bf16.mxu0 0
    %3900 = vmatmul.mubr.bf16.gmra.mrb[0].mxu0 %v3598
    %v3901 = vpop.f32.mrb[0].mxu0
    %v3902 = vadd.f32 %v3645, %v3901
    %v3903 = vpop.f32.mrb[0].mxu0
    %v3904 = vadd.f32 %v3649, %v3903
    %v3905 = vpop.f32.mrb[0].mxu0
    %v3906 = vadd.f32 %v3645, %v3905
    %v3907 = vpop.f32.mrb[0].mxu0
    %v3908 = vadd.f32 %v3649, %v3907
    %3909 = vmatprep.mubr.bf16.mxu0 0
    %3910 = vmatmul.mubr.bf16.gmra.mrb[0].mxu0 %v3599
    %v3911 = vpop.f32.mrb[0].mxu0
    %v3912 = vadd.f32 %v3645, %v3911
    %v3913 = vpop.f32.mrb[0].mxu0
    %v3914 = vadd.f32 %v3649, %v3913
    %v3915 = vpop.f32.mrb[0].mxu0
    %v3916 = vadd.f32 %v3645, %v3915
    %v3917 = vpop.f32.mrb[0].mxu0
    %v3918 = vadd.f32 %v3649, %v3917
    %3919 = vdwg.mxu0
    %v3928 = vcombine.low %v3849, %v3851
    %v3929 = vcombine.high %v3849, %v3851
    %v3930 = vcombine.low %v3853, %v3855
    %v3931 = vcombine.high %v3853, %v3855
    %v3932 = vcombine.low %v3859, %v3861
    %v3933 = vcombine.high %v3859, %v3861
    %v3934 = vcombine.low %v3863, %v3865
    %v3935 = vcombine.high %v3863, %v3865
    %v3944 = vcombine.high %v3928, %v3928
    %v3945 = vcombine.high %v3929, %v3929
    %v3946 = vcombine.high %v3930, %v3930
    %v3947 = vcombine.high %v3931, %v3931
    %v3948 = vcombine.high %v3932, %v3932
    %v3949 = vcombine.high %v3933, %v3933
    %v3950 = vcombine.high %v3934, %v3934
    %v3951 = vcombine.high %v3935, %v3935
    %v3960 = vpack.c.bf16 %v3928, %v3928
    %v3961 = vpack.c.bf16 %v3944, %v3944
    %v3962 = vpack.c.bf16 %v3929, %v3929
    %v3963 = vpack.c.bf16 %v3945, %v3945
    %v3964 = vpack.c.bf16 %v3930, %v3930
    %v3965 = vpack.c.bf16 %v3946, %v3946
    %v3966 = vpack.c.bf16 %v3931, %v3931
    %v3967 = vpack.c.bf16 %v3947, %v3947
    %v3968 = vpack.c.bf16 %v3932, %v3932
    %v3969 = vpack.c.bf16 %v3948, %v3948
    %v3970 = vpack.c.bf16 %v3933, %v3933
    %v3971 = vpack.c.bf16 %v3949, %v3949
    %v3972 = vpack.c.bf16 %v3934, %v3934
    %v3973 = vpack.c.bf16 %v3950, %v3950
    %v3974 = vpack.c.bf16 %v3935, %v3935
    %v3975 = vpack.c.bf16 %v3951, %v3951
    %v3992 = vcombine.low %v3960, %v3961
    %v3994 = vunpack.c.l.s4 1983009808
    %v3995 = vunpack.c.0.s8 %v3994
    %v3996 = vlaneseq
    %v3997 = vshrl.u32 %v3996, 7
    %v3998 = vsub.s32 %v3995, %v3997
    %v3999 = vrot.slane %v3992, %v3998
    %v4000 = vcombine.low %v3962, %v3963
    %v4002 = vunpack.c.l.s4 1983009808
    %v4003 = vunpack.c.0.s8 %v4002
    %v4004 = vlaneseq
    %v4005 = vshrl.u32 %v4004, 7
    %v4006 = vsub.s32 %v4003, %v4005
    %v4007 = vrot.slane %v4000, %v4006
    %v4008 = vcombine.low %v3964, %v3965
    %v4010 = vunpack.c.l.s4 1983009808
    %v4011 = vunpack.c.0.s8 %v4010
    %v4012 = vlaneseq
    %v4013 = vshrl.u32 %v4012, 7
    %v4014 = vsub.s32 %v4011, %v4013
    %v4015 = vrot.slane %v4008, %v4014
    %v4016 = vcombine.low %v3966, %v3967
    %v4018 = vunpack.c.l.s4 1983009808
    %v4019 = vunpack.c.0.s8 %v4018
    %v4020 = vlaneseq
    %v4021 = vshrl.u32 %v4020, 7
    %v4022 = vsub.s32 %v4019, %v4021
    %v4023 = vrot.slane %v4016, %v4022
    %v4024 = vcombine.low %v3968, %v3969
    %v4026 = vunpack.c.l.s4 1983009808
    %v4027 = vunpack.c.0.s8 %v4026
    %v4028 = vlaneseq
    %v4029 = vshrl.u32 %v4028, 7
    %v4030 = vsub.s32 %v4027, %v4029
    %v4031 = vrot.slane %v4024, %v4030
    %v4032 = vcombine.low %v3970, %v3971
    %v4034 = vunpack.c.l.s4 1983009808
    %v4035 = vunpack.c.0.s8 %v4034
    %v4036 = vlaneseq
    %v4037 = vshrl.u32 %v4036, 7
    %v4038 = vsub.s32 %v4035, %v4037
    %v4039 = vrot.slane %v4032, %v4038
    %v4040 = vcombine.low %v3972, %v3973
    %v4042 = vunpack.c.l.s4 1983009808
    %v4043 = vunpack.c.0.s8 %v4042
    %v4044 = vlaneseq
    %v4045 = vshrl.u32 %v4044, 7
    %v4046 = vsub.s32 %v4043, %v4045
    %v4047 = vrot.slane %v4040, %v4046
    %v4048 = vcombine.low %v3974, %v3975
    %v4050 = vunpack.c.l.s4 1983009808
    %v4051 = vunpack.c.0.s8 %v4050
    %v4052 = vlaneseq
    %v4053 = vshrl.u32 %v4052, 7
    %v4054 = vsub.s32 %v4051, %v4053
    %v4055 = vrot.slane %v4048, %v4054
    %4064 = vst [vmem:[#allocation12] sm:$0xf] %v3999
    %4065 = vst [vmem:[#allocation12 + $0x8] sm:$0xf] %v4007
    %4066 = vst [vmem:[#allocation12 + $0x10] sm:$0xf] %v4015
    %4067 = vst [vmem:[#allocation12 + $0x18] sm:$0xf] %v4023
    %4068 = vst [vmem:[#allocation12 + $0x20] sm:$0xf] %v4031
    %4069 = vst [vmem:[#allocation12 + $0x28] sm:$0xf] %v4039
    %4070 = vst [vmem:[#allocation12 + $0x30] sm:$0xf] %v4047
    %4071 = vst [vmem:[#allocation12 + $0x38] sm:$0xf] %v4055
    %v4080 = vcombine.low %v3902, %v3904
    %v4081 = vcombine.high %v3902, %v3904
    %v4082 = vcombine.low %v3906, %v3908
    %v4083 = vcombine.high %v3906, %v3908
    %v4084 = vcombine.low %v3912, %v3914
    %v4085 = vcombine.high %v3912, %v3914
    %v4086 = vcombine.low %v3916, %v3918
    %v4087 = vcombine.high %v3916, %v3918
    %v4096 = vcombine.high %v4080, %v4080
    %v4097 = vcombine.high %v4081, %v4081
    %v4098 = vcombine.high %v4082, %v4082
    %v4099 = vcombine.high %v4083, %v4083
    %v4100 = vcombine.high %v4084, %v4084
    %v4101 = vcombine.high %v4085, %v4085
    %v4102 = vcombine.high %v4086, %v4086
    %v4103 = vcombine.high %v4087, %v4087
    %v4112 = vpack.c.bf16 %v4080, %v4080
    %v4113 = vpack.c.bf16 %v4096, %v4096
    %v4114 = vpack.c.bf16 %v4081, %v4081
    %v4115 = vpack.c.bf16 %v4097, %v4097
    %v4116 = vpack.c.bf16 %v4082, %v4082
    %v4117 = vpack.c.bf16 %v4098, %v4098
    %v4118 = vpack.c.bf16 %v4083, %v4083
    %v4119 = vpack.c.bf16 %v4099, %v4099
    %v4120 = vpack.c.bf16 %v4084, %v4084
    %v4121 = vpack.c.bf16 %v4100, %v4100
    %v4122 = vpack.c.bf16 %v4085, %v4085
    %v4123 = vpack.c.bf16 %v4101, %v4101
    %v4124 = vpack.c.bf16 %v4086, %v4086
    %v4125 = vpack.c.bf16 %v4102, %v4102
    %v4126 = vpack.c.bf16 %v4087, %v4087
    %v4127 = vpack.c.bf16 %v4103, %v4103
    %v4144 = vcombine.low %v4112, %v4113
    %v4146 = vunpack.c.l.s4 1983009808
    %v4147 = vunpack.c.0.s8 %v4146
    %v4148 = vlaneseq
    %v4149 = vshrl.u32 %v4148, 7
    %v4150 = vsub.s32 %v4147, %v4149
    %v4151 = vrot.slane %v4144, %v4150
    %v4152 = vcombine.low %v4114, %v4115
    %v4154 = vunpack.c.l.s4 1983009808
    %v4155 = vunpack.c.0.s8 %v4154
    %v4156 = vlaneseq
    %v4157 = vshrl.u32 %v4156, 7
    %v4158 = vsub.s32 %v4155, %v4157
    %v4159 = vrot.slane %v4152, %v4158
    %v4160 = vcombine.low %v4116, %v4117
    %v4162 = vunpack.c.l.s4 1983009808
    %v4163 = vunpack.c.0.s8 %v4162
    %v4164 = vlaneseq
    %v4165 = vshrl.u32 %v4164, 7
    %v4166 = vsub.s32 %v4163, %v4165
    %v4167 = vrot.slane %v4160, %v4166
    %v4168 = vcombine.low %v4118, %v4119
    %v4170 = vunpack.c.l.s4 1983009808
    %v4171 = vunpack.c.0.s8 %v4170
    %v4172 = vlaneseq
    %v4173 = vshrl.u32 %v4172, 7
    %v4174 = vsub.s32 %v4171, %v4173
    %v4175 = vrot.slane %v4168, %v4174
    %v4176 = vcombine.low %v4120, %v4121
    %v4178 = vunpack.c.l.s4 1983009808
    %v4179 = vunpack.c.0.s8 %v4178
    %v4180 = vlaneseq
    %v4181 = vshrl.u32 %v4180, 7
    %v4182 = vsub.s32 %v4179, %v4181
    %v4183 = vrot.slane %v4176, %v4182
    %v4184 = vcombine.low %v4122, %v4123
    %v4186 = vunpack.c.l.s4 1983009808
    %v4187 = vunpack.c.0.s8 %v4186
    %v4188 = vlaneseq
    %v4189 = vshrl.u32 %v4188, 7
    %v4190 = vsub.s32 %v4187, %v4189
    %v4191 = vrot.slane %v4184, %v4190
    %v4192 = vcombine.low %v4124, %v4125
    %v4194 = vunpack.c.l.s4 1983009808
    %v4195 = vunpack.c.0.s8 %v4194
    %v4196 = vlaneseq
    %v4197 = vshrl.u32 %v4196, 7
    %v4198 = vsub.s32 %v4195, %v4197
    %v4199 = vrot.slane %v4192, %v4198
    %v4200 = vcombine.low %v4126, %v4127
    %v4202 = vunpack.c.l.s4 1983009808
    %v4203 = vunpack.c.0.s8 %v4202
    %v4204 = vlaneseq
    %v4205 = vshrl.u32 %v4204, 7
    %v4206 = vsub.s32 %v4203, %v4205
    %v4207 = vrot.slane %v4200, %v4206
    %s4216 = scalar_lea.vmem [#allocation12], 4
    %4217 = vst [vmem:[%s4216] sm:$0xf] %v4151
    %4218 = vst [vmem:[%s4216 + $0x8] sm:$0xf] %v4159
    %4219 = vst [vmem:[%s4216 + $0x10] sm:$0xf] %v4167
    %4220 = vst [vmem:[%s4216 + $0x18] sm:$0xf] %v4175
    %4221 = vst [vmem:[%s4216 + $0x20] sm:$0xf] %v4183
    %4222 = vst [vmem:[%s4216 + $0x28] sm:$0xf] %v4191
    %4223 = vst [vmem:[%s4216 + $0x30] sm:$0xf] %v4199
    %4224 = vst [vmem:[%s4216 + $0x38] sm:$0xf] %v4207
    // Predicated region
    $region54: #{tpu_custom_call.1} parent=1 // pred_check
      _
    $region55: #{tpu_custom_call.1} parent=1 // pred_check_branch
      %4226 = sbr.rel (0) target = $region57
    $region56: #{tpu_custom_call.1} parent=1 // pred_region
      %s4228 = ssub.s32 1024, 1024
      %4229 = vsyncadd [#allocation6], %s4228
      %s4230 = sshll.u32 [#allocation12], 4
      %s4231 = int_to_ptr.vmem [resolvable:$true] %s4230
      %4236 = dma.vmem_to_hbm [thread:$0]  %s4231, 1024, %s9, [#allocation6], 64, 64, 4
    $region57: #{tpu_custom_call.1} parent=1 // pred_fallthru
      _
    // Predicated region
    $region58: #{tpu_custom_call.1} parent=1 // pred_check
      _
    $region59: #{tpu_custom_call.1} parent=1 // pred_check_branch
      %4238 = sbr.rel (0) target = $region61
    $region60: #{tpu_custom_call.1} parent=1 // pred_region
      %4239 = dma.done [#allocation6], 1024
    $region61: #{tpu_custom_call.1} parent=1 // pred_fallthru
      _
    %4240 = vsyncpa [#allocation5], 1
    %4241 = vsyncpa [#allocation8], 1
    %4242 = vsyncpa [#allocation11], 1
    %4243 = vsyncpa [#allocation6], 1

</llo_original>
